<compile_context>
chip_gen: v7x
topology: tpu7x:2x2x1
jax: 0.10.0
libtpu: 0.0.40
codegen_flags: <defaults>
</compile_context>

<pallas_src>
import jax
import jax.numpy as jnp
from jax import lax
from jax.experimental import pallas as pl
from jax.experimental.pallas import tpu as pltpu

# ----------------------------- config (small) -------------------------------
B        = 2     # batch
N_MELS   = 16    # mel bins (80 in real Whisper)
T_IN     = 32    # mel frames
D_MODEL  = 32
N_HEADS  = 4
HEAD_DIM = D_MODEL // N_HEADS
FFN      = 64
N_LAYERS = 2
VOCAB    = 64
T_OUT    = T_IN // 2          # after stride-2 conv
LN_EPS   = 1e-5
ATTN_SCALE = 1.0 / (HEAD_DIM ** 0.5)


def _gelu(x):
    # TODO(synk): HF Whisper uses exact erf GELU; tanh approximation kept for
    #             robust TPU lowering (small, systematic numerical difference).
    return 0.5 * x * (1.0 + jnp.tanh(0.7978845608028654 * (x + 0.044715 * x * x * x)))


def _layernorm(x, g, b):
    mu = jnp.mean(x, axis=-1, keepdims=True)
    xc = x - mu
    var = jnp.mean(xc * xc, axis=-1, keepdims=True)
    return xc * lax.rsqrt(var + LN_EPS) * g + b


# ------------------------------ fused Pallas kernel -------------------------
def _whisper_encoder_kernel(
    # per-batch de-interleaved mel slices (see wrapper)
    me0_ref, me1_ref, mo0_ref, mo1_ref,
    # conv stem + pos-emb
    c1w_ref, c1b_ref, c2w_ref, c2b_ref, pos_ref,
    # per-layer stacked weights
    ln1g_ref, ln1b_ref, qkvw_ref, qkvb_ref, ow_ref, ob_ref,
    ln2g_ref, ln2b_ref, f1w_ref, f1b_ref, f2w_ref, f2b_ref,
    # final LN + token head
    lnpg_ref, lnpb_ref, tokw_ref, tokb_ref,
    # output: greedy token ids
    tok_ref,
):
    f32, bf16 = jnp.float32, jnp.bfloat16

    def dot(a, w):                      # bf16 operands -> f32 accumulation (MXU)
        return jnp.dot(a, w, preferred_element_type=f32)

    # ---- Conv1d stem, K=3 unrolled as shifted matmuls, stride-2 handled by
    #      de-interleaved inputs (no strided / unaligned in-kernel access). ----
    me0 = me0_ref[0].astype(bf16)   # rows mel_pad[2t]
    me1 = me1_ref[0].astype(bf16)   # rows mel_pad[2t+2]
    mo0 = mo0_ref[0].astype(bf16)   # rows mel_pad[2t+1]
    mo1 = mo1_ref[0].astype(bf16)   # rows mel_pad[2t+3]

    w10, w11, w12 = c1w_ref[0], c1w_ref[1], c1w_ref[2]   # (C, D) bf16
    b1 = c1b_ref[...]                                     # (1, D) f32

    h_even = dot(me0, w10) + dot(mo0, w11) + dot(me1, w12) + b1   # conv1 rows 2t
    h_odd  = dot(mo0, w10) + dot(me1, w11) + dot(mo1, w12) + b1   # conv1 rows 2t+1
    ge = _gelu(h_even)
    go = _gelu(h_odd)

    # conv2 (stride 2, pad 1):  x[t] = h'_pad[2t] W2_0 + h'_pad[2t+1] W2_1 + h'_pad[2t+2] W2_2
    #   h'_pad[2t]   = go[t-1] (zero for t=0)  -> pltpu.roll on sublanes + row-0 mask
    #   h'_pad[2t+1] = ge[t],  h'_pad[2t+2] = go[t]
    row_idx = lax.broadcasted_iota(jnp.int32, (T_OUT, D_MODEL), 0)
    go_shift = jnp.where(row_idx == 0, 0.0, pltpu.roll(go, 1, 0))

    w20, w21, w22 = c2w_ref[0], c2w_ref[1], c2w_ref[2]
    b2 = c2b_ref[...]
    x = (dot(go_shift.astype(bf16), w20) + dot(ge.astype(bf16), w21)
         + dot(go.astype(bf16), w22) + b2)
    x = _gelu(x)                                                  # (T_OUT, D)

    # positional embedding
    x = x + pos_ref[...]

    # ---- Transformer encoder layers (fully fused) ----
    for l in range(N_LAYERS):
        # self-attention block (attention scale pre-folded into Q weights)
        h = _layernorm(x, ln1g_ref[l], ln1b_ref[l])
        qkv = dot(h.astype(bf16), qkvw_ref[l]) + qkvb_ref[l]      # (T, 3D) f32
        q = qkv[:, 0:D_MODEL]
        k = qkv[:, D_MODEL:2 * D_MODEL]
        v = qkv[:, 2 * D_MODEL:3 * D_MODEL]

        # per-head attention; o-projection folded per head (no heads concat)
        attn_acc = jnp.zeros((T_OUT, D_MODEL), f32)
        for hd in range(N_HEADS):                                  # static unroll
            lo, hi = hd * HEAD_DIM, (hd + 1) * HEAD_DIM
            qh = q[:, lo:hi].astype(bf16)
            kh = k[:, lo:hi].astype(bf16)
            vh = v[:, lo:hi].astype(bf16)
            # q @ k^T via dot_general (contract last dims) — no explicit transpose
            s = lax.dot_general(qh, kh, (((1,), (1,)), ((), ())),
                                preferred_element_type=f32)        # (T, T) f32
            s = s - jnp.max(s, axis=-1, keepdims=True)
            p = jnp.exp(s)
            p = p * pl.reciprocal(jnp.sum(p, axis=-1, keepdims=True), approx=True)
            ctx = jnp.dot(p.astype(bf16), vh, preferred_element_type=f32)  # (T, hd)
            attn_acc = attn_acc + dot(ctx.astype(bf16), ow_ref[l, hd])     # (T, D)

        x = x + attn_acc + ob_ref[l]                               # o-proj + residual

        # MLP block
        h = _layernorm(x, ln2g_ref[l], ln2b_ref[l])
        h = _gelu(dot(h.astype(bf16), f1w_ref[l]) + f1b_ref[l])
        x = x + dot(h.astype(bf16), f2w_ref[l]) + f2b_ref[l]

    # final LN + greedy token head
    x = _layernorm(x, lnpg_ref[...], lnpb_ref[...])
    logits = dot(x.astype(bf16), tokw_ref[...]) + tokb_ref[...]    # (T, V)

    # first-occurrence argmax via max / iota / where / min (no lax.argmax)
    m = jnp.max(logits, axis=-1, keepdims=True)
    col = lax.broadcasted_iota(jnp.int32, (T_OUT, VOCAB), 1)
    cand = jnp.where(logits == m, col, VOCAB)
    tok_ref[0] = jnp.min(cand, axis=-1, keepdims=True)             # (T, 1) int32


# ------------------------------ wrapper --------------------------------------
def whisper_forward(packed, mel):
    """mel: (B, n_mels, T) -> (token_ids (B, T_OUT), chunk_frame_bounds (B, T_OUT, 2))."""
    Bx = mel.shape[0]

    # one-time input layout plumbing: time-major, pad=1, even/odd de-interleave
    mel_t = jnp.transpose(mel, (0, 2, 1))                    # (B, T, C)
    mel_pad = jnp.pad(mel_t, ((0, 0), (1, 1), (0, 0)))       # (B, T+2, C)
    mel_even = mel_pad[:, 0::2, :]                           # rows 2t   (B, T/2+1, C)
    mel_odd = mel_pad[:, 1::2, :]                            # rows 2t+1 (B, T/2+1, C)
    me0 = mel_even[:, 0:T_OUT, :]
    me1 = mel_even[:, 1:T_OUT + 1, :]
    mo0 = mel_odd[:, 0:T_OUT, :]
    mo1 = mel_odd[:, 1:T_OUT + 1, :]

    def batch_spec(arr):
        return pl.BlockSpec((1,) + arr.shape[1:], lambda b: (b, 0, 0))

    def const_spec(arr):
        nd = arr.ndim
        return pl.BlockSpec(arr.shape, lambda b, nd=nd: (0,) * nd)

    inputs = [
        me0, me1, mo0, mo1,
        packed["c1w"], packed["c1b"], packed["c2w"], packed["c2b"], packed["pos"],
        packed["ln1g"], packed["ln1b"], packed["qkvw"], packed["qkvb"],
        packed["ow"], packed["ob"],
        packed["ln2g"], packed["ln2b"], packed["f1w"], packed["f1b"],
        packed["f2w"], packed["f2b"],
        packed["lnpg"], packed["lnpb"], packed["tokw"], packed["tokb"],
    ]
    in_specs = [batch_spec(a) for a in inputs[:4]] + [const_spec(a) for a in inputs[4:]]

    tok = pl.pallas_call(
        _whisper_encoder_kernel,
        out_shape=jax.ShapeDtypeStruct((Bx, T_OUT, 1), jnp.int32),
        grid=(Bx,),
        in_specs=in_specs,
        out_specs=pl.BlockSpec((1, T_OUT, 1), lambda b: (b, 0, 0)),
        compiler_params=pltpu.CompilerParams(dimension_semantics=("parallel",)),
    )(*inputs)
    token_ids = tok[:, :, 0]                                  # (B, T_OUT)

    # per-frame "chunks": (start_frame, end_frame) in conv-downsampled frames
    frames = jnp.arange(T_OUT, dtype=jnp.int32)
    chunks = jnp.broadcast_to(jnp.stack([frames, frames + 1], axis=-1)[None],
                              (Bx, T_OUT, 2))
    return token_ids, chunks


# ------------------------------ parameters ----------------------------------
def init_params(key):
    def nrm(k, shape, scale=0.02):
        return scale * jax.random.normal(k, shape, dtype=jnp.float32)

    keys = iter(jax.random.split(key, 8 + 16 * N_LAYERS))
    p = {
        "conv1_w": nrm(next(keys), (D_MODEL, N_MELS, 3)),
        "conv1_b": nrm(next(keys), (D_MODEL,)),
        "conv2_w": nrm(next(keys), (D_MODEL, D_MODEL, 3)),
        "conv2_b": nrm(next(keys), (D_MODEL,)),
        "pos_emb": nrm(next(keys), (T_OUT, D_MODEL)),
        "ln_post_g": jnp.ones((D_MODEL,), jnp.float32),
        "ln_post_b": jnp.zeros((D_MODEL,), jnp.float32),
        "tok_w": nrm(next(keys), (D_MODEL, VOCAB)),
        "tok_b": nrm(next(keys), (VOCAB,)),
        "layers": [],
    }
    for _ in range(N_LAYERS):
        p["layers"].append({
            "ln1_g": jnp.ones((D_MODEL,), jnp.float32),
            "ln1_b": jnp.zeros((D_MODEL,), jnp.float32),
            "q_w": nrm(next(keys), (D_MODEL, D_MODEL)),
            "q_b": nrm(next(keys), (D_MODEL,)),
            "k_w": nrm(next(keys), (D_MODEL, D_MODEL)),
            "k_b": jnp.zeros((D_MODEL,), jnp.float32),   # Whisper k_proj has no bias
            "v_w": nrm(next(keys), (D_MODEL, D_MODEL)),
            "v_b": nrm(next(keys), (D_MODEL,)),
            "o_w": nrm(next(keys), (D_MODEL, D_MODEL)),
            "o_b": nrm(next(keys), (D_MODEL,)),
            "ln2_g": jnp.ones((D_MODEL,), jnp.float32),
            "ln2_b": jnp.zeros((D_MODEL,), jnp.float32),
            "fc1_w": nrm(next(keys), (D_MODEL, FFN)),
            "fc1_b": nrm(next(keys), (FFN,)),
            "fc2_w": nrm(next(keys), (FFN, D_MODEL)),
            "fc2_b": nrm(next(keys), (D_MODEL,)),
        })
    return p


def pack_params(p):
    """Pack raw params into the fused-kernel layout (one-time, outside the forward):
    conv weights as (K, C_in, C_out); Q/K/V concatenated with the attention scale
    folded into Q; W_o split per head as (H, head_dim, D); per-layer weights stacked
    on a leading layer axis; matmul weights in bf16 (MXU), biases / LN / pos in f32."""
    bf = jnp.bfloat16
    L = p["layers"]

    def conv_stack(w):   # (C_out, C_in, K) -> (K, C_in, C_out)
        return jnp.transpose(w, (2, 1, 0))

    return {
        "c1w": conv_stack(p["conv1_w"]).astype(bf),
        "c1b": p["conv1_b"].reshape(1, D_MODEL),
        "c2w": conv_stack(p["conv2_w"]).astype(bf),
        "c2b": p["conv2_b"].reshape(1, D_MODEL),
        "pos": p["pos_emb"],
        "ln1g": jnp.stack([l["ln1_g"] for l in L]).reshape(N_LAYERS, 1, D_MODEL),
        "ln1b": jnp.stack([l["ln1_b"] for l in L]).reshape(N_LAYERS, 1, D_MODEL),
        # attention scale folded into q_w / q_b (free: done once at pack time)
        "qkvw": jnp.stack([jnp.concatenate([l["q_w"] * ATTN_SCALE, l["k_w"], l["v_w"]],
                                           axis=1) for l in L]).astype(bf),
        "qkvb": jnp.stack([jnp.concatenate([l["q_b"] * ATTN_SCALE, l["k_b"], l["v_b"]])
                           for l in L]).reshape(N_LAYERS, 1, 3 * D_MODEL),
        # o-projection split per head: rows (input features) are head-major
        "ow": jnp.stack([l["o_w"].reshape(N_HEADS, HEAD_DIM, D_MODEL)
                         for l in L]).astype(bf),                 # (L, H, hd, D)
        "ob": jnp.stack([l["o_b"] for l in L]).reshape(N_LAYERS, 1, D_MODEL),
        "ln2g": jnp.stack([l["ln2_g"] for l in L]).reshape(N_LAYERS, 1, D_MODEL),
        "ln2b": jnp.stack([l["ln2_b"] for l in L]).reshape(N_LAYERS, 1, D_MODEL),
        "f1w": jnp.stack([l["fc1_w"] for l in L]).astype(bf),
        "f1b": jnp.stack([l["fc1_b"] for l in L]).reshape(N_LAYERS, 1, FFN),
        "f2w": jnp.stack([l["fc2_w"] for l in L]).astype(bf),
        "f2b": jnp.stack([l["fc2_b"] for l in L]).reshape(N_LAYERS, 1, D_MODEL),
        "lnpg": p["ln_post_g"].reshape(1, D_MODEL),
        "lnpb": p["ln_post_b"].reshape(1, D_MODEL),
        "tokw": p["tok_w"].astype(bf),
        "tokb": p["tok_b"].reshape(1, VOCAB),
    }


# ------------------------------ main -----------------------------------------
if __name__ == "__main__":
    # TODO(synk): the original forward takes an audio *file path* and runs ffmpeg
    #             decoding + log-mel feature extraction + HF tokenizer text decoding
    #             + autoregressive decoding / beam search — none of that is tensor
    #             compute; we start from synthetic log-mel features and emit greedy
    #             per-frame token ids instead.
    key = jax.random.PRNGKey(0)
    k_param, k_mel = jax.random.split(key)
    packed = pack_params(init_params(k_param))
    mel = jax.random.normal(k_mel, (B, N_MELS, T_IN), dtype=jnp.float32)

    fwd = jax.jit(whisper_forward)
    token_ids, chunks = fwd(packed, mel)
    jax.block_until_ready((token_ids, chunks))

    assert token_ids.shape == (B, T_OUT)
    assert chunks.shape == (B, T_OUT, 2)
    print("KERNEL_OK")
</pallas_src>

<mosaic_0001>
module attributes {stable_mosaic.version = 11 : i64} {
  func.func @_whisper_encoder_kernel(%arg0: i32, %arg1: memref<1x16x16xf32, #tpu.memory_space<vmem>>, %arg2: memref<1x16x16xf32, #tpu.memory_space<vmem>>, %arg3: memref<1x16x16xf32, #tpu.memory_space<vmem>>, %arg4: memref<1x16x16xf32, #tpu.memory_space<vmem>>, %arg5: memref<3x16x32xbf16, #tpu.memory_space<vmem>>, %arg6: memref<1x32xf32, #tpu.memory_space<vmem>>, %arg7: memref<3x32x32xbf16, #tpu.memory_space<vmem>>, %arg8: memref<1x32xf32, #tpu.memory_space<vmem>>, %arg9: memref<16x32xf32, #tpu.memory_space<vmem>>, %arg10: memref<2x1x32xf32, #tpu.memory_space<vmem>>, %arg11: memref<2x1x32xf32, #tpu.memory_space<vmem>>, %arg12: memref<2x32x96xbf16, #tpu.memory_space<vmem>>, %arg13: memref<2x1x96xf32, #tpu.memory_space<vmem>>, %arg14: memref<2x4x8x32xbf16, #tpu.memory_space<vmem>>, %arg15: memref<2x1x32xf32, #tpu.memory_space<vmem>>, %arg16: memref<2x1x32xf32, #tpu.memory_space<vmem>>, %arg17: memref<2x1x32xf32, #tpu.memory_space<vmem>>, %arg18: memref<2x32x64xbf16, #tpu.memory_space<vmem>>, %arg19: memref<2x1x64xf32, #tpu.memory_space<vmem>>, %arg20: memref<2x64x32xbf16, #tpu.memory_space<vmem>>, %arg21: memref<2x1x32xf32, #tpu.memory_space<vmem>>, %arg22: memref<1x32xf32, #tpu.memory_space<vmem>>, %arg23: memref<1x32xf32, #tpu.memory_space<vmem>>, %arg24: memref<32x64xbf16, #tpu.memory_space<vmem>>, %arg25: memref<1x64xf32, #tpu.memory_space<vmem>>, %arg26: memref<1x16x1xi32, #tpu.memory_space<vmem>>) attributes {dimension_semantics = [#tpu.dimension_semantics<parallel>], iteration_bounds = array<i64: 2>, scalar_prefetch = 0 : i64, scratch_operands = 0 : i64, tpu.core_type = #tpu.core_type<tc>, window_params = [{transform_indices = @transform_0, window_bounds = array<i64: 1, 16, 16>}, {transform_indices = @transform_1, window_bounds = array<i64: 1, 16, 16>}, {transform_indices = @transform_2, window_bounds = array<i64: 1, 16, 16>}, {transform_indices = @transform_3, window_bounds = array<i64: 1, 16, 16>}, {pipeline_mode = #tpu.pipeline_mode<synchronous>, transform_indices = @transform_4, window_bounds = array<i64: 3, 16, 32>}, {pipeline_mode = #tpu.pipeline_mode<synchronous>, transform_indices = @transform_5, window_bounds = array<i64: 1, 32>}, {pipeline_mode = #tpu.pipeline_mode<synchronous>, transform_indices = @transform_6, window_bounds = array<i64: 3, 32, 32>}, {pipeline_mode = #tpu.pipeline_mode<synchronous>, transform_indices = @transform_7, window_bounds = array<i64: 1, 32>}, {pipeline_mode = #tpu.pipeline_mode<synchronous>, transform_indices = @transform_8, window_bounds = array<i64: 16, 32>}, {pipeline_mode = #tpu.pipeline_mode<synchronous>, transform_indices = @transform_9, window_bounds = array<i64: 2, 1, 32>}, {pipeline_mode = #tpu.pipeline_mode<synchronous>, transform_indices = @transform_10, window_bounds = array<i64: 2, 1, 32>}, {pipeline_mode = #tpu.pipeline_mode<synchronous>, transform_indices = @transform_11, window_bounds = array<i64: 2, 32, 96>}, {pipeline_mode = #tpu.pipeline_mode<synchronous>, transform_indices = @transform_12, window_bounds = array<i64: 2, 1, 96>}, {pipeline_mode = #tpu.pipeline_mode<synchronous>, transform_indices = @transform_13, window_bounds = array<i64: 2, 4, 8, 32>}, {pipeline_mode = #tpu.pipeline_mode<synchronous>, transform_indices = @transform_14, window_bounds = array<i64: 2, 1, 32>}, {pipeline_mode = #tpu.pipeline_mode<synchronous>, transform_indices = @transform_15, window_bounds = array<i64: 2, 1, 32>}, {pipeline_mode = #tpu.pipeline_mode<synchronous>, transform_indices = @transform_16, window_bounds = array<i64: 2, 1, 32>}, {pipeline_mode = #tpu.pipeline_mode<synchronous>, transform_indices = @transform_17, window_bounds = array<i64: 2, 32, 64>}, {pipeline_mode = #tpu.pipeline_mode<synchronous>, transform_indices = @transform_18, window_bounds = array<i64: 2, 1, 64>}, {pipeline_mode = #tpu.pipeline_mode<synchronous>, transform_indices = @transform_19, window_bounds = array<i64: 2, 64, 32>}, {pipeline_mode = #tpu.pipeline_mode<synchronous>, transform_indices = @transform_20, window_bounds = array<i64: 2, 1, 32>}, {pipeline_mode = #tpu.pipeline_mode<synchronous>, transform_indices = @transform_21, window_bounds = array<i64: 1, 32>}, {pipeline_mode = #tpu.pipeline_mode<synchronous>, transform_indices = @transform_22, window_bounds = array<i64: 1, 32>}, {pipeline_mode = #tpu.pipeline_mode<synchronous>, transform_indices = @transform_23, window_bounds = array<i64: 32, 64>}, {pipeline_mode = #tpu.pipeline_mode<synchronous>, transform_indices = @transform_24, window_bounds = array<i64: 1, 64>}, {transform_indices = @transform_25, window_bounds = array<i64: 1, 16, 1>}]} {
    %c0 = arith.constant 0 : index
    %c0_0 = arith.constant 0 : index
    %c0_1 = arith.constant 0 : index
    %0 = vector.load %arg1[%c0, %c0_0, %c0_1] : memref<1x16x16xf32, #tpu.memory_space<vmem>>, vector<1x16x16xf32>
    %1 = vector.shape_cast %0 : vector<1x16x16xf32> to vector<16x16xf32>
    %2 = arith.truncf %1 : vector<16x16xf32> to vector<16x16xbf16>
    %c0_2 = arith.constant 0 : index
    %c0_3 = arith.constant 0 : index
    %c0_4 = arith.constant 0 : index
    %3 = vector.load %arg2[%c0_2, %c0_3, %c0_4] : memref<1x16x16xf32, #tpu.memory_space<vmem>>, vector<1x16x16xf32>
    %4 = vector.shape_cast %3 : vector<1x16x16xf32> to vector<16x16xf32>
    %5 = arith.truncf %4 : vector<16x16xf32> to vector<16x16xbf16>
    %c0_5 = arith.constant 0 : index
    %c0_6 = arith.constant 0 : index
    %c0_7 = arith.constant 0 : index
    %6 = vector.load %arg3[%c0_5, %c0_6, %c0_7] : memref<1x16x16xf32, #tpu.memory_space<vmem>>, vector<1x16x16xf32>
    %7 = vector.shape_cast %6 : vector<1x16x16xf32> to vector<16x16xf32>
    %8 = arith.truncf %7 : vector<16x16xf32> to vector<16x16xbf16>
    %c0_8 = arith.constant 0 : index
    %c0_9 = arith.constant 0 : index
    %c0_10 = arith.constant 0 : index
    %9 = vector.load %arg4[%c0_8, %c0_9, %c0_10] : memref<1x16x16xf32, #tpu.memory_space<vmem>>, vector<1x16x16xf32>
    %10 = vector.shape_cast %9 : vector<1x16x16xf32> to vector<16x16xf32>
    %11 = arith.truncf %10 : vector<16x16xf32> to vector<16x16xbf16>
    %c0_11 = arith.constant 0 : index
    %c0_12 = arith.constant 0 : index
    %c0_13 = arith.constant 0 : index
    %12 = vector.load %arg5[%c0_11, %c0_12, %c0_13] : memref<3x16x32xbf16, #tpu.memory_space<vmem>>, vector<1x16x32xbf16>
    %13 = vector.shape_cast %12 : vector<1x16x32xbf16> to vector<16x32xbf16>
    %c1 = arith.constant 1 : index
    %c0_14 = arith.constant 0 : index
    %c0_15 = arith.constant 0 : index
    %14 = vector.load %arg5[%c1, %c0_14, %c0_15] : memref<3x16x32xbf16, #tpu.memory_space<vmem>>, vector<1x16x32xbf16>
    %15 = vector.shape_cast %14 : vector<1x16x32xbf16> to vector<16x32xbf16>
    %c2 = arith.constant 2 : index
    %c0_16 = arith.constant 0 : index
    %c0_17 = arith.constant 0 : index
    %16 = vector.load %arg5[%c2, %c0_16, %c0_17] : memref<3x16x32xbf16, #tpu.memory_space<vmem>>, vector<1x16x32xbf16>
    %17 = vector.shape_cast %16 : vector<1x16x32xbf16> to vector<16x32xbf16>
    %c0_18 = arith.constant 0 : index
    %c0_19 = arith.constant 0 : index
    %18 = vector.load %arg6[%c0_18, %c0_19] : memref<1x32xf32, #tpu.memory_space<vmem>>, vector<1x32xf32>
    %cst = arith.constant dense<0.000000e+00> : vector<16x32xf32>
    %19 = tpu.matmul %2, %13, %cst {dimension_numbers = #tpu.dot_dimension_numbers<[1], [0], [0], [1], [0, 0, 1, 1], [], []>} : vector<16x16xbf16>, vector<16x32xbf16>, vector<16x32xf32> -> vector<16x32xf32>
    %cst_20 = arith.constant dense<0.000000e+00> : vector<16x32xf32>
    %20 = tpu.matmul %8, %15, %cst_20 {dimension_numbers = #tpu.dot_dimension_numbers<[1], [0], [0], [1], [0, 0, 1, 1], [], []>} : vector<16x16xbf16>, vector<16x32xbf16>, vector<16x32xf32> -> vector<16x32xf32>
    %21 = arith.addf %19, %20 : vector<16x32xf32>
    %cst_21 = arith.constant dense<0.000000e+00> : vector<16x32xf32>
    %22 = tpu.matmul %5, %17, %cst_21 {dimension_numbers = #tpu.dot_dimension_numbers<[1], [0], [0], [1], [0, 0, 1, 1], [], []>} : vector<16x16xbf16>, vector<16x32xbf16>, vector<16x32xf32> -> vector<16x32xf32>
    %23 = arith.addf %21, %22 : vector<16x32xf32>
    %24 = vector.broadcast %18 : vector<1x32xf32> to vector<16x32xf32>
    %25 = arith.addf %23, %24 : vector<16x32xf32>
    %cst_22 = arith.constant dense<0.000000e+00> : vector<16x32xf32>
    %26 = tpu.matmul %8, %13, %cst_22 {dimension_numbers = #tpu.dot_dimension_numbers<[1], [0], [0], [1], [0, 0, 1, 1], [], []>} : vector<16x16xbf16>, vector<16x32xbf16>, vector<16x32xf32> -> vector<16x32xf32>
    %cst_23 = arith.constant dense<0.000000e+00> : vector<16x32xf32>
    %27 = tpu.matmul %5, %15, %cst_23 {dimension_numbers = #tpu.dot_dimension_numbers<[1], [0], [0], [1], [0, 0, 1, 1], [], []>} : vector<16x16xbf16>, vector<16x32xbf16>, vector<16x32xf32> -> vector<16x32xf32>
    %28 = arith.addf %26, %27 : vector<16x32xf32>
    %cst_24 = arith.constant dense<0.000000e+00> : vector<16x32xf32>
    %29 = tpu.matmul %11, %17, %cst_24 {dimension_numbers = #tpu.dot_dimension_numbers<[1], [0], [0], [1], [0, 0, 1, 1], [], []>} : vector<16x16xbf16>, vector<16x32xbf16>, vector<16x32xf32> -> vector<16x32xf32>
    %30 = arith.addf %28, %29 : vector<16x32xf32>
    %31 = vector.broadcast %18 : vector<1x32xf32> to vector<16x32xf32>
    %32 = arith.addf %30, %31 : vector<16x32xf32>
    %cst_25 = arith.constant 5.000000e-01 : f32
    %33 = vector.broadcast %cst_25 : f32 to vector<16x32xf32>
    %34 = arith.mulf %33, %25 : vector<16x32xf32>
    %cst_26 = arith.constant 4.471500e-02 : f32
    %35 = vector.broadcast %cst_26 : f32 to vector<16x32xf32>
    %36 = arith.mulf %35, %25 : vector<16x32xf32>
    %37 = arith.mulf %36, %25 : vector<16x32xf32>
    %38 = arith.mulf %37, %25 : vector<16x32xf32>
    %39 = arith.addf %25, %38 : vector<16x32xf32>
    %cst_27 = arith.constant 0.797884583 : f32
    %40 = vector.broadcast %cst_27 : f32 to vector<16x32xf32>
    %41 = arith.mulf %40, %39 : vector<16x32xf32>
    %42 = math.tanh %41 : vector<16x32xf32>
    %cst_28 = arith.constant 1.000000e+00 : f32
    %43 = vector.broadcast %cst_28 : f32 to vector<16x32xf32>
    %44 = arith.addf %43, %42 : vector<16x32xf32>
    %45 = arith.mulf %34, %44 : vector<16x32xf32>
    %cst_29 = arith.constant 5.000000e-01 : f32
    %46 = vector.broadcast %cst_29 : f32 to vector<16x32xf32>
    %47 = arith.mulf %46, %32 : vector<16x32xf32>
    %cst_30 = arith.constant 4.471500e-02 : f32
    %48 = vector.broadcast %cst_30 : f32 to vector<16x32xf32>
    %49 = arith.mulf %48, %32 : vector<16x32xf32>
    %50 = arith.mulf %49, %32 : vector<16x32xf32>
    %51 = arith.mulf %50, %32 : vector<16x32xf32>
    %52 = arith.addf %32, %51 : vector<16x32xf32>
    %cst_31 = arith.constant 0.797884583 : f32
    %53 = vector.broadcast %cst_31 : f32 to vector<16x32xf32>
    %54 = arith.mulf %53, %52 : vector<16x32xf32>
    %55 = math.tanh %54 : vector<16x32xf32>
    %cst_32 = arith.constant 1.000000e+00 : f32
    %56 = vector.broadcast %cst_32 : f32 to vector<16x32xf32>
    %57 = arith.addf %56, %55 : vector<16x32xf32>
    %58 = arith.mulf %47, %57 : vector<16x32xf32>
    %59 = tpu.iota {dimensions = array<i32: 0>} : vector<16x32xi32>
    %c0_i32 = arith.constant 0 : i32
    %60 = vector.broadcast %c0_i32 : i32 to vector<16x32xi32>
    %61 = arith.cmpi eq, %59, %60 : vector<16x32xi32>
    %c1_i32 = arith.constant 1 : i32
    %62 = tpu.dynamic_rotate %58 by %c1_i32 dim 0 : vector<16x32xf32>, i32 -> vector<16x32xf32>
    %cst_33 = arith.constant 0.000000e+00 : f32
    %63 = vector.broadcast %cst_33 : f32 to vector<16x32xf32>
    %64 = arith.select %61, %63, %62 : vector<16x32xi1>, vector<16x32xf32>
    %c0_34 = arith.constant 0 : index
    %c0_35 = arith.constant 0 : index
    %c0_36 = arith.constant 0 : index
    %65 = vector.load %arg7[%c0_34, %c0_35, %c0_36] : memref<3x32x32xbf16, #tpu.memory_space<vmem>>, vector<1x32x32xbf16>
    %66 = vector.shape_cast %65 : vector<1x32x32xbf16> to vector<32x32xbf16>
    %c1_37 = arith.constant 1 : index
    %c0_38 = arith.constant 0 : index
    %c0_39 = arith.constant 0 : index
    %67 = vector.load %arg7[%c1_37, %c0_38, %c0_39] : memref<3x32x32xbf16, #tpu.memory_space<vmem>>, vector<1x32x32xbf16>
    %68 = vector.shape_cast %67 : vector<1x32x32xbf16> to vector<32x32xbf16>
    %c2_40 = arith.constant 2 : index
    %c0_41 = arith.constant 0 : index
    %c0_42 = arith.constant 0 : index
    %69 = vector.load %arg7[%c2_40, %c0_41, %c0_42] : memref<3x32x32xbf16, #tpu.memory_space<vmem>>, vector<1x32x32xbf16>
    %70 = vector.shape_cast %69 : vector<1x32x32xbf16> to vector<32x32xbf16>
    %c0_43 = arith.constant 0 : index
    %c0_44 = arith.constant 0 : index
    %71 = vector.load %arg8[%c0_43, %c0_44] : memref<1x32xf32, #tpu.memory_space<vmem>>, vector<1x32xf32>
    %72 = arith.truncf %64 : vector<16x32xf32> to vector<16x32xbf16>
    %cst_45 = arith.constant dense<0.000000e+00> : vector<16x32xf32>
    %73 = tpu.matmul %72, %66, %cst_45 {dimension_numbers = #tpu.dot_dimension_numbers<[1], [0], [0], [1], [0, 0, 1, 1], [], []>} : vector<16x32xbf16>, vector<32x32xbf16>, vector<16x32xf32> -> vector<16x32xf32>
    %74 = arith.truncf %45 : vector<16x32xf32> to vector<16x32xbf16>
    %cst_46 = arith.constant dense<0.000000e+00> : vector<16x32xf32>
    %75 = tpu.matmul %74, %68, %cst_46 {dimension_numbers = #tpu.dot_dimension_numbers<[1], [0], [0], [1], [0, 0, 1, 1], [], []>} : vector<16x32xbf16>, vector<32x32xbf16>, vector<16x32xf32> -> vector<16x32xf32>
    %76 = arith.addf %73, %75 : vector<16x32xf32>
    %77 = arith.truncf %58 : vector<16x32xf32> to vector<16x32xbf16>
    %cst_47 = arith.constant dense<0.000000e+00> : vector<16x32xf32>
    %78 = tpu.matmul %77, %70, %cst_47 {dimension_numbers = #tpu.dot_dimension_numbers<[1], [0], [0], [1], [0, 0, 1, 1], [], []>} : vector<16x32xbf16>, vector<32x32xbf16>, vector<16x32xf32> -> vector<16x32xf32>
    %79 = arith.addf %76, %78 : vector<16x32xf32>
    %80 = vector.broadcast %71 : vector<1x32xf32> to vector<16x32xf32>
    %81 = arith.addf %79, %80 : vector<16x32xf32>
    %cst_48 = arith.constant 5.000000e-01 : f32
    %82 = vector.broadcast %cst_48 : f32 to vector<16x32xf32>
    %83 = arith.mulf %82, %81 : vector<16x32xf32>
    %cst_49 = arith.constant 4.471500e-02 : f32
    %84 = vector.broadcast %cst_49 : f32 to vector<16x32xf32>
    %85 = arith.mulf %84, %81 : vector<16x32xf32>
    %86 = arith.mulf %85, %81 : vector<16x32xf32>
    %87 = arith.mulf %86, %81 : vector<16x32xf32>
    %88 = arith.addf %81, %87 : vector<16x32xf32>
    %cst_50 = arith.constant 0.797884583 : f32
    %89 = vector.broadcast %cst_50 : f32 to vector<16x32xf32>
    %90 = arith.mulf %89, %88 : vector<16x32xf32>
    %91 = math.tanh %90 : vector<16x32xf32>
    %cst_51 = arith.constant 1.000000e+00 : f32
    %92 = vector.broadcast %cst_51 : f32 to vector<16x32xf32>
    %93 = arith.addf %92, %91 : vector<16x32xf32>
    %94 = arith.mulf %83, %93 : vector<16x32xf32>
    %c0_52 = arith.constant 0 : index
    %c0_53 = arith.constant 0 : index
    %95 = vector.load %arg9[%c0_52, %c0_53] : memref<16x32xf32, #tpu.memory_space<vmem>>, vector<16x32xf32>
    %96 = arith.addf %94, %95 : vector<16x32xf32>
    %c0_54 = arith.constant 0 : index
    %c0_55 = arith.constant 0 : index
    %c0_56 = arith.constant 0 : index
    %97 = vector.load %arg10[%c0_54, %c0_55, %c0_56] : memref<2x1x32xf32, #tpu.memory_space<vmem>>, vector<1x1x32xf32>
    %98 = vector.shape_cast %97 : vector<1x1x32xf32> to vector<1x32xf32>
    %c0_57 = arith.constant 0 : index
    %c0_58 = arith.constant 0 : index
    %c0_59 = arith.constant 0 : index
    %99 = vector.load %arg11[%c0_57, %c0_58, %c0_59] : memref<2x1x32xf32, #tpu.memory_space<vmem>>, vector<1x1x32xf32>
    %100 = vector.shape_cast %99 : vector<1x1x32xf32> to vector<1x32xf32>
    %cst_60 = arith.constant dense<0.000000e+00> : vector<16xf32>
    %101 = vector.multi_reduction <add>, %96, %cst_60 [1] : vector<16x32xf32> to vector<16xf32>
    %102 = vector.shape_cast %101 : vector<16xf32> to vector<16x1xf32>
    %cst_61 = arith.constant 3.200000e+01 : f32
    %103 = vector.broadcast %cst_61 : f32 to vector<16x1xf32>
    %104 = arith.divf %102, %103 : vector<16x1xf32>
    %105 = vector.broadcast %104 : vector<16x1xf32> to vector<16x32xf32>
    %106 = arith.subf %96, %105 : vector<16x32xf32>
    %107 = arith.mulf %106, %106 : vector<16x32xf32>
    %cst_62 = arith.constant dense<0.000000e+00> : vector<16xf32>
    %108 = vector.multi_reduction <add>, %107, %cst_62 [1] : vector<16x32xf32> to vector<16xf32>
    %109 = vector.shape_cast %108 : vector<16xf32> to vector<16x1xf32>
    %cst_63 = arith.constant 3.200000e+01 : f32
    %110 = vector.broadcast %cst_63 : f32 to vector<16x1xf32>
    %111 = arith.divf %109, %110 : vector<16x1xf32>
    %cst_64 = arith.constant 9.99999974E-6 : f32
    %112 = vector.broadcast %cst_64 : f32 to vector<16x1xf32>
    %113 = arith.addf %111, %112 : vector<16x1xf32>
    %114 = math.rsqrt %113 : vector<16x1xf32>
    %115 = vector.broadcast %114 : vector<16x1xf32> to vector<16x32xf32>
    %116 = arith.mulf %106, %115 : vector<16x32xf32>
    %117 = vector.broadcast %98 : vector<1x32xf32> to vector<16x32xf32>
    %118 = arith.mulf %116, %117 : vector<16x32xf32>
    %119 = vector.broadcast %100 : vector<1x32xf32> to vector<16x32xf32>
    %120 = arith.addf %118, %119 : vector<16x32xf32>
    %121 = arith.truncf %120 : vector<16x32xf32> to vector<16x32xbf16>
    %c0_65 = arith.constant 0 : index
    %c0_66 = arith.constant 0 : index
    %c0_67 = arith.constant 0 : index
    %122 = vector.load %arg12[%c0_65, %c0_66, %c0_67] : memref<2x32x96xbf16, #tpu.memory_space<vmem>>, vector<1x32x96xbf16>
    %123 = vector.shape_cast %122 : vector<1x32x96xbf16> to vector<32x96xbf16>
    %cst_68 = arith.constant dense<0.000000e+00> : vector<16x96xf32>
    %124 = tpu.matmul %121, %123, %cst_68 {dimension_numbers = #tpu.dot_dimension_numbers<[1], [0], [0], [1], [0, 0, 1, 1], [], []>} : vector<16x32xbf16>, vector<32x96xbf16>, vector<16x96xf32> -> vector<16x96xf32>
    %c0_69 = arith.constant 0 : index
    %c0_70 = arith.constant 0 : index
    %c0_71 = arith.constant 0 : index
    %125 = vector.load %arg13[%c0_69, %c0_70, %c0_71] : memref<2x1x96xf32, #tpu.memory_space<vmem>>, vector<1x1x96xf32>
    %126 = vector.shape_cast %125 : vector<1x1x96xf32> to vector<1x96xf32>
    %127 = vector.broadcast %126 : vector<1x96xf32> to vector<16x96xf32>
    %128 = arith.addf %124, %127 : vector<16x96xf32>
    %129 = vector.extract_strided_slice %128 {offsets = [0, 0], sizes = [16, 32], strides = [1, 1]} : vector<16x96xf32> to vector<16x32xf32>
    %130 = vector.extract_strided_slice %128 {offsets = [0, 32], sizes = [16, 32], strides = [1, 1]} : vector<16x96xf32> to vector<16x32xf32>
    %131 = vector.extract_strided_slice %128 {offsets = [0, 64], sizes = [16, 32], strides = [1, 1]} : vector<16x96xf32> to vector<16x32xf32>
    %cst_72 = arith.constant 0.000000e+00 : f32
    %132 = vector.broadcast %cst_72 : f32 to vector<16x32xf32>
    %133 = vector.extract_strided_slice %129 {offsets = [0, 0], sizes = [16, 8], strides = [1, 1]} : vector<16x32xf32> to vector<16x8xf32>
    %134 = arith.truncf %133 : vector<16x8xf32> to vector<16x8xbf16>
    %135 = vector.extract_strided_slice %130 {offsets = [0, 0], sizes = [16, 8], strides = [1, 1]} : vector<16x32xf32> to vector<16x8xf32>
    %136 = arith.truncf %135 : vector<16x8xf32> to vector<16x8xbf16>
    %137 = vector.extract_strided_slice %131 {offsets = [0, 0], sizes = [16, 8], strides = [1, 1]} : vector<16x32xf32> to vector<16x8xf32>
    %138 = arith.truncf %137 : vector<16x8xf32> to vector<16x8xbf16>
    %cst_73 = arith.constant dense<0.000000e+00> : vector<16x16xf32>
    %139 = tpu.matmul %134, %136, %cst_73 {dimension_numbers = #tpu.dot_dimension_numbers<[1], [1], [0], [0], [0, 0, 1, 0], [], []>} : vector<16x8xbf16>, vector<16x8xbf16>, vector<16x16xf32> -> vector<16x16xf32>
    %cst_74 = arith.constant dense<0xFF800000> : vector<16xf32>
    %140 = vector.multi_reduction <maximumf>, %139, %cst_74 [1] : vector<16x16xf32> to vector<16xf32>
    %141 = vector.shape_cast %140 : vector<16xf32> to vector<16x1xf32>
    %142 = vector.broadcast %141 : vector<16x1xf32> to vector<16x16xf32>
    %143 = arith.subf %139, %142 : vector<16x16xf32>
    %144 = math.exp %143 : vector<16x16xf32>
    %cst_75 = arith.constant dense<0.000000e+00> : vector<16xf32>
    %145 = vector.multi_reduction <add>, %144, %cst_75 [1] : vector<16x16xf32> to vector<16xf32>
    %146 = vector.shape_cast %145 : vector<16xf32> to vector<16x1xf32>
    %147 = tpu.reciprocal %146 {approx = true} : vector<16x1xf32> -> vector<16x1xf32>
    %148 = vector.broadcast %147 : vector<16x1xf32> to vector<16x16xf32>
    %149 = arith.mulf %144, %148 : vector<16x16xf32>
    %150 = arith.truncf %149 : vector<16x16xf32> to vector<16x16xbf16>
    %cst_76 = arith.constant dense<0.000000e+00> : vector<16x8xf32>
    %151 = tpu.matmul %150, %138, %cst_76 {dimension_numbers = #tpu.dot_dimension_numbers<[1], [0], [0], [1], [0, 0, 1, 1], [], []>} : vector<16x16xbf16>, vector<16x8xbf16>, vector<16x8xf32> -> vector<16x8xf32>
    %152 = arith.truncf %151 : vector<16x8xf32> to vector<16x8xbf16>
    %c0_77 = arith.constant 0 : index
    %c0_78 = arith.constant 0 : index
    %c0_79 = arith.constant 0 : index
    %c0_80 = arith.constant 0 : index
    %153 = vector.load %arg14[%c0_77, %c0_78, %c0_79, %c0_80] : memref<2x4x8x32xbf16, #tpu.memory_space<vmem>>, vector<1x1x8x32xbf16>
    %154 = vector.shape_cast %153 : vector<1x1x8x32xbf16> to vector<8x32xbf16>
    %cst_81 = arith.constant dense<0.000000e+00> : vector<16x32xf32>
    %155 = tpu.matmul %152, %154, %cst_81 {dimension_numbers = #tpu.dot_dimension_numbers<[1], [0], [0], [1], [0, 0, 1, 1], [], []>} : vector<16x8xbf16>, vector<8x32xbf16>, vector<16x32xf32> -> vector<16x32xf32>
    %156 = arith.addf %132, %155 : vector<16x32xf32>
    %157 = vector.extract_strided_slice %129 {offsets = [0, 8], sizes = [16, 8], strides = [1, 1]} : vector<16x32xf32> to vector<16x8xf32>
    %158 = arith.truncf %157 : vector<16x8xf32> to vector<16x8xbf16>
    %159 = vector.extract_strided_slice %130 {offsets = [0, 8], sizes = [16, 8], strides = [1, 1]} : vector<16x32xf32> to vector<16x8xf32>
    %160 = arith.truncf %159 : vector<16x8xf32> to vector<16x8xbf16>
    %161 = vector.extract_strided_slice %131 {offsets = [0, 8], sizes = [16, 8], strides = [1, 1]} : vector<16x32xf32> to vector<16x8xf32>
    %162 = arith.truncf %161 : vector<16x8xf32> to vector<16x8xbf16>
    %cst_82 = arith.constant dense<0.000000e+00> : vector<16x16xf32>
    %163 = tpu.matmul %158, %160, %cst_82 {dimension_numbers = #tpu.dot_dimension_numbers<[1], [1], [0], [0], [0, 0, 1, 0], [], []>} : vector<16x8xbf16>, vector<16x8xbf16>, vector<16x16xf32> -> vector<16x16xf32>
    %cst_83 = arith.constant dense<0xFF800000> : vector<16xf32>
    %164 = vector.multi_reduction <maximumf>, %163, %cst_83 [1] : vector<16x16xf32> to vector<16xf32>
    %165 = vector.shape_cast %164 : vector<16xf32> to vector<16x1xf32>
    %166 = vector.broadcast %165 : vector<16x1xf32> to vector<16x16xf32>
    %167 = arith.subf %163, %166 : vector<16x16xf32>
    %168 = math.exp %167 : vector<16x16xf32>
    %cst_84 = arith.constant dense<0.000000e+00> : vector<16xf32>
    %169 = vector.multi_reduction <add>, %168, %cst_84 [1] : vector<16x16xf32> to vector<16xf32>
    %170 = vector.shape_cast %169 : vector<16xf32> to vector<16x1xf32>
    %171 = tpu.reciprocal %170 {approx = true} : vector<16x1xf32> -> vector<16x1xf32>
    %172 = vector.broadcast %171 : vector<16x1xf32> to vector<16x16xf32>
    %173 = arith.mulf %168, %172 : vector<16x16xf32>
    %174 = arith.truncf %173 : vector<16x16xf32> to vector<16x16xbf16>
    %cst_85 = arith.constant dense<0.000000e+00> : vector<16x8xf32>
    %175 = tpu.matmul %174, %162, %cst_85 {dimension_numbers = #tpu.dot_dimension_numbers<[1], [0], [0], [1], [0, 0, 1, 1], [], []>} : vector<16x16xbf16>, vector<16x8xbf16>, vector<16x8xf32> -> vector<16x8xf32>
    %176 = arith.truncf %175 : vector<16x8xf32> to vector<16x8xbf16>
    %c0_86 = arith.constant 0 : index
    %c1_87 = arith.constant 1 : index
    %c0_88 = arith.constant 0 : index
    %c0_89 = arith.constant 0 : index
    %177 = vector.load %arg14[%c0_86, %c1_87, %c0_88, %c0_89] : memref<2x4x8x32xbf16, #tpu.memory_space<vmem>>, vector<1x1x8x32xbf16>
    %178 = vector.shape_cast %177 : vector<1x1x8x32xbf16> to vector<8x32xbf16>
    %cst_90 = arith.constant dense<0.000000e+00> : vector<16x32xf32>
    %179 = tpu.matmul %176, %178, %cst_90 {dimension_numbers = #tpu.dot_dimension_numbers<[1], [0], [0], [1], [0, 0, 1, 1], [], []>} : vector<16x8xbf16>, vector<8x32xbf16>, vector<16x32xf32> -> vector<16x32xf32>
    %180 = arith.addf %156, %179 : vector<16x32xf32>
    %181 = vector.extract_strided_slice %129 {offsets = [0, 16], sizes = [16, 8], strides = [1, 1]} : vector<16x32xf32> to vector<16x8xf32>
    %182 = arith.truncf %181 : vector<16x8xf32> to vector<16x8xbf16>
    %183 = vector.extract_strided_slice %130 {offsets = [0, 16], sizes = [16, 8], strides = [1, 1]} : vector<16x32xf32> to vector<16x8xf32>
    %184 = arith.truncf %183 : vector<16x8xf32> to vector<16x8xbf16>
    %185 = vector.extract_strided_slice %131 {offsets = [0, 16], sizes = [16, 8], strides = [1, 1]} : vector<16x32xf32> to vector<16x8xf32>
    %186 = arith.truncf %185 : vector<16x8xf32> to vector<16x8xbf16>
    %cst_91 = arith.constant dense<0.000000e+00> : vector<16x16xf32>
    %187 = tpu.matmul %182, %184, %cst_91 {dimension_numbers = #tpu.dot_dimension_numbers<[1], [1], [0], [0], [0, 0, 1, 0], [], []>} : vector<16x8xbf16>, vector<16x8xbf16>, vector<16x16xf32> -> vector<16x16xf32>
    %cst_92 = arith.constant dense<0xFF800000> : vector<16xf32>
    %188 = vector.multi_reduction <maximumf>, %187, %cst_92 [1] : vector<16x16xf32> to vector<16xf32>
    %189 = vector.shape_cast %188 : vector<16xf32> to vector<16x1xf32>
    %190 = vector.broadcast %189 : vector<16x1xf32> to vector<16x16xf32>
    %191 = arith.subf %187, %190 : vector<16x16xf32>
    %192 = math.exp %191 : vector<16x16xf32>
    %cst_93 = arith.constant dense<0.000000e+00> : vector<16xf32>
    %193 = vector.multi_reduction <add>, %192, %cst_93 [1] : vector<16x16xf32> to vector<16xf32>
    %194 = vector.shape_cast %193 : vector<16xf32> to vector<16x1xf32>
    %195 = tpu.reciprocal %194 {approx = true} : vector<16x1xf32> -> vector<16x1xf32>
    %196 = vector.broadcast %195 : vector<16x1xf32> to vector<16x16xf32>
    %197 = arith.mulf %192, %196 : vector<16x16xf32>
    %198 = arith.truncf %197 : vector<16x16xf32> to vector<16x16xbf16>
    %cst_94 = arith.constant dense<0.000000e+00> : vector<16x8xf32>
    %199 = tpu.matmul %198, %186, %cst_94 {dimension_numbers = #tpu.dot_dimension_numbers<[1], [0], [0], [1], [0, 0, 1, 1], [], []>} : vector<16x16xbf16>, vector<16x8xbf16>, vector<16x8xf32> -> vector<16x8xf32>
    %200 = arith.truncf %199 : vector<16x8xf32> to vector<16x8xbf16>
    %c0_95 = arith.constant 0 : index
    %c2_96 = arith.constant 2 : index
    %c0_97 = arith.constant 0 : index
    %c0_98 = arith.constant 0 : index
    %201 = vector.load %arg14[%c0_95, %c2_96, %c0_97, %c0_98] : memref<2x4x8x32xbf16, #tpu.memory_space<vmem>>, vector<1x1x8x32xbf16>
    %202 = vector.shape_cast %201 : vector<1x1x8x32xbf16> to vector<8x32xbf16>
    %cst_99 = arith.constant dense<0.000000e+00> : vector<16x32xf32>
    %203 = tpu.matmul %200, %202, %cst_99 {dimension_numbers = #tpu.dot_dimension_numbers<[1], [0], [0], [1], [0, 0, 1, 1], [], []>} : vector<16x8xbf16>, vector<8x32xbf16>, vector<16x32xf32> -> vector<16x32xf32>
    %204 = arith.addf %180, %203 : vector<16x32xf32>
    %205 = vector.extract_strided_slice %129 {offsets = [0, 24], sizes = [16, 8], strides = [1, 1]} : vector<16x32xf32> to vector<16x8xf32>
    %206 = arith.truncf %205 : vector<16x8xf32> to vector<16x8xbf16>
    %207 = vector.extract_strided_slice %130 {offsets = [0, 24], sizes = [16, 8], strides = [1, 1]} : vector<16x32xf32> to vector<16x8xf32>
    %208 = arith.truncf %207 : vector<16x8xf32> to vector<16x8xbf16>
    %209 = vector.extract_strided_slice %131 {offsets = [0, 24], sizes = [16, 8], strides = [1, 1]} : vector<16x32xf32> to vector<16x8xf32>
    %210 = arith.truncf %209 : vector<16x8xf32> to vector<16x8xbf16>
    %cst_100 = arith.constant dense<0.000000e+00> : vector<16x16xf32>
    %211 = tpu.matmul %206, %208, %cst_100 {dimension_numbers = #tpu.dot_dimension_numbers<[1], [1], [0], [0], [0, 0, 1, 0], [], []>} : vector<16x8xbf16>, vector<16x8xbf16>, vector<16x16xf32> -> vector<16x16xf32>
    %cst_101 = arith.constant dense<0xFF800000> : vector<16xf32>
    %212 = vector.multi_reduction <maximumf>, %211, %cst_101 [1] : vector<16x16xf32> to vector<16xf32>
    %213 = vector.shape_cast %212 : vector<16xf32> to vector<16x1xf32>
    %214 = vector.broadcast %213 : vector<16x1xf32> to vector<16x16xf32>
    %215 = arith.subf %211, %214 : vector<16x16xf32>
    %216 = math.exp %215 : vector<16x16xf32>
    %cst_102 = arith.constant dense<0.000000e+00> : vector<16xf32>
    %217 = vector.multi_reduction <add>, %216, %cst_102 [1] : vector<16x16xf32> to vector<16xf32>
    %218 = vector.shape_cast %217 : vector<16xf32> to vector<16x1xf32>
    %219 = tpu.reciprocal %218 {approx = true} : vector<16x1xf32> -> vector<16x1xf32>
    %220 = vector.broadcast %219 : vector<16x1xf32> to vector<16x16xf32>
    %221 = arith.mulf %216, %220 : vector<16x16xf32>
    %222 = arith.truncf %221 : vector<16x16xf32> to vector<16x16xbf16>
    %cst_103 = arith.constant dense<0.000000e+00> : vector<16x8xf32>
    %223 = tpu.matmul %222, %210, %cst_103 {dimension_numbers = #tpu.dot_dimension_numbers<[1], [0], [0], [1], [0, 0, 1, 1], [], []>} : vector<16x16xbf16>, vector<16x8xbf16>, vector<16x8xf32> -> vector<16x8xf32>
    %224 = arith.truncf %223 : vector<16x8xf32> to vector<16x8xbf16>
    %c0_104 = arith.constant 0 : index
    %c3 = arith.constant 3 : index
    %c0_105 = arith.constant 0 : index
    %c0_106 = arith.constant 0 : index
    %225 = vector.load %arg14[%c0_104, %c3, %c0_105, %c0_106] : memref<2x4x8x32xbf16, #tpu.memory_space<vmem>>, vector<1x1x8x32xbf16>
    %226 = vector.shape_cast %225 : vector<1x1x8x32xbf16> to vector<8x32xbf16>
    %cst_107 = arith.constant dense<0.000000e+00> : vector<16x32xf32>
    %227 = tpu.matmul %224, %226, %cst_107 {dimension_numbers = #tpu.dot_dimension_numbers<[1], [0], [0], [1], [0, 0, 1, 1], [], []>} : vector<16x8xbf16>, vector<8x32xbf16>, vector<16x32xf32> -> vector<16x32xf32>
    %228 = arith.addf %204, %227 : vector<16x32xf32>
    %229 = arith.addf %96, %228 : vector<16x32xf32>
    %c0_108 = arith.constant 0 : index
    %c0_109 = arith.constant 0 : index
    %c0_110 = arith.constant 0 : index
    %230 = vector.load %arg15[%c0_108, %c0_109, %c0_110] : memref<2x1x32xf32, #tpu.memory_space<vmem>>, vector<1x1x32xf32>
    %231 = vector.shape_cast %230 : vector<1x1x32xf32> to vector<1x32xf32>
    %232 = vector.broadcast %231 : vector<1x32xf32> to vector<16x32xf32>
    %233 = arith.addf %229, %232 : vector<16x32xf32>
    %c0_111 = arith.constant 0 : index
    %c0_112 = arith.constant 0 : index
    %c0_113 = arith.constant 0 : index
    %234 = vector.load %arg16[%c0_111, %c0_112, %c0_113] : memref<2x1x32xf32, #tpu.memory_space<vmem>>, vector<1x1x32xf32>
    %235 = vector.shape_cast %234 : vector<1x1x32xf32> to vector<1x32xf32>
    %c0_114 = arith.constant 0 : index
    %c0_115 = arith.constant 0 : index
    %c0_116 = arith.constant 0 : index
    %236 = vector.load %arg17[%c0_114, %c0_115, %c0_116] : memref<2x1x32xf32, #tpu.memory_space<vmem>>, vector<1x1x32xf32>
    %237 = vector.shape_cast %236 : vector<1x1x32xf32> to vector<1x32xf32>
    %cst_117 = arith.constant dense<0.000000e+00> : vector<16xf32>
    %238 = vector.multi_reduction <add>, %233, %cst_117 [1] : vector<16x32xf32> to vector<16xf32>
    %239 = vector.shape_cast %238 : vector<16xf32> to vector<16x1xf32>
    %cst_118 = arith.constant 3.200000e+01 : f32
    %240 = vector.broadcast %cst_118 : f32 to vector<16x1xf32>
    %241 = arith.divf %239, %240 : vector<16x1xf32>
    %242 = vector.broadcast %241 : vector<16x1xf32> to vector<16x32xf32>
    %243 = arith.subf %233, %242 : vector<16x32xf32>
    %244 = arith.mulf %243, %243 : vector<16x32xf32>
    %cst_119 = arith.constant dense<0.000000e+00> : vector<16xf32>
    %245 = vector.multi_reduction <add>, %244, %cst_119 [1] : vector<16x32xf32> to vector<16xf32>
    %246 = vector.shape_cast %245 : vector<16xf32> to vector<16x1xf32>
    %cst_120 = arith.constant 3.200000e+01 : f32
    %247 = vector.broadcast %cst_120 : f32 to vector<16x1xf32>
    %248 = arith.divf %246, %247 : vector<16x1xf32>
    %cst_121 = arith.constant 9.99999974E-6 : f32
    %249 = vector.broadcast %cst_121 : f32 to vector<16x1xf32>
    %250 = arith.addf %248, %249 : vector<16x1xf32>
    %251 = math.rsqrt %250 : vector<16x1xf32>
    %252 = vector.broadcast %251 : vector<16x1xf32> to vector<16x32xf32>
    %253 = arith.mulf %243, %252 : vector<16x32xf32>
    %254 = vector.broadcast %235 : vector<1x32xf32> to vector<16x32xf32>
    %255 = arith.mulf %253, %254 : vector<16x32xf32>
    %256 = vector.broadcast %237 : vector<1x32xf32> to vector<16x32xf32>
    %257 = arith.addf %255, %256 : vector<16x32xf32>
    %258 = arith.truncf %257 : vector<16x32xf32> to vector<16x32xbf16>
    %c0_122 = arith.constant 0 : index
    %c0_123 = arith.constant 0 : index
    %c0_124 = arith.constant 0 : index
    %259 = vector.load %arg18[%c0_122, %c0_123, %c0_124] : memref<2x32x64xbf16, #tpu.memory_space<vmem>>, vector<1x32x64xbf16>
    %260 = vector.shape_cast %259 : vector<1x32x64xbf16> to vector<32x64xbf16>
    %cst_125 = arith.constant dense<0.000000e+00> : vector<16x64xf32>
    %261 = tpu.matmul %258, %260, %cst_125 {dimension_numbers = #tpu.dot_dimension_numbers<[1], [0], [0], [1], [0, 0, 1, 1], [], []>} : vector<16x32xbf16>, vector<32x64xbf16>, vector<16x64xf32> -> vector<16x64xf32>
    %c0_126 = arith.constant 0 : index
    %c0_127 = arith.constant 0 : index
    %c0_128 = arith.constant 0 : index
    %262 = vector.load %arg19[%c0_126, %c0_127, %c0_128] : memref<2x1x64xf32, #tpu.memory_space<vmem>>, vector<1x1x64xf32>
    %263 = vector.shape_cast %262 : vector<1x1x64xf32> to vector<1x64xf32>
    %264 = vector.broadcast %263 : vector<1x64xf32> to vector<16x64xf32>
    %265 = arith.addf %261, %264 : vector<16x64xf32>
    %cst_129 = arith.constant 5.000000e-01 : f32
    %266 = vector.broadcast %cst_129 : f32 to vector<16x64xf32>
    %267 = arith.mulf %266, %265 : vector<16x64xf32>
    %cst_130 = arith.constant 4.471500e-02 : f32
    %268 = vector.broadcast %cst_130 : f32 to vector<16x64xf32>
    %269 = arith.mulf %268, %265 : vector<16x64xf32>
    %270 = arith.mulf %269, %265 : vector<16x64xf32>
    %271 = arith.mulf %270, %265 : vector<16x64xf32>
    %272 = arith.addf %265, %271 : vector<16x64xf32>
    %cst_131 = arith.constant 0.797884583 : f32
    %273 = vector.broadcast %cst_131 : f32 to vector<16x64xf32>
    %274 = arith.mulf %273, %272 : vector<16x64xf32>
    %275 = math.tanh %274 : vector<16x64xf32>
    %cst_132 = arith.constant 1.000000e+00 : f32
    %276 = vector.broadcast %cst_132 : f32 to vector<16x64xf32>
    %277 = arith.addf %276, %275 : vector<16x64xf32>
    %278 = arith.mulf %267, %277 : vector<16x64xf32>
    %279 = arith.truncf %278 : vector<16x64xf32> to vector<16x64xbf16>
    %c0_133 = arith.constant 0 : index
    %c0_134 = arith.constant 0 : index
    %c0_135 = arith.constant 0 : index
    %280 = vector.load %arg20[%c0_133, %c0_134, %c0_135] : memref<2x64x32xbf16, #tpu.memory_space<vmem>>, vector<1x64x32xbf16>
    %281 = vector.shape_cast %280 : vector<1x64x32xbf16> to vector<64x32xbf16>
    %cst_136 = arith.constant dense<0.000000e+00> : vector<16x32xf32>
    %282 = tpu.matmul %279, %281, %cst_136 {dimension_numbers = #tpu.dot_dimension_numbers<[1], [0], [0], [1], [0, 0, 1, 1], [], []>} : vector<16x64xbf16>, vector<64x32xbf16>, vector<16x32xf32> -> vector<16x32xf32>
    %283 = arith.addf %233, %282 : vector<16x32xf32>
    %c0_137 = arith.constant 0 : index
    %c0_138 = arith.constant 0 : index
    %c0_139 = arith.constant 0 : index
    %284 = vector.load %arg21[%c0_137, %c0_138, %c0_139] : memref<2x1x32xf32, #tpu.memory_space<vmem>>, vector<1x1x32xf32>
    %285 = vector.shape_cast %284 : vector<1x1x32xf32> to vector<1x32xf32>
    %286 = vector.broadcast %285 : vector<1x32xf32> to vector<16x32xf32>
    %287 = arith.addf %283, %286 : vector<16x32xf32>
    %c1_140 = arith.constant 1 : index
    %c0_141 = arith.constant 0 : index
    %c0_142 = arith.constant 0 : index
    %288 = vector.load %arg10[%c1_140, %c0_141, %c0_142] : memref<2x1x32xf32, #tpu.memory_space<vmem>>, vector<1x1x32xf32>
    %289 = vector.shape_cast %288 : vector<1x1x32xf32> to vector<1x32xf32>
    %c1_143 = arith.constant 1 : index
    %c0_144 = arith.constant 0 : index
    %c0_145 = arith.constant 0 : index
    %290 = vector.load %arg11[%c1_143, %c0_144, %c0_145] : memref<2x1x32xf32, #tpu.memory_space<vmem>>, vector<1x1x32xf32>
    %291 = vector.shape_cast %290 : vector<1x1x32xf32> to vector<1x32xf32>
    %cst_146 = arith.constant dense<0.000000e+00> : vector<16xf32>
    %292 = vector.multi_reduction <add>, %287, %cst_146 [1] : vector<16x32xf32> to vector<16xf32>
    %293 = vector.shape_cast %292 : vector<16xf32> to vector<16x1xf32>
    %cst_147 = arith.constant 3.200000e+01 : f32
    %294 = vector.broadcast %cst_147 : f32 to vector<16x1xf32>
    %295 = arith.divf %293, %294 : vector<16x1xf32>
    %296 = vector.broadcast %295 : vector<16x1xf32> to vector<16x32xf32>
    %297 = arith.subf %287, %296 : vector<16x32xf32>
    %298 = arith.mulf %297, %297 : vector<16x32xf32>
    %cst_148 = arith.constant dense<0.000000e+00> : vector<16xf32>
    %299 = vector.multi_reduction <add>, %298, %cst_148 [1] : vector<16x32xf32> to vector<16xf32>
    %300 = vector.shape_cast %299 : vector<16xf32> to vector<16x1xf32>
    %cst_149 = arith.constant 3.200000e+01 : f32
    %301 = vector.broadcast %cst_149 : f32 to vector<16x1xf32>
    %302 = arith.divf %300, %301 : vector<16x1xf32>
    %cst_150 = arith.constant 9.99999974E-6 : f32
    %303 = vector.broadcast %cst_150 : f32 to vector<16x1xf32>
    %304 = arith.addf %302, %303 : vector<16x1xf32>
    %305 = math.rsqrt %304 : vector<16x1xf32>
    %306 = vector.broadcast %305 : vector<16x1xf32> to vector<16x32xf32>
    %307 = arith.mulf %297, %306 : vector<16x32xf32>
    %308 = vector.broadcast %289 : vector<1x32xf32> to vector<16x32xf32>
    %309 = arith.mulf %307, %308 : vector<16x32xf32>
    %310 = vector.broadcast %291 : vector<1x32xf32> to vector<16x32xf32>
    %311 = arith.addf %309, %310 : vector<16x32xf32>
    %312 = arith.truncf %311 : vector<16x32xf32> to vector<16x32xbf16>
    %c1_151 = arith.constant 1 : index
    %c0_152 = arith.constant 0 : index
    %c0_153 = arith.constant 0 : index
    %313 = vector.load %arg12[%c1_151, %c0_152, %c0_153] : memref<2x32x96xbf16, #tpu.memory_space<vmem>>, vector<1x32x96xbf16>
    %314 = vector.shape_cast %313 : vector<1x32x96xbf16> to vector<32x96xbf16>
    %cst_154 = arith.constant dense<0.000000e+00> : vector<16x96xf32>
    %315 = tpu.matmul %312, %314, %cst_154 {dimension_numbers = #tpu.dot_dimension_numbers<[1], [0], [0], [1], [0, 0, 1, 1], [], []>} : vector<16x32xbf16>, vector<32x96xbf16>, vector<16x96xf32> -> vector<16x96xf32>
    %c1_155 = arith.constant 1 : index
    %c0_156 = arith.constant 0 : index
    %c0_157 = arith.constant 0 : index
    %316 = vector.load %arg13[%c1_155, %c0_156, %c0_157] : memref<2x1x96xf32, #tpu.memory_space<vmem>>, vector<1x1x96xf32>
    %317 = vector.shape_cast %316 : vector<1x1x96xf32> to vector<1x96xf32>
    %318 = vector.broadcast %317 : vector<1x96xf32> to vector<16x96xf32>
    %319 = arith.addf %315, %318 : vector<16x96xf32>
    %320 = vector.extract_strided_slice %319 {offsets = [0, 0], sizes = [16, 32], strides = [1, 1]} : vector<16x96xf32> to vector<16x32xf32>
    %321 = vector.extract_strided_slice %319 {offsets = [0, 32], sizes = [16, 32], strides = [1, 1]} : vector<16x96xf32> to vector<16x32xf32>
    %322 = vector.extract_strided_slice %319 {offsets = [0, 64], sizes = [16, 32], strides = [1, 1]} : vector<16x96xf32> to vector<16x32xf32>
    %cst_158 = arith.constant 0.000000e+00 : f32
    %323 = vector.broadcast %cst_158 : f32 to vector<16x32xf32>
    %324 = vector.extract_strided_slice %320 {offsets = [0, 0], sizes = [16, 8], strides = [1, 1]} : vector<16x32xf32> to vector<16x8xf32>
    %325 = arith.truncf %324 : vector<16x8xf32> to vector<16x8xbf16>
    %326 = vector.extract_strided_slice %321 {offsets = [0, 0], sizes = [16, 8], strides = [1, 1]} : vector<16x32xf32> to vector<16x8xf32>
    %327 = arith.truncf %326 : vector<16x8xf32> to vector<16x8xbf16>
    %328 = vector.extract_strided_slice %322 {offsets = [0, 0], sizes = [16, 8], strides = [1, 1]} : vector<16x32xf32> to vector<16x8xf32>
    %329 = arith.truncf %328 : vector<16x8xf32> to vector<16x8xbf16>
    %cst_159 = arith.constant dense<0.000000e+00> : vector<16x16xf32>
    %330 = tpu.matmul %325, %327, %cst_159 {dimension_numbers = #tpu.dot_dimension_numbers<[1], [1], [0], [0], [0, 0, 1, 0], [], []>} : vector<16x8xbf16>, vector<16x8xbf16>, vector<16x16xf32> -> vector<16x16xf32>
    %cst_160 = arith.constant dense<0xFF800000> : vector<16xf32>
    %331 = vector.multi_reduction <maximumf>, %330, %cst_160 [1] : vector<16x16xf32> to vector<16xf32>
    %332 = vector.shape_cast %331 : vector<16xf32> to vector<16x1xf32>
    %333 = vector.broadcast %332 : vector<16x1xf32> to vector<16x16xf32>
    %334 = arith.subf %330, %333 : vector<16x16xf32>
    %335 = math.exp %334 : vector<16x16xf32>
    %cst_161 = arith.constant dense<0.000000e+00> : vector<16xf32>
    %336 = vector.multi_reduction <add>, %335, %cst_161 [1] : vector<16x16xf32> to vector<16xf32>
    %337 = vector.shape_cast %336 : vector<16xf32> to vector<16x1xf32>
    %338 = tpu.reciprocal %337 {approx = true} : vector<16x1xf32> -> vector<16x1xf32>
    %339 = vector.broadcast %338 : vector<16x1xf32> to vector<16x16xf32>
    %340 = arith.mulf %335, %339 : vector<16x16xf32>
    %341 = arith.truncf %340 : vector<16x16xf32> to vector<16x16xbf16>
    %cst_162 = arith.constant dense<0.000000e+00> : vector<16x8xf32>
    %342 = tpu.matmul %341, %329, %cst_162 {dimension_numbers = #tpu.dot_dimension_numbers<[1], [0], [0], [1], [0, 0, 1, 1], [], []>} : vector<16x16xbf16>, vector<16x8xbf16>, vector<16x8xf32> -> vector<16x8xf32>
    %343 = arith.truncf %342 : vector<16x8xf32> to vector<16x8xbf16>
    %c1_163 = arith.constant 1 : index
    %c0_164 = arith.constant 0 : index
    %c0_165 = arith.constant 0 : index
    %c0_166 = arith.constant 0 : index
    %344 = vector.load %arg14[%c1_163, %c0_164, %c0_165, %c0_166] : memref<2x4x8x32xbf16, #tpu.memory_space<vmem>>, vector<1x1x8x32xbf16>
    %345 = vector.shape_cast %344 : vector<1x1x8x32xbf16> to vector<8x32xbf16>
    %cst_167 = arith.constant dense<0.000000e+00> : vector<16x32xf32>
    %346 = tpu.matmul %343, %345, %cst_167 {dimension_numbers = #tpu.dot_dimension_numbers<[1], [0], [0], [1], [0, 0, 1, 1], [], []>} : vector<16x8xbf16>, vector<8x32xbf16>, vector<16x32xf32> -> vector<16x32xf32>
    %347 = arith.addf %323, %346 : vector<16x32xf32>
    %348 = vector.extract_strided_slice %320 {offsets = [0, 8], sizes = [16, 8], strides = [1, 1]} : vector<16x32xf32> to vector<16x8xf32>
    %349 = arith.truncf %348 : vector<16x8xf32> to vector<16x8xbf16>
    %350 = vector.extract_strided_slice %321 {offsets = [0, 8], sizes = [16, 8], strides = [1, 1]} : vector<16x32xf32> to vector<16x8xf32>
    %351 = arith.truncf %350 : vector<16x8xf32> to vector<16x8xbf16>
    %352 = vector.extract_strided_slice %322 {offsets = [0, 8], sizes = [16, 8], strides = [1, 1]} : vector<16x32xf32> to vector<16x8xf32>
    %353 = arith.truncf %352 : vector<16x8xf32> to vector<16x8xbf16>
    %cst_168 = arith.constant dense<0.000000e+00> : vector<16x16xf32>
    %354 = tpu.matmul %349, %351, %cst_168 {dimension_numbers = #tpu.dot_dimension_numbers<[1], [1], [0], [0], [0, 0, 1, 0], [], []>} : vector<16x8xbf16>, vector<16x8xbf16>, vector<16x16xf32> -> vector<16x16xf32>
    %cst_169 = arith.constant dense<0xFF800000> : vector<16xf32>
    %355 = vector.multi_reduction <maximumf>, %354, %cst_169 [1] : vector<16x16xf32> to vector<16xf32>
    %356 = vector.shape_cast %355 : vector<16xf32> to vector<16x1xf32>
    %357 = vector.broadcast %356 : vector<16x1xf32> to vector<16x16xf32>
    %358 = arith.subf %354, %357 : vector<16x16xf32>
    %359 = math.exp %358 : vector<16x16xf32>
    %cst_170 = arith.constant dense<0.000000e+00> : vector<16xf32>
    %360 = vector.multi_reduction <add>, %359, %cst_170 [1] : vector<16x16xf32> to vector<16xf32>
    %361 = vector.shape_cast %360 : vector<16xf32> to vector<16x1xf32>
    %362 = tpu.reciprocal %361 {approx = true} : vector<16x1xf32> -> vector<16x1xf32>
    %363 = vector.broadcast %362 : vector<16x1xf32> to vector<16x16xf32>
    %364 = arith.mulf %359, %363 : vector<16x16xf32>
    %365 = arith.truncf %364 : vector<16x16xf32> to vector<16x16xbf16>
    %cst_171 = arith.constant dense<0.000000e+00> : vector<16x8xf32>
    %366 = tpu.matmul %365, %353, %cst_171 {dimension_numbers = #tpu.dot_dimension_numbers<[1], [0], [0], [1], [0, 0, 1, 1], [], []>} : vector<16x16xbf16>, vector<16x8xbf16>, vector<16x8xf32> -> vector<16x8xf32>
    %367 = arith.truncf %366 : vector<16x8xf32> to vector<16x8xbf16>
    %c1_172 = arith.constant 1 : index
    %c1_173 = arith.constant 1 : index
    %c0_174 = arith.constant 0 : index
    %c0_175 = arith.constant 0 : index
    %368 = vector.load %arg14[%c1_172, %c1_173, %c0_174, %c0_175] : memref<2x4x8x32xbf16, #tpu.memory_space<vmem>>, vector<1x1x8x32xbf16>
    %369 = vector.shape_cast %368 : vector<1x1x8x32xbf16> to vector<8x32xbf16>
    %cst_176 = arith.constant dense<0.000000e+00> : vector<16x32xf32>
    %370 = tpu.matmul %367, %369, %cst_176 {dimension_numbers = #tpu.dot_dimension_numbers<[1], [0], [0], [1], [0, 0, 1, 1], [], []>} : vector<16x8xbf16>, vector<8x32xbf16>, vector<16x32xf32> -> vector<16x32xf32>
    %371 = arith.addf %347, %370 : vector<16x32xf32>
    %372 = vector.extract_strided_slice %320 {offsets = [0, 16], sizes = [16, 8], strides = [1, 1]} : vector<16x32xf32> to vector<16x8xf32>
    %373 = arith.truncf %372 : vector<16x8xf32> to vector<16x8xbf16>
    %374 = vector.extract_strided_slice %321 {offsets = [0, 16], sizes = [16, 8], strides = [1, 1]} : vector<16x32xf32> to vector<16x8xf32>
    %375 = arith.truncf %374 : vector<16x8xf32> to vector<16x8xbf16>
    %376 = vector.extract_strided_slice %322 {offsets = [0, 16], sizes = [16, 8], strides = [1, 1]} : vector<16x32xf32> to vector<16x8xf32>
    %377 = arith.truncf %376 : vector<16x8xf32> to vector<16x8xbf16>
    %cst_177 = arith.constant dense<0.000000e+00> : vector<16x16xf32>
    %378 = tpu.matmul %373, %375, %cst_177 {dimension_numbers = #tpu.dot_dimension_numbers<[1], [1], [0], [0], [0, 0, 1, 0], [], []>} : vector<16x8xbf16>, vector<16x8xbf16>, vector<16x16xf32> -> vector<16x16xf32>
    %cst_178 = arith.constant dense<0xFF800000> : vector<16xf32>
    %379 = vector.multi_reduction <maximumf>, %378, %cst_178 [1] : vector<16x16xf32> to vector<16xf32>
    %380 = vector.shape_cast %379 : vector<16xf32> to vector<16x1xf32>
    %381 = vector.broadcast %380 : vector<16x1xf32> to vector<16x16xf32>
    %382 = arith.subf %378, %381 : vector<16x16xf32>
    %383 = math.exp %382 : vector<16x16xf32>
    %cst_179 = arith.constant dense<0.000000e+00> : vector<16xf32>
    %384 = vector.multi_reduction <add>, %383, %cst_179 [1] : vector<16x16xf32> to vector<16xf32>
    %385 = vector.shape_cast %384 : vector<16xf32> to vector<16x1xf32>
    %386 = tpu.reciprocal %385 {approx = true} : vector<16x1xf32> -> vector<16x1xf32>
    %387 = vector.broadcast %386 : vector<16x1xf32> to vector<16x16xf32>
    %388 = arith.mulf %383, %387 : vector<16x16xf32>
    %389 = arith.truncf %388 : vector<16x16xf32> to vector<16x16xbf16>
    %cst_180 = arith.constant dense<0.000000e+00> : vector<16x8xf32>
    %390 = tpu.matmul %389, %377, %cst_180 {dimension_numbers = #tpu.dot_dimension_numbers<[1], [0], [0], [1], [0, 0, 1, 1], [], []>} : vector<16x16xbf16>, vector<16x8xbf16>, vector<16x8xf32> -> vector<16x8xf32>
    %391 = arith.truncf %390 : vector<16x8xf32> to vector<16x8xbf16>
    %c1_181 = arith.constant 1 : index
    %c2_182 = arith.constant 2 : index
    %c0_183 = arith.constant 0 : index
    %c0_184 = arith.constant 0 : index
    %392 = vector.load %arg14[%c1_181, %c2_182, %c0_183, %c0_184] : memref<2x4x8x32xbf16, #tpu.memory_space<vmem>>, vector<1x1x8x32xbf16>
    %393 = vector.shape_cast %392 : vector<1x1x8x32xbf16> to vector<8x32xbf16>
    %cst_185 = arith.constant dense<0.000000e+00> : vector<16x32xf32>
    %394 = tpu.matmul %391, %393, %cst_185 {dimension_numbers = #tpu.dot_dimension_numbers<[1], [0], [0], [1], [0, 0, 1, 1], [], []>} : vector<16x8xbf16>, vector<8x32xbf16>, vector<16x32xf32> -> vector<16x32xf32>
    %395 = arith.addf %371, %394 : vector<16x32xf32>
    %396 = vector.extract_strided_slice %320 {offsets = [0, 24], sizes = [16, 8], strides = [1, 1]} : vector<16x32xf32> to vector<16x8xf32>
    %397 = arith.truncf %396 : vector<16x8xf32> to vector<16x8xbf16>
    %398 = vector.extract_strided_slice %321 {offsets = [0, 24], sizes = [16, 8], strides = [1, 1]} : vector<16x32xf32> to vector<16x8xf32>
    %399 = arith.truncf %398 : vector<16x8xf32> to vector<16x8xbf16>
    %400 = vector.extract_strided_slice %322 {offsets = [0, 24], sizes = [16, 8], strides = [1, 1]} : vector<16x32xf32> to vector<16x8xf32>
    %401 = arith.truncf %400 : vector<16x8xf32> to vector<16x8xbf16>
    %cst_186 = arith.constant dense<0.000000e+00> : vector<16x16xf32>
    %402 = tpu.matmul %397, %399, %cst_186 {dimension_numbers = #tpu.dot_dimension_numbers<[1], [1], [0], [0], [0, 0, 1, 0], [], []>} : vector<16x8xbf16>, vector<16x8xbf16>, vector<16x16xf32> -> vector<16x16xf32>
    %cst_187 = arith.constant dense<0xFF800000> : vector<16xf32>
    %403 = vector.multi_reduction <maximumf>, %402, %cst_187 [1] : vector<16x16xf32> to vector<16xf32>
    %404 = vector.shape_cast %403 : vector<16xf32> to vector<16x1xf32>
    %405 = vector.broadcast %404 : vector<16x1xf32> to vector<16x16xf32>
    %406 = arith.subf %402, %405 : vector<16x16xf32>
    %407 = math.exp %406 : vector<16x16xf32>
    %cst_188 = arith.constant dense<0.000000e+00> : vector<16xf32>
    %408 = vector.multi_reduction <add>, %407, %cst_188 [1] : vector<16x16xf32> to vector<16xf32>
    %409 = vector.shape_cast %408 : vector<16xf32> to vector<16x1xf32>
    %410 = tpu.reciprocal %409 {approx = true} : vector<16x1xf32> -> vector<16x1xf32>
    %411 = vector.broadcast %410 : vector<16x1xf32> to vector<16x16xf32>
    %412 = arith.mulf %407, %411 : vector<16x16xf32>
    %413 = arith.truncf %412 : vector<16x16xf32> to vector<16x16xbf16>
    %cst_189 = arith.constant dense<0.000000e+00> : vector<16x8xf32>
    %414 = tpu.matmul %413, %401, %cst_189 {dimension_numbers = #tpu.dot_dimension_numbers<[1], [0], [0], [1], [0, 0, 1, 1], [], []>} : vector<16x16xbf16>, vector<16x8xbf16>, vector<16x8xf32> -> vector<16x8xf32>
    %415 = arith.truncf %414 : vector<16x8xf32> to vector<16x8xbf16>
    %c1_190 = arith.constant 1 : index
    %c3_191 = arith.constant 3 : index
    %c0_192 = arith.constant 0 : index
    %c0_193 = arith.constant 0 : index
    %416 = vector.load %arg14[%c1_190, %c3_191, %c0_192, %c0_193] : memref<2x4x8x32xbf16, #tpu.memory_space<vmem>>, vector<1x1x8x32xbf16>
    %417 = vector.shape_cast %416 : vector<1x1x8x32xbf16> to vector<8x32xbf16>
    %cst_194 = arith.constant dense<0.000000e+00> : vector<16x32xf32>
    %418 = tpu.matmul %415, %417, %cst_194 {dimension_numbers = #tpu.dot_dimension_numbers<[1], [0], [0], [1], [0, 0, 1, 1], [], []>} : vector<16x8xbf16>, vector<8x32xbf16>, vector<16x32xf32> -> vector<16x32xf32>
    %419 = arith.addf %395, %418 : vector<16x32xf32>
    %420 = arith.addf %287, %419 : vector<16x32xf32>
    %c1_195 = arith.constant 1 : index
    %c0_196 = arith.constant 0 : index
    %c0_197 = arith.constant 0 : index
    %421 = vector.load %arg15[%c1_195, %c0_196, %c0_197] : memref<2x1x32xf32, #tpu.memory_space<vmem>>, vector<1x1x32xf32>
    %422 = vector.shape_cast %421 : vector<1x1x32xf32> to vector<1x32xf32>
    %423 = vector.broadcast %422 : vector<1x32xf32> to vector<16x32xf32>
    %424 = arith.addf %420, %423 : vector<16x32xf32>
    %c1_198 = arith.constant 1 : index
    %c0_199 = arith.constant 0 : index
    %c0_200 = arith.constant 0 : index
    %425 = vector.load %arg16[%c1_198, %c0_199, %c0_200] : memref<2x1x32xf32, #tpu.memory_space<vmem>>, vector<1x1x32xf32>
    %426 = vector.shape_cast %425 : vector<1x1x32xf32> to vector<1x32xf32>
    %c1_201 = arith.constant 1 : index
    %c0_202 = arith.constant 0 : index
    %c0_203 = arith.constant 0 : index
    %427 = vector.load %arg17[%c1_201, %c0_202, %c0_203] : memref<2x1x32xf32, #tpu.memory_space<vmem>>, vector<1x1x32xf32>
    %428 = vector.shape_cast %427 : vector<1x1x32xf32> to vector<1x32xf32>
    %cst_204 = arith.constant dense<0.000000e+00> : vector<16xf32>
    %429 = vector.multi_reduction <add>, %424, %cst_204 [1] : vector<16x32xf32> to vector<16xf32>
    %430 = vector.shape_cast %429 : vector<16xf32> to vector<16x1xf32>
    %cst_205 = arith.constant 3.200000e+01 : f32
    %431 = vector.broadcast %cst_205 : f32 to vector<16x1xf32>
    %432 = arith.divf %430, %431 : vector<16x1xf32>
    %433 = vector.broadcast %432 : vector<16x1xf32> to vector<16x32xf32>
    %434 = arith.subf %424, %433 : vector<16x32xf32>
    %435 = arith.mulf %434, %434 : vector<16x32xf32>
    %cst_206 = arith.constant dense<0.000000e+00> : vector<16xf32>
    %436 = vector.multi_reduction <add>, %435, %cst_206 [1] : vector<16x32xf32> to vector<16xf32>
    %437 = vector.shape_cast %436 : vector<16xf32> to vector<16x1xf32>
    %cst_207 = arith.constant 3.200000e+01 : f32
    %438 = vector.broadcast %cst_207 : f32 to vector<16x1xf32>
    %439 = arith.divf %437, %438 : vector<16x1xf32>
    %cst_208 = arith.constant 9.99999974E-6 : f32
    %440 = vector.broadcast %cst_208 : f32 to vector<16x1xf32>
    %441 = arith.addf %439, %440 : vector<16x1xf32>
    %442 = math.rsqrt %441 : vector<16x1xf32>
    %443 = vector.broadcast %442 : vector<16x1xf32> to vector<16x32xf32>
    %444 = arith.mulf %434, %443 : vector<16x32xf32>
    %445 = vector.broadcast %426 : vector<1x32xf32> to vector<16x32xf32>
    %446 = arith.mulf %444, %445 : vector<16x32xf32>
    %447 = vector.broadcast %428 : vector<1x32xf32> to vector<16x32xf32>
    %448 = arith.addf %446, %447 : vector<16x32xf32>
    %449 = arith.truncf %448 : vector<16x32xf32> to vector<16x32xbf16>
    %c1_209 = arith.constant 1 : index
    %c0_210 = arith.constant 0 : index
    %c0_211 = arith.constant 0 : index
    %450 = vector.load %arg18[%c1_209, %c0_210, %c0_211] : memref<2x32x64xbf16, #tpu.memory_space<vmem>>, vector<1x32x64xbf16>
    %451 = vector.shape_cast %450 : vector<1x32x64xbf16> to vector<32x64xbf16>
    %cst_212 = arith.constant dense<0.000000e+00> : vector<16x64xf32>
    %452 = tpu.matmul %449, %451, %cst_212 {dimension_numbers = #tpu.dot_dimension_numbers<[1], [0], [0], [1], [0, 0, 1, 1], [], []>} : vector<16x32xbf16>, vector<32x64xbf16>, vector<16x64xf32> -> vector<16x64xf32>
    %c1_213 = arith.constant 1 : index
    %c0_214 = arith.constant 0 : index
    %c0_215 = arith.constant 0 : index
    %453 = vector.load %arg19[%c1_213, %c0_214, %c0_215] : memref<2x1x64xf32, #tpu.memory_space<vmem>>, vector<1x1x64xf32>
    %454 = vector.shape_cast %453 : vector<1x1x64xf32> to vector<1x64xf32>
    %455 = vector.broadcast %454 : vector<1x64xf32> to vector<16x64xf32>
    %456 = arith.addf %452, %455 : vector<16x64xf32>
    %cst_216 = arith.constant 5.000000e-01 : f32
    %457 = vector.broadcast %cst_216 : f32 to vector<16x64xf32>
    %458 = arith.mulf %457, %456 : vector<16x64xf32>
    %cst_217 = arith.constant 4.471500e-02 : f32
    %459 = vector.broadcast %cst_217 : f32 to vector<16x64xf32>
    %460 = arith.mulf %459, %456 : vector<16x64xf32>
    %461 = arith.mulf %460, %456 : vector<16x64xf32>
    %462 = arith.mulf %461, %456 : vector<16x64xf32>
    %463 = arith.addf %456, %462 : vector<16x64xf32>
    %cst_218 = arith.constant 0.797884583 : f32
    %464 = vector.broadcast %cst_218 : f32 to vector<16x64xf32>
    %465 = arith.mulf %464, %463 : vector<16x64xf32>
    %466 = math.tanh %465 : vector<16x64xf32>
    %cst_219 = arith.constant 1.000000e+00 : f32
    %467 = vector.broadcast %cst_219 : f32 to vector<16x64xf32>
    %468 = arith.addf %467, %466 : vector<16x64xf32>
    %469 = arith.mulf %458, %468 : vector<16x64xf32>
    %470 = arith.truncf %469 : vector<16x64xf32> to vector<16x64xbf16>
    %c1_220 = arith.constant 1 : index
    %c0_221 = arith.constant 0 : index
    %c0_222 = arith.constant 0 : index
    %471 = vector.load %arg20[%c1_220, %c0_221, %c0_222] : memref<2x64x32xbf16, #tpu.memory_space<vmem>>, vector<1x64x32xbf16>
    %472 = vector.shape_cast %471 : vector<1x64x32xbf16> to vector<64x32xbf16>
    %cst_223 = arith.constant dense<0.000000e+00> : vector<16x32xf32>
    %473 = tpu.matmul %470, %472, %cst_223 {dimension_numbers = #tpu.dot_dimension_numbers<[1], [0], [0], [1], [0, 0, 1, 1], [], []>} : vector<16x64xbf16>, vector<64x32xbf16>, vector<16x32xf32> -> vector<16x32xf32>
    %474 = arith.addf %424, %473 : vector<16x32xf32>
    %c1_224 = arith.constant 1 : index
    %c0_225 = arith.constant 0 : index
    %c0_226 = arith.constant 0 : index
    %475 = vector.load %arg21[%c1_224, %c0_225, %c0_226] : memref<2x1x32xf32, #tpu.memory_space<vmem>>, vector<1x1x32xf32>
    %476 = vector.shape_cast %475 : vector<1x1x32xf32> to vector<1x32xf32>
    %477 = vector.broadcast %476 : vector<1x32xf32> to vector<16x32xf32>
    %478 = arith.addf %474, %477 : vector<16x32xf32>
    %c0_227 = arith.constant 0 : index
    %c0_228 = arith.constant 0 : index
    %479 = vector.load %arg22[%c0_227, %c0_228] : memref<1x32xf32, #tpu.memory_space<vmem>>, vector<1x32xf32>
    %c0_229 = arith.constant 0 : index
    %c0_230 = arith.constant 0 : index
    %480 = vector.load %arg23[%c0_229, %c0_230] : memref<1x32xf32, #tpu.memory_space<vmem>>, vector<1x32xf32>
    %cst_231 = arith.constant dense<0.000000e+00> : vector<16xf32>
    %481 = vector.multi_reduction <add>, %478, %cst_231 [1] : vector<16x32xf32> to vector<16xf32>
    %482 = vector.shape_cast %481 : vector<16xf32> to vector<16x1xf32>
    %cst_232 = arith.constant 3.200000e+01 : f32
    %483 = vector.broadcast %cst_232 : f32 to vector<16x1xf32>
    %484 = arith.divf %482, %483 : vector<16x1xf32>
    %485 = vector.broadcast %484 : vector<16x1xf32> to vector<16x32xf32>
    %486 = arith.subf %478, %485 : vector<16x32xf32>
    %487 = arith.mulf %486, %486 : vector<16x32xf32>
    %cst_233 = arith.constant dense<0.000000e+00> : vector<16xf32>
    %488 = vector.multi_reduction <add>, %487, %cst_233 [1] : vector<16x32xf32> to vector<16xf32>
    %489 = vector.shape_cast %488 : vector<16xf32> to vector<16x1xf32>
    %cst_234 = arith.constant 3.200000e+01 : f32
    %490 = vector.broadcast %cst_234 : f32 to vector<16x1xf32>
    %491 = arith.divf %489, %490 : vector<16x1xf32>
    %cst_235 = arith.constant 9.99999974E-6 : f32
    %492 = vector.broadcast %cst_235 : f32 to vector<16x1xf32>
    %493 = arith.addf %491, %492 : vector<16x1xf32>
    %494 = math.rsqrt %493 : vector<16x1xf32>
    %495 = vector.broadcast %494 : vector<16x1xf32> to vector<16x32xf32>
    %496 = arith.mulf %486, %495 : vector<16x32xf32>
    %497 = vector.broadcast %479 : vector<1x32xf32> to vector<16x32xf32>
    %498 = arith.mulf %496, %497 : vector<16x32xf32>
    %499 = vector.broadcast %480 : vector<1x32xf32> to vector<16x32xf32>
    %500 = arith.addf %498, %499 : vector<16x32xf32>
    %501 = arith.truncf %500 : vector<16x32xf32> to vector<16x32xbf16>
    %c0_236 = arith.constant 0 : index
    %c0_237 = arith.constant 0 : index
    %502 = vector.load %arg24[%c0_236, %c0_237] : memref<32x64xbf16, #tpu.memory_space<vmem>>, vector<32x64xbf16>
    %cst_238 = arith.constant dense<0.000000e+00> : vector<16x64xf32>
    %503 = tpu.matmul %501, %502, %cst_238 {dimension_numbers = #tpu.dot_dimension_numbers<[1], [0], [0], [1], [0, 0, 1, 1], [], []>} : vector<16x32xbf16>, vector<32x64xbf16>, vector<16x64xf32> -> vector<16x64xf32>
    %c0_239 = arith.constant 0 : index
    %c0_240 = arith.constant 0 : index
    %504 = vector.load %arg25[%c0_239, %c0_240] : memref<1x64xf32, #tpu.memory_space<vmem>>, vector<1x64xf32>
    %505 = vector.broadcast %504 : vector<1x64xf32> to vector<16x64xf32>
    %506 = arith.addf %503, %505 : vector<16x64xf32>
    %cst_241 = arith.constant dense<0xFF800000> : vector<16xf32>
    %507 = vector.multi_reduction <maximumf>, %506, %cst_241 [1] : vector<16x64xf32> to vector<16xf32>
    %508 = vector.shape_cast %507 : vector<16xf32> to vector<16x1xf32>
    %509 = tpu.iota {dimensions = array<i32: 1>} : vector<16x64xi32>
    %510 = vector.broadcast %508 : vector<16x1xf32> to vector<16x64xf32>
    %511 = arith.cmpf oeq, %506, %510 : vector<16x64xf32>
    %c64_i32 = arith.constant 64 : i32
    %512 = vector.broadcast %c64_i32 : i32 to vector<16x64xi32>
    %513 = arith.select %511, %509, %512 : vector<16x64xi1>, vector<16x64xi32>
    %cst_242 = arith.constant dense<2147483647> : vector<16xi32>
    %514 = vector.multi_reduction <minsi>, %513, %cst_242 [1] : vector<16x64xi32> to vector<16xi32>
    %515 = vector.shape_cast %514 : vector<16xi32> to vector<16x1xi32>
    %c0_243 = arith.constant 0 : index
    %c0_244 = arith.constant 0 : index
    %c0_245 = arith.constant 0 : index
    %516 = vector.load %arg26[%c0_243, %c0_244, %c0_245] : memref<1x16x1xi32, #tpu.memory_space<vmem>>, vector<1x16x1xi32>
    %517 = vector.shape_cast %516 : vector<1x16x1xi32> to vector<16x1xi32>
    %518 = vector.shape_cast %515 : vector<16x1xi32> to vector<1x16x1xi32>
    tpu.vector_store %arg26[%c0_243, %c0_244, %c0_245], %518 {strides = array<i32>} : memref<1x16x1xi32, #tpu.memory_space<vmem>>, vector<1x16x1xi32>,
    return
  }
  func.func @transform_0(%arg0: i32) -> (i32, i32, i32) {
    %c0_i32 = arith.constant 0 : i32
    %c0_i32_0 = arith.constant 0 : i32
    %c0_i32_1 = arith.constant 0 : i32
    return %arg0, %c0_i32, %c0_i32_0 : i32, i32, i32
  }
  func.func @transform_1(%arg0: i32) -> (i32, i32, i32) {
    %c0_i32 = arith.constant 0 : i32
    %c0_i32_0 = arith.constant 0 : i32
    %c0_i32_1 = arith.constant 0 : i32
    return %arg0, %c0_i32, %c0_i32_0 : i32, i32, i32
  }
  func.func @transform_2(%arg0: i32) -> (i32, i32, i32) {
    %c0_i32 = arith.constant 0 : i32
    %c0_i32_0 = arith.constant 0 : i32
    %c0_i32_1 = arith.constant 0 : i32
    return %arg0, %c0_i32, %c0_i32_0 : i32, i32, i32
  }
  func.func @transform_3(%arg0: i32) -> (i32, i32, i32) {
    %c0_i32 = arith.constant 0 : i32
    %c0_i32_0 = arith.constant 0 : i32
    %c0_i32_1 = arith.constant 0 : i32
    return %arg0, %c0_i32, %c0_i32_0 : i32, i32, i32
  }
  func.func @transform_4(%arg0: i32) -> (i32, i32, i32) {
    %c0_i32 = arith.constant 0 : i32
    %c0_i32_0 = arith.constant 0 : i32
    %c0_i32_1 = arith.constant 0 : i32
    %c0_i32_2 = arith.constant 0 : i32
    return %c0_i32, %c0_i32_0, %c0_i32_1 : i32, i32, i32
  }
  func.func @transform_5(%arg0: i32) -> (i32, i32) {
    %c0_i32 = arith.constant 0 : i32
    %c0_i32_0 = arith.constant 0 : i32
    %c0_i32_1 = arith.constant 0 : i32
    return %c0_i32, %c0_i32_0 : i32, i32
  }
  func.func @transform_6(%arg0: i32) -> (i32, i32, i32) {
    %c0_i32 = arith.constant 0 : i32
    %c0_i32_0 = arith.constant 0 : i32
    %c0_i32_1 = arith.constant 0 : i32
    %c0_i32_2 = arith.constant 0 : i32
    return %c0_i32, %c0_i32_0, %c0_i32_1 : i32, i32, i32
  }
  func.func @transform_7(%arg0: i32) -> (i32, i32) {
    %c0_i32 = arith.constant 0 : i32
    %c0_i32_0 = arith.constant 0 : i32
    %c0_i32_1 = arith.constant 0 : i32
    return %c0_i32, %c0_i32_0 : i32, i32
  }
  func.func @transform_8(%arg0: i32) -> (i32, i32) {
    %c0_i32 = arith.constant 0 : i32
    %c0_i32_0 = arith.constant 0 : i32
    %c0_i32_1 = arith.constant 0 : i32
    return %c0_i32, %c0_i32_0 : i32, i32
  }
  func.func @transform_9(%arg0: i32) -> (i32, i32, i32) {
    %c0_i32 = arith.constant 0 : i32
    %c0_i32_0 = arith.constant 0 : i32
    %c0_i32_1 = arith.constant 0 : i32
    %c0_i32_2 = arith.constant 0 : i32
    return %c0_i32, %c0_i32_0, %c0_i32_1 : i32, i32, i32
  }
  func.func @transform_10(%arg0: i32) -> (i32, i32, i32) {
    %c0_i32 = arith.constant 0 : i32
    %c0_i32_0 = arith.constant 0 : i32
    %c0_i32_1 = arith.constant 0 : i32
    %c0_i32_2 = arith.constant 0 : i32
    return %c0_i32, %c0_i32_0, %c0_i32_1 : i32, i32, i32
  }
  func.func @transform_11(%arg0: i32) -> (i32, i32, i32) {
    %c0_i32 = arith.constant 0 : i32
    %c0_i32_0 = arith.constant 0 : i32
    %c0_i32_1 = arith.constant 0 : i32
    %c0_i32_2 = arith.constant 0 : i32
    return %c0_i32, %c0_i32_0, %c0_i32_1 : i32, i32, i32
  }
  func.func @transform_12(%arg0: i32) -> (i32, i32, i32) {
    %c0_i32 = arith.constant 0 : i32
    %c0_i32_0 = arith.constant 0 : i32
    %c0_i32_1 = arith.constant 0 : i32
    %c0_i32_2 = arith.constant 0 : i32
    return %c0_i32, %c0_i32_0, %c0_i32_1 : i32, i32, i32
  }
  func.func @transform_13(%arg0: i32) -> (i32, i32, i32, i32) {
    %c0_i32 = arith.constant 0 : i32
    %c0_i32_0 = arith.constant 0 : i32
    %c0_i32_1 = arith.constant 0 : i32
    %c0_i32_2 = arith.constant 0 : i32
    %c0_i32_3 = arith.constant 0 : i32
    return %c0_i32, %c0_i32_0, %c0_i32_1, %c0_i32_2 : i32, i32, i32, i32
  }
  func.func @transform_14(%arg0: i32) -> (i32, i32, i32) {
    %c0_i32 = arith.constant 0 : i32
    %c0_i32_0 = arith.constant 0 : i32
    %c0_i32_1 = arith.constant 0 : i32
    %c0_i32_2 = arith.constant 0 : i32
    return %c0_i32, %c0_i32_0, %c0_i32_1 : i32, i32, i32
  }
  func.func @transform_15(%arg0: i32) -> (i32, i32, i32) {
    %c0_i32 = arith.constant 0 : i32
    %c0_i32_0 = arith.constant 0 : i32
    %c0_i32_1 = arith.constant 0 : i32
    %c0_i32_2 = arith.constant 0 : i32
    return %c0_i32, %c0_i32_0, %c0_i32_1 : i32, i32, i32
  }
  func.func @transform_16(%arg0: i32) -> (i32, i32, i32) {
    %c0_i32 = arith.constant 0 : i32
    %c0_i32_0 = arith.constant 0 : i32
    %c0_i32_1 = arith.constant 0 : i32
    %c0_i32_2 = arith.constant 0 : i32
    return %c0_i32, %c0_i32_0, %c0_i32_1 : i32, i32, i32
  }
  func.func @transform_17(%arg0: i32) -> (i32, i32, i32) {
    %c0_i32 = arith.constant 0 : i32
    %c0_i32_0 = arith.constant 0 : i32
    %c0_i32_1 = arith.constant 0 : i32
    %c0_i32_2 = arith.constant 0 : i32
    return %c0_i32, %c0_i32_0, %c0_i32_1 : i32, i32, i32
  }
  func.func @transform_18(%arg0: i32) -> (i32, i32, i32) {
    %c0_i32 = arith.constant 0 : i32
    %c0_i32_0 = arith.constant 0 : i32
    %c0_i32_1 = arith.constant 0 : i32
    %c0_i32_2 = arith.constant 0 : i32
    return %c0_i32, %c0_i32_0, %c0_i32_1 : i32, i32, i32
  }
  func.func @transform_19(%arg0: i32) -> (i32, i32, i32) {
    %c0_i32 = arith.constant 0 : i32
    %c0_i32_0 = arith.constant 0 : i32
    %c0_i32_1 = arith.constant 0 : i32
    %c0_i32_2 = arith.constant 0 : i32
    return %c0_i32, %c0_i32_0, %c0_i32_1 : i32, i32, i32
  }
  func.func @transform_20(%arg0: i32) -> (i32, i32, i32) {
    %c0_i32 = arith.constant 0 : i32
    %c0_i32_0 = arith.constant 0 : i32
    %c0_i32_1 = arith.constant 0 : i32
    %c0_i32_2 = arith.constant 0 : i32
    return %c0_i32, %c0_i32_0, %c0_i32_1 : i32, i32, i32
  }
  func.func @transform_21(%arg0: i32) -> (i32, i32) {
    %c0_i32 = arith.constant 0 : i32
    %c0_i32_0 = arith.constant 0 : i32
    %c0_i32_1 = arith.constant 0 : i32
    return %c0_i32, %c0_i32_0 : i32, i32
  }
  func.func @transform_22(%arg0: i32) -> (i32, i32) {
    %c0_i32 = arith.constant 0 : i32
    %c0_i32_0 = arith.constant 0 : i32
    %c0_i32_1 = arith.constant 0 : i32
    return %c0_i32, %c0_i32_0 : i32, i32
  }
  func.func @transform_23(%arg0: i32) -> (i32, i32) {
    %c0_i32 = arith.constant 0 : i32
    %c0_i32_0 = arith.constant 0 : i32
    %c0_i32_1 = arith.constant 0 : i32
    return %c0_i32, %c0_i32_0 : i32, i32
  }
  func.func @transform_24(%arg0: i32) -> (i32, i32) {
    %c0_i32 = arith.constant 0 : i32
    %c0_i32_0 = arith.constant 0 : i32
    %c0_i32_1 = arith.constant 0 : i32
    return %c0_i32, %c0_i32_0 : i32, i32
  }
  func.func @transform_25(%arg0: i32) -> (i32, i32, i32) {
    %c0_i32 = arith.constant 0 : i32
    %c0_i32_0 = arith.constant 0 : i32
    %c0_i32_1 = arith.constant 0 : i32
    return %arg0, %c0_i32, %c0_i32_0 : i32, i32, i32
  }
}

</mosaic_0001>

<llo_original>
// kernel: whisper_forward.1
$region0: #{whisper_forward.1}
  #allocation0 [shape = 'u32[]', space=smem, size = 0x4, offset = 0x4, fixed_abs, tag = 'smem constant byte address 0x4 - core index']
  #allocation1 [shape = 'u32[144,128]{1,0:T(1,128)}', space=vmem, size = 0x12000, scoped, tag = 'internal scratch']
  %s0 = inlined_call_operand.vmem [shape: f32[2,16,16], index: 0, kind: input, shape index: {}]
  %s1 = inlined_call_operand.vmem [shape: f32[2,16,16], index: 1, kind: input, shape index: {}]
  %s2 = inlined_call_operand.vmem [shape: f32[2,16,16], index: 2, kind: input, shape index: {}]
  %s3 = inlined_call_operand.vmem [shape: f32[2,16,16], index: 3, kind: input, shape index: {}]
  %s4 = inlined_call_operand.vmem [shape: bf16[3,16,32], index: 4, kind: input, shape index: {}]
  %s5 = inlined_call_operand.vmem [shape: f32[1,32], index: 5, kind: input, shape index: {}]
  %s6 = inlined_call_operand.vmem [shape: bf16[3,32,32], index: 6, kind: input, shape index: {}]
  %s7 = inlined_call_operand.vmem [shape: f32[1,32], index: 7, kind: input, shape index: {}]
  %s8 = inlined_call_operand.vmem [shape: f32[16,32], index: 8, kind: input, shape index: {}]
  %s9 = inlined_call_operand.vmem [shape: f32[2,1,32], index: 9, kind: input, shape index: {}]
  %s10 = inlined_call_operand.vmem [shape: f32[2,1,32], index: 10, kind: input, shape index: {}]
  %s11 = inlined_call_operand.vmem [shape: bf16[2,32,96], index: 11, kind: input, shape index: {}]
  %s12 = inlined_call_operand.vmem [shape: f32[2,1,96], index: 12, kind: input, shape index: {}]
  %s13 = inlined_call_operand.vmem [shape: bf16[2,4,8,32], index: 13, kind: input, shape index: {}]
  %s14 = inlined_call_operand.vmem [shape: f32[2,1,32], index: 14, kind: input, shape index: {}]
  %s15 = inlined_call_operand.vmem [shape: f32[2,1,32], index: 15, kind: input, shape index: {}]
  %s16 = inlined_call_operand.vmem [shape: f32[2,1,32], index: 16, kind: input, shape index: {}]
  %s17 = inlined_call_operand.vmem [shape: bf16[2,32,64], index: 17, kind: input, shape index: {}]
  %s18 = inlined_call_operand.vmem [shape: f32[2,1,64], index: 18, kind: input, shape index: {}]
  %s19 = inlined_call_operand.vmem [shape: bf16[2,64,32], index: 19, kind: input, shape index: {}]
  %s20 = inlined_call_operand.vmem [shape: f32[2,1,32], index: 20, kind: input, shape index: {}]
  %s21 = inlined_call_operand.vmem [shape: f32[1,32], index: 21, kind: input, shape index: {}]
  %s22 = inlined_call_operand.vmem [shape: f32[1,32], index: 22, kind: input, shape index: {}]
  %s23 = inlined_call_operand.vmem [shape: bf16[32,64], index: 23, kind: input, shape index: {}]
  %s24 = inlined_call_operand.vmem [shape: f32[1,64], index: 24, kind: input, shape index: {}]
  %s25 = inlined_call_operand.vmem [shape: s32[2,16,1], index: 25, kind: output, shape index: {}]
  %s26 = sld [smem:[#allocation0]]
  $region133: #{whisper_forward.1} parent=0
    _
  %s28 = ssub.s32 1, %s26
  %s29 = scalar_select 0, %s28, %s26
  loop: start=0, step=1, limit=4
  $region2: #{whisper_forward.1} parent=0 // loop_pre_header
    _
  $region3: #{whisper_forward.1} parent=0 // loop_header
    %s31 = sphi 0, %s35
    %p32 = scmp.ge.s32.totalorder %s31, 4
    %s41 = sphi 0, %s43
    %s44 = sphi 0, %s41
    %s45 = sphi 0, %s44
    %s61 = sphi 0, %s45
    %s67 = sphi 0, %s69
    %s70 = sphi 0, %s67
    %s71 = sphi 0, %s70
    %s87 = sphi 0, %s71
    %s93 = sphi 0, %s95
    %s96 = sphi 0, %s93
    %s97 = sphi 0, %s96
    %s113 = sphi 0, %s97
    %s119 = sphi 0, %s121
    %s122 = sphi 0, %s119
    %s123 = sphi 0, %s122
    %s139 = sphi 0, %s123
    %s143 = sphi 0, %s143
    %s145 = sphi 0, %s143
    %s146 = sphi 0, %s145
    %s160 = sphi 0, %s146
    %s164 = sphi 0, %s164
    %s166 = sphi 0, %s164
    %s167 = sphi 0, %s166
    %s181 = sphi 0, %s167
    %s185 = sphi 0, %s185
    %s187 = sphi 0, %s185
    %s188 = sphi 0, %s187
    %s202 = sphi 0, %s188
    %s206 = sphi 0, %s206
    %s208 = sphi 0, %s206
    %s209 = sphi 0, %s208
    %s223 = sphi 0, %s209
    %s227 = sphi 0, %s227
    %s229 = sphi 0, %s227
    %s230 = sphi 0, %s229
    %s244 = sphi 0, %s230
    %s248 = sphi 0, %s248
    %s250 = sphi 0, %s248
    %s251 = sphi 0, %s250
    %s265 = sphi 0, %s251
    %s269 = sphi 0, %s269
    %s271 = sphi 0, %s269
    %s272 = sphi 0, %s271
    %s286 = sphi 0, %s272
    %s290 = sphi 0, %s290
    %s292 = sphi 0, %s290
    %s293 = sphi 0, %s292
    %s307 = sphi 0, %s293
    %s311 = sphi 0, %s311
    %s313 = sphi 0, %s311
    %s314 = sphi 0, %s313
    %s328 = sphi 0, %s314
    %s332 = sphi 0, %s332
    %s334 = sphi 0, %s332
    %s335 = sphi 0, %s334
    %s349 = sphi 0, %s335
    %s353 = sphi 0, %s353
    %s355 = sphi 0, %s353
    %s356 = sphi 0, %s355
    %s370 = sphi 0, %s356
    %s374 = sphi 0, %s374
    %s376 = sphi 0, %s374
    %s377 = sphi 0, %s376
    %s391 = sphi 0, %s377
    %s395 = sphi 0, %s395
    %s397 = sphi 0, %s395
    %s398 = sphi 0, %s397
    %s412 = sphi 0, %s398
    %s416 = sphi 0, %s416
    %s418 = sphi 0, %s416
    %s419 = sphi 0, %s418
    %s433 = sphi 0, %s419
    %s437 = sphi 0, %s437
    %s439 = sphi 0, %s437
    %s440 = sphi 0, %s439
    %s454 = sphi 0, %s440
    %s458 = sphi 0, %s458
    %s460 = sphi 0, %s458
    %s461 = sphi 0, %s460
    %s475 = sphi 0, %s461
    %s479 = sphi 0, %s479
    %s481 = sphi 0, %s479
    %s482 = sphi 0, %s481
    %s496 = sphi 0, %s482
    %s500 = sphi 0, %s500
    %s502 = sphi 0, %s500
    %s503 = sphi 0, %s502
    %s517 = sphi 0, %s503
    %s521 = sphi 0, %s521
    %s523 = sphi 0, %s521
    %s524 = sphi 0, %s523
    %s538 = sphi 0, %s524
    %s542 = sphi 0, %s542
    %s544 = sphi 0, %s542
    %s545 = sphi 0, %s544
    %s559 = sphi 0, %s545
    %s563 = sphi 0, %s563
    %s565 = sphi 0, %s563
    %s566 = sphi 0, %s565
    %s580 = sphi 0, %s566
    %s586 = sphi 0, %s588
    %s589 = sphi 0, %s586
    %s590 = sphi 0, %s589
    %s606 = sphi 0, %s590
  $region4: #{whisper_forward.1} parent=0 // loop_header_branch
    %34 = sbr.rel (%p32) target = $region8
  $region5: #{whisper_forward.1} parent=0 // loop_body
    %s36 = ssub.s32 %s31, 1
    %s37 = ssub.s32 %s31, 2
    %s38 = sadd.s32 %s31, 1
    %s39 = ssub.s32 %s31, %s38
    %p40 = scmp.eq.s32.totalorder %s39, 0
    %s42 = sadd.s32 %s41, 1
    %s43 = scalar_select %p40, %s41, %s42
    %p46 = pneg %p40
    %p47 = scmp.eq.s32.totalorder %s31, 1
    %p48 = por %p46, %p47
    %p49 = scmp.ne.s32.totalorder %s41, %s44
    %p50 = scmp.eq.s32.totalorder %s31, 0
    %p51 = por %p49, %p50
    %p52 = scmp.ne.s32.totalorder %s41, %s44
    %p53 = scmp.eq.s32.totalorder %s36, 1
    %p54 = por %p52, %p53
    %p55 = scmp.ne.s32.totalorder %s44, %s45
    %p56 = scmp.eq.s32.totalorder %s36, 0
    %p57 = por %p55, %p56
    %p58 = scmp.ne.s32.totalorder %s44, %s45
    %p59 = scmp.eq.s32.totalorder %s37, 1
    %p60 = por %p58, %p59
    %p62 = scmp.ne.s32.totalorder %s45, %s61
    %p63 = scmp.eq.s32.totalorder %s37, 0
    %p64 = por %p62, %p63
    %s65 = ssub.s32 %s31, %s38
    %p66 = scmp.eq.s32.totalorder %s65, 0
    %s68 = sadd.s32 %s67, 1
    %s69 = scalar_select %p66, %s67, %s68
    %p72 = pneg %p66
    %p73 = scmp.eq.s32.totalorder %s31, 1
    %p74 = por %p72, %p73
    %p75 = scmp.ne.s32.totalorder %s67, %s70
    %p76 = scmp.eq.s32.totalorder %s31, 0
    %p77 = por %p75, %p76
    %p78 = scmp.ne.s32.totalorder %s67, %s70
    %p79 = scmp.eq.s32.totalorder %s36, 1
    %p80 = por %p78, %p79
    %p81 = scmp.ne.s32.totalorder %s70, %s71
    %p82 = scmp.eq.s32.totalorder %s36, 0
    %p83 = por %p81, %p82
    %p84 = scmp.ne.s32.totalorder %s70, %s71
    %p85 = scmp.eq.s32.totalorder %s37, 1
    %p86 = por %p84, %p85
    %p88 = scmp.ne.s32.totalorder %s71, %s87
    %p89 = scmp.eq.s32.totalorder %s37, 0
    %p90 = por %p88, %p89
    %s91 = ssub.s32 %s31, %s38
    %p92 = scmp.eq.s32.totalorder %s91, 0
    %s94 = sadd.s32 %s93, 1
    %s95 = scalar_select %p92, %s93, %s94
    %p98 = pneg %p92
    %p99 = scmp.eq.s32.totalorder %s31, 1
    %p100 = por %p98, %p99
    %p101 = scmp.ne.s32.totalorder %s93, %s96
    %p102 = scmp.eq.s32.totalorder %s31, 0
    %p103 = por %p101, %p102
    %p104 = scmp.ne.s32.totalorder %s93, %s96
    %p105 = scmp.eq.s32.totalorder %s36, 1
    %p106 = por %p104, %p105
    %p107 = scmp.ne.s32.totalorder %s96, %s97
    %p108 = scmp.eq.s32.totalorder %s36, 0
    %p109 = por %p107, %p108
    %p110 = scmp.ne.s32.totalorder %s96, %s97
    %p111 = scmp.eq.s32.totalorder %s37, 1
    %p112 = por %p110, %p111
    %p114 = scmp.ne.s32.totalorder %s97, %s113
    %p115 = scmp.eq.s32.totalorder %s37, 0
    %p116 = por %p114, %p115
    %s117 = ssub.s32 %s31, %s38
    %p118 = scmp.eq.s32.totalorder %s117, 0
    %s120 = sadd.s32 %s119, 1
    %s121 = scalar_select %p118, %s119, %s120
    %p124 = pneg %p118
    %p125 = scmp.eq.s32.totalorder %s31, 1
    %p126 = por %p124, %p125
    %p127 = scmp.ne.s32.totalorder %s119, %s122
    %p128 = scmp.eq.s32.totalorder %s31, 0
    %p129 = por %p127, %p128
    %p130 = scmp.ne.s32.totalorder %s119, %s122
    %p131 = scmp.eq.s32.totalorder %s36, 1
    %p132 = por %p130, %p131
    %p133 = scmp.ne.s32.totalorder %s122, %s123
    %p134 = scmp.eq.s32.totalorder %s36, 0
    %p135 = por %p133, %p134
    %p136 = scmp.ne.s32.totalorder %s122, %s123
    %p137 = scmp.eq.s32.totalorder %s37, 1
    %p138 = por %p136, %p137
    %p140 = scmp.ne.s32.totalorder %s123, %s139
    %p141 = scmp.eq.s32.totalorder %s37, 0
    %p142 = por %p140, %p141
    %s144 = sadd.s32 %s143, 1
    %p147 = scmp.eq.s32.totalorder %s31, 1
    %p148 = scmp.ne.s32.totalorder %s143, %s145
    %p149 = scmp.eq.s32.totalorder %s31, 0
    %p150 = por %p148, %p149
    %p151 = scmp.ne.s32.totalorder %s143, %s145
    %p152 = scmp.eq.s32.totalorder %s36, 1
    %p153 = por %p151, %p152
    %p154 = scmp.ne.s32.totalorder %s145, %s146
    %p155 = scmp.eq.s32.totalorder %s36, 0
    %p156 = por %p154, %p155
    %p157 = scmp.ne.s32.totalorder %s145, %s146
    %p158 = scmp.eq.s32.totalorder %s37, 1
    %p159 = por %p157, %p158
    %p161 = scmp.ne.s32.totalorder %s146, %s160
    %p162 = scmp.eq.s32.totalorder %s37, 0
    %p163 = por %p161, %p162
    %s165 = sadd.s32 %s164, 1
    %p168 = scmp.eq.s32.totalorder %s31, 1
    %p169 = scmp.ne.s32.totalorder %s164, %s166
    %p170 = scmp.eq.s32.totalorder %s31, 0
    %p171 = por %p169, %p170
    %p172 = scmp.ne.s32.totalorder %s164, %s166
    %p173 = scmp.eq.s32.totalorder %s36, 1
    %p174 = por %p172, %p173
    %p175 = scmp.ne.s32.totalorder %s166, %s167
    %p176 = scmp.eq.s32.totalorder %s36, 0
    %p177 = por %p175, %p176
    %p178 = scmp.ne.s32.totalorder %s166, %s167
    %p179 = scmp.eq.s32.totalorder %s37, 1
    %p180 = por %p178, %p179
    %p182 = scmp.ne.s32.totalorder %s167, %s181
    %p183 = scmp.eq.s32.totalorder %s37, 0
    %p184 = por %p182, %p183
    %s186 = sadd.s32 %s185, 1
    %p189 = scmp.eq.s32.totalorder %s31, 1
    %p190 = scmp.ne.s32.totalorder %s185, %s187
    %p191 = scmp.eq.s32.totalorder %s31, 0
    %p192 = por %p190, %p191
    %p193 = scmp.ne.s32.totalorder %s185, %s187
    %p194 = scmp.eq.s32.totalorder %s36, 1
    %p195 = por %p193, %p194
    %p196 = scmp.ne.s32.totalorder %s187, %s188
    %p197 = scmp.eq.s32.totalorder %s36, 0
    %p198 = por %p196, %p197
    %p199 = scmp.ne.s32.totalorder %s187, %s188
    %p200 = scmp.eq.s32.totalorder %s37, 1
    %p201 = por %p199, %p200
    %p203 = scmp.ne.s32.totalorder %s188, %s202
    %p204 = scmp.eq.s32.totalorder %s37, 0
    %p205 = por %p203, %p204
    %s207 = sadd.s32 %s206, 1
    %p210 = scmp.eq.s32.totalorder %s31, 1
    %p211 = scmp.ne.s32.totalorder %s206, %s208
    %p212 = scmp.eq.s32.totalorder %s31, 0
    %p213 = por %p211, %p212
    %p214 = scmp.ne.s32.totalorder %s206, %s208
    %p215 = scmp.eq.s32.totalorder %s36, 1
    %p216 = por %p214, %p215
    %p217 = scmp.ne.s32.totalorder %s208, %s209
    %p218 = scmp.eq.s32.totalorder %s36, 0
    %p219 = por %p217, %p218
    %p220 = scmp.ne.s32.totalorder %s208, %s209
    %p221 = scmp.eq.s32.totalorder %s37, 1
    %p222 = por %p220, %p221
    %p224 = scmp.ne.s32.totalorder %s209, %s223
    %p225 = scmp.eq.s32.totalorder %s37, 0
    %p226 = por %p224, %p225
    %s228 = sadd.s32 %s227, 1
    %p231 = scmp.eq.s32.totalorder %s31, 1
    %p232 = scmp.ne.s32.totalorder %s227, %s229
    %p233 = scmp.eq.s32.totalorder %s31, 0
    %p234 = por %p232, %p233
    %p235 = scmp.ne.s32.totalorder %s227, %s229
    %p236 = scmp.eq.s32.totalorder %s36, 1
    %p237 = por %p235, %p236
    %p238 = scmp.ne.s32.totalorder %s229, %s230
    %p239 = scmp.eq.s32.totalorder %s36, 0
    %p240 = por %p238, %p239
    %p241 = scmp.ne.s32.totalorder %s229, %s230
    %p242 = scmp.eq.s32.totalorder %s37, 1
    %p243 = por %p241, %p242
    %p245 = scmp.ne.s32.totalorder %s230, %s244
    %p246 = scmp.eq.s32.totalorder %s37, 0
    %p247 = por %p245, %p246
    %s249 = sadd.s32 %s248, 1
    %p252 = scmp.eq.s32.totalorder %s31, 1
    %p253 = scmp.ne.s32.totalorder %s248, %s250
    %p254 = scmp.eq.s32.totalorder %s31, 0
    %p255 = por %p253, %p254
    %p256 = scmp.ne.s32.totalorder %s248, %s250
    %p257 = scmp.eq.s32.totalorder %s36, 1
    %p258 = por %p256, %p257
    %p259 = scmp.ne.s32.totalorder %s250, %s251
    %p260 = scmp.eq.s32.totalorder %s36, 0
    %p261 = por %p259, %p260
    %p262 = scmp.ne.s32.totalorder %s250, %s251
    %p263 = scmp.eq.s32.totalorder %s37, 1
    %p264 = por %p262, %p263
    %p266 = scmp.ne.s32.totalorder %s251, %s265
    %p267 = scmp.eq.s32.totalorder %s37, 0
    %p268 = por %p266, %p267
    %s270 = sadd.s32 %s269, 1
    %p273 = scmp.eq.s32.totalorder %s31, 1
    %p274 = scmp.ne.s32.totalorder %s269, %s271
    %p275 = scmp.eq.s32.totalorder %s31, 0
    %p276 = por %p274, %p275
    %p277 = scmp.ne.s32.totalorder %s269, %s271
    %p278 = scmp.eq.s32.totalorder %s36, 1
    %p279 = por %p277, %p278
    %p280 = scmp.ne.s32.totalorder %s271, %s272
    %p281 = scmp.eq.s32.totalorder %s36, 0
    %p282 = por %p280, %p281
    %p283 = scmp.ne.s32.totalorder %s271, %s272
    %p284 = scmp.eq.s32.totalorder %s37, 1
    %p285 = por %p283, %p284
    %p287 = scmp.ne.s32.totalorder %s272, %s286
    %p288 = scmp.eq.s32.totalorder %s37, 0
    %p289 = por %p287, %p288
    %s291 = sadd.s32 %s290, 1
    %p294 = scmp.eq.s32.totalorder %s31, 1
    %p295 = scmp.ne.s32.totalorder %s290, %s292
    %p296 = scmp.eq.s32.totalorder %s31, 0
    %p297 = por %p295, %p296
    %p298 = scmp.ne.s32.totalorder %s290, %s292
    %p299 = scmp.eq.s32.totalorder %s36, 1
    %p300 = por %p298, %p299
    %p301 = scmp.ne.s32.totalorder %s292, %s293
    %p302 = scmp.eq.s32.totalorder %s36, 0
    %p303 = por %p301, %p302
    %p304 = scmp.ne.s32.totalorder %s292, %s293
    %p305 = scmp.eq.s32.totalorder %s37, 1
    %p306 = por %p304, %p305
    %p308 = scmp.ne.s32.totalorder %s293, %s307
    %p309 = scmp.eq.s32.totalorder %s37, 0
    %p310 = por %p308, %p309
    %s312 = sadd.s32 %s311, 1
    %p315 = scmp.eq.s32.totalorder %s31, 1
    %p316 = scmp.ne.s32.totalorder %s311, %s313
    %p317 = scmp.eq.s32.totalorder %s31, 0
    %p318 = por %p316, %p317
    %p319 = scmp.ne.s32.totalorder %s311, %s313
    %p320 = scmp.eq.s32.totalorder %s36, 1
    %p321 = por %p319, %p320
    %p322 = scmp.ne.s32.totalorder %s313, %s314
    %p323 = scmp.eq.s32.totalorder %s36, 0
    %p324 = por %p322, %p323
    %p325 = scmp.ne.s32.totalorder %s313, %s314
    %p326 = scmp.eq.s32.totalorder %s37, 1
    %p327 = por %p325, %p326
    %p329 = scmp.ne.s32.totalorder %s314, %s328
    %p330 = scmp.eq.s32.totalorder %s37, 0
    %p331 = por %p329, %p330
    %s333 = sadd.s32 %s332, 1
    %p336 = scmp.eq.s32.totalorder %s31, 1
    %p337 = scmp.ne.s32.totalorder %s332, %s334
    %p338 = scmp.eq.s32.totalorder %s31, 0
    %p339 = por %p337, %p338
    %p340 = scmp.ne.s32.totalorder %s332, %s334
    %p341 = scmp.eq.s32.totalorder %s36, 1
    %p342 = por %p340, %p341
    %p343 = scmp.ne.s32.totalorder %s334, %s335
    %p344 = scmp.eq.s32.totalorder %s36, 0
    %p345 = por %p343, %p344
    %p346 = scmp.ne.s32.totalorder %s334, %s335
    %p347 = scmp.eq.s32.totalorder %s37, 1
    %p348 = por %p346, %p347
    %p350 = scmp.ne.s32.totalorder %s335, %s349
    %p351 = scmp.eq.s32.totalorder %s37, 0
    %p352 = por %p350, %p351
    %s354 = sadd.s32 %s353, 1
    %p357 = scmp.eq.s32.totalorder %s31, 1
    %p358 = scmp.ne.s32.totalorder %s353, %s355
    %p359 = scmp.eq.s32.totalorder %s31, 0
    %p360 = por %p358, %p359
    %p361 = scmp.ne.s32.totalorder %s353, %s355
    %p362 = scmp.eq.s32.totalorder %s36, 1
    %p363 = por %p361, %p362
    %p364 = scmp.ne.s32.totalorder %s355, %s356
    %p365 = scmp.eq.s32.totalorder %s36, 0
    %p366 = por %p364, %p365
    %p367 = scmp.ne.s32.totalorder %s355, %s356
    %p368 = scmp.eq.s32.totalorder %s37, 1
    %p369 = por %p367, %p368
    %p371 = scmp.ne.s32.totalorder %s356, %s370
    %p372 = scmp.eq.s32.totalorder %s37, 0
    %p373 = por %p371, %p372
    %s375 = sadd.s32 %s374, 1
    %p378 = scmp.eq.s32.totalorder %s31, 1
    %p379 = scmp.ne.s32.totalorder %s374, %s376
    %p380 = scmp.eq.s32.totalorder %s31, 0
    %p381 = por %p379, %p380
    %p382 = scmp.ne.s32.totalorder %s374, %s376
    %p383 = scmp.eq.s32.totalorder %s36, 1
    %p384 = por %p382, %p383
    %p385 = scmp.ne.s32.totalorder %s376, %s377
    %p386 = scmp.eq.s32.totalorder %s36, 0
    %p387 = por %p385, %p386
    %p388 = scmp.ne.s32.totalorder %s376, %s377
    %p389 = scmp.eq.s32.totalorder %s37, 1
    %p390 = por %p388, %p389
    %p392 = scmp.ne.s32.totalorder %s377, %s391
    %p393 = scmp.eq.s32.totalorder %s37, 0
    %p394 = por %p392, %p393
    %s396 = sadd.s32 %s395, 1
    %p399 = scmp.eq.s32.totalorder %s31, 1
    %p400 = scmp.ne.s32.totalorder %s395, %s397
    %p401 = scmp.eq.s32.totalorder %s31, 0
    %p402 = por %p400, %p401
    %p403 = scmp.ne.s32.totalorder %s395, %s397
    %p404 = scmp.eq.s32.totalorder %s36, 1
    %p405 = por %p403, %p404
    %p406 = scmp.ne.s32.totalorder %s397, %s398
    %p407 = scmp.eq.s32.totalorder %s36, 0
    %p408 = por %p406, %p407
    %p409 = scmp.ne.s32.totalorder %s397, %s398
    %p410 = scmp.eq.s32.totalorder %s37, 1
    %p411 = por %p409, %p410
    %p413 = scmp.ne.s32.totalorder %s398, %s412
    %p414 = scmp.eq.s32.totalorder %s37, 0
    %p415 = por %p413, %p414
    %s417 = sadd.s32 %s416, 1
    %p420 = scmp.eq.s32.totalorder %s31, 1
    %p421 = scmp.ne.s32.totalorder %s416, %s418
    %p422 = scmp.eq.s32.totalorder %s31, 0
    %p423 = por %p421, %p422
    %p424 = scmp.ne.s32.totalorder %s416, %s418
    %p425 = scmp.eq.s32.totalorder %s36, 1
    %p426 = por %p424, %p425
    %p427 = scmp.ne.s32.totalorder %s418, %s419
    %p428 = scmp.eq.s32.totalorder %s36, 0
    %p429 = por %p427, %p428
    %p430 = scmp.ne.s32.totalorder %s418, %s419
    %p431 = scmp.eq.s32.totalorder %s37, 1
    %p432 = por %p430, %p431
    %p434 = scmp.ne.s32.totalorder %s419, %s433
    %p435 = scmp.eq.s32.totalorder %s37, 0
    %p436 = por %p434, %p435
    %s438 = sadd.s32 %s437, 1
    %p441 = scmp.eq.s32.totalorder %s31, 1
    %p442 = scmp.ne.s32.totalorder %s437, %s439
    %p443 = scmp.eq.s32.totalorder %s31, 0
    %p444 = por %p442, %p443
    %p445 = scmp.ne.s32.totalorder %s437, %s439
    %p446 = scmp.eq.s32.totalorder %s36, 1
    %p447 = por %p445, %p446
    %p448 = scmp.ne.s32.totalorder %s439, %s440
    %p449 = scmp.eq.s32.totalorder %s36, 0
    %p450 = por %p448, %p449
    %p451 = scmp.ne.s32.totalorder %s439, %s440
    %p452 = scmp.eq.s32.totalorder %s37, 1
    %p453 = por %p451, %p452
    %p455 = scmp.ne.s32.totalorder %s440, %s454
    %p456 = scmp.eq.s32.totalorder %s37, 0
    %p457 = por %p455, %p456
    %s459 = sadd.s32 %s458, 1
    %p462 = scmp.eq.s32.totalorder %s31, 1
    %p463 = scmp.ne.s32.totalorder %s458, %s460
    %p464 = scmp.eq.s32.totalorder %s31, 0
    %p465 = por %p463, %p464
    %p466 = scmp.ne.s32.totalorder %s458, %s460
    %p467 = scmp.eq.s32.totalorder %s36, 1
    %p468 = por %p466, %p467
    %p469 = scmp.ne.s32.totalorder %s460, %s461
    %p470 = scmp.eq.s32.totalorder %s36, 0
    %p471 = por %p469, %p470
    %p472 = scmp.ne.s32.totalorder %s460, %s461
    %p473 = scmp.eq.s32.totalorder %s37, 1
    %p474 = por %p472, %p473
    %p476 = scmp.ne.s32.totalorder %s461, %s475
    %p477 = scmp.eq.s32.totalorder %s37, 0
    %p478 = por %p476, %p477
    %s480 = sadd.s32 %s479, 1
    %p483 = scmp.eq.s32.totalorder %s31, 1
    %p484 = scmp.ne.s32.totalorder %s479, %s481
    %p485 = scmp.eq.s32.totalorder %s31, 0
    %p486 = por %p484, %p485
    %p487 = scmp.ne.s32.totalorder %s479, %s481
    %p488 = scmp.eq.s32.totalorder %s36, 1
    %p489 = por %p487, %p488
    %p490 = scmp.ne.s32.totalorder %s481, %s482
    %p491 = scmp.eq.s32.totalorder %s36, 0
    %p492 = por %p490, %p491
    %p493 = scmp.ne.s32.totalorder %s481, %s482
    %p494 = scmp.eq.s32.totalorder %s37, 1
    %p495 = por %p493, %p494
    %p497 = scmp.ne.s32.totalorder %s482, %s496
    %p498 = scmp.eq.s32.totalorder %s37, 0
    %p499 = por %p497, %p498
    %s501 = sadd.s32 %s500, 1
    %p504 = scmp.eq.s32.totalorder %s31, 1
    %p505 = scmp.ne.s32.totalorder %s500, %s502
    %p506 = scmp.eq.s32.totalorder %s31, 0
    %p507 = por %p505, %p506
    %p508 = scmp.ne.s32.totalorder %s500, %s502
    %p509 = scmp.eq.s32.totalorder %s36, 1
    %p510 = por %p508, %p509
    %p511 = scmp.ne.s32.totalorder %s502, %s503
    %p512 = scmp.eq.s32.totalorder %s36, 0
    %p513 = por %p511, %p512
    %p514 = scmp.ne.s32.totalorder %s502, %s503
    %p515 = scmp.eq.s32.totalorder %s37, 1
    %p516 = por %p514, %p515
    %p518 = scmp.ne.s32.totalorder %s503, %s517
    %p519 = scmp.eq.s32.totalorder %s37, 0
    %p520 = por %p518, %p519
    %s522 = sadd.s32 %s521, 1
    %p525 = scmp.eq.s32.totalorder %s31, 1
    %p526 = scmp.ne.s32.totalorder %s521, %s523
    %p527 = scmp.eq.s32.totalorder %s31, 0
    %p528 = por %p526, %p527
    %p529 = scmp.ne.s32.totalorder %s521, %s523
    %p530 = scmp.eq.s32.totalorder %s36, 1
    %p531 = por %p529, %p530
    %p532 = scmp.ne.s32.totalorder %s523, %s524
    %p533 = scmp.eq.s32.totalorder %s36, 0
    %p534 = por %p532, %p533
    %p535 = scmp.ne.s32.totalorder %s523, %s524
    %p536 = scmp.eq.s32.totalorder %s37, 1
    %p537 = por %p535, %p536
    %p539 = scmp.ne.s32.totalorder %s524, %s538
    %p540 = scmp.eq.s32.totalorder %s37, 0
    %p541 = por %p539, %p540
    %s543 = sadd.s32 %s542, 1
    %p546 = scmp.eq.s32.totalorder %s31, 1
    %p547 = scmp.ne.s32.totalorder %s542, %s544
    %p548 = scmp.eq.s32.totalorder %s31, 0
    %p549 = por %p547, %p548
    %p550 = scmp.ne.s32.totalorder %s542, %s544
    %p551 = scmp.eq.s32.totalorder %s36, 1
    %p552 = por %p550, %p551
    %p553 = scmp.ne.s32.totalorder %s544, %s545
    %p554 = scmp.eq.s32.totalorder %s36, 0
    %p555 = por %p553, %p554
    %p556 = scmp.ne.s32.totalorder %s544, %s545
    %p557 = scmp.eq.s32.totalorder %s37, 1
    %p558 = por %p556, %p557
    %p560 = scmp.ne.s32.totalorder %s545, %s559
    %p561 = scmp.eq.s32.totalorder %s37, 0
    %p562 = por %p560, %p561
    %s564 = sadd.s32 %s563, 1
    %p567 = scmp.eq.s32.totalorder %s31, 1
    %p568 = scmp.ne.s32.totalorder %s563, %s565
    %p569 = scmp.eq.s32.totalorder %s31, 0
    %p570 = por %p568, %p569
    %p571 = scmp.ne.s32.totalorder %s563, %s565
    %p572 = scmp.eq.s32.totalorder %s36, 1
    %p573 = por %p571, %p572
    %p574 = scmp.ne.s32.totalorder %s565, %s566
    %p575 = scmp.eq.s32.totalorder %s36, 0
    %p576 = por %p574, %p575
    %p577 = scmp.ne.s32.totalorder %s565, %s566
    %p578 = scmp.eq.s32.totalorder %s37, 1
    %p579 = por %p577, %p578
    %p581 = scmp.ne.s32.totalorder %s566, %s580
    %p582 = scmp.eq.s32.totalorder %s37, 0
    %p583 = por %p581, %p582
    %s584 = ssub.s32 %s31, %s38
    %p585 = scmp.eq.s32.totalorder %s584, 0
    %s587 = sadd.s32 %s586, 1
    %s588 = scalar_select %p585, %s586, %s587
    %p591 = pneg %p585
    %p592 = scmp.eq.s32.totalorder %s31, 1
    %p593 = por %p591, %p592
    %p594 = scmp.ne.s32.totalorder %s586, %s589
    %p595 = scmp.eq.s32.totalorder %s31, 0
    %p596 = por %p594, %p595
    %p597 = scmp.ne.s32.totalorder %s586, %s589
    %p598 = scmp.eq.s32.totalorder %s36, 1
    %p599 = por %p597, %p598
    %p600 = scmp.ne.s32.totalorder %s589, %s590
    %p601 = scmp.eq.s32.totalorder %s36, 0
    %p602 = por %p600, %p601
    %p603 = scmp.ne.s32.totalorder %s589, %s590
    %p604 = scmp.eq.s32.totalorder %s37, 1
    %p605 = por %p603, %p604
    %p607 = scmp.ne.s32.totalorder %s590, %s606
    %p608 = scmp.eq.s32.totalorder %s37, 0
    %p609 = por %p607, %p608
    %p610 = scmp.le.s32.totalorder 1, %s31
    %p611 = scmp.lt.s32.totalorder %s31, 3
    %p612 = pnand %p610, %p611
    %p613 = pneg %p612
    // Predicated region
    $region9: #{whisper_forward.1} parent=5 // pred_check
      _
    $region10: #{whisper_forward.1} parent=5 // pred_check_branch
      %615 = sbr.rel (%p612) target = $region12
    $region11: #{whisper_forward.1} parent=5 // pred_region
      %s616 = ssub.s32 %s31, 1
      // Predicated region
      $region13: #{whisper_forward.1} parent=11 // pred_check
        %p617 = pneg %p156
      $region14: #{whisper_forward.1} parent=11 // pred_check_branch
        %619 = sbr.rel (%p617) target = $region16
      $region15: #{whisper_forward.1} parent=11 // pred_region
        _
      $region16: #{whisper_forward.1} parent=11 // pred_fallthru
        _
      // Predicated region
      $region17: #{whisper_forward.1} parent=11 // pred_check
        %p620 = pneg %p177
      $region18: #{whisper_forward.1} parent=11 // pred_check_branch
        %622 = sbr.rel (%p620) target = $region20
      $region19: #{whisper_forward.1} parent=11 // pred_region
        _
      $region20: #{whisper_forward.1} parent=11 // pred_fallthru
        _
      // Predicated region
      $region21: #{whisper_forward.1} parent=11 // pred_check
        %p623 = pneg %p198
      $region22: #{whisper_forward.1} parent=11 // pred_check_branch
        %625 = sbr.rel (%p623) target = $region24
      $region23: #{whisper_forward.1} parent=11 // pred_region
        _
      $region24: #{whisper_forward.1} parent=11 // pred_fallthru
        _
      // Predicated region
      $region25: #{whisper_forward.1} parent=11 // pred_check
        %p626 = pneg %p219
      $region26: #{whisper_forward.1} parent=11 // pred_check_branch
        %628 = sbr.rel (%p626) target = $region28
      $region27: #{whisper_forward.1} parent=11 // pred_region
        _
      $region28: #{whisper_forward.1} parent=11 // pred_fallthru
        _
      // Predicated region
      $region29: #{whisper_forward.1} parent=11 // pred_check
        %p629 = pneg %p240
      $region30: #{whisper_forward.1} parent=11 // pred_check_branch
        %631 = sbr.rel (%p629) target = $region32
      $region31: #{whisper_forward.1} parent=11 // pred_region
        _
      $region32: #{whisper_forward.1} parent=11 // pred_fallthru
        _
      // Predicated region
      $region33: #{whisper_forward.1} parent=11 // pred_check
        %p632 = pneg %p261
      $region34: #{whisper_forward.1} parent=11 // pred_check_branch
        %634 = sbr.rel (%p632) target = $region36
      $region35: #{whisper_forward.1} parent=11 // pred_region
        _
      $region36: #{whisper_forward.1} parent=11 // pred_fallthru
        _
      // Predicated region
      $region37: #{whisper_forward.1} parent=11 // pred_check
        %p635 = pneg %p282
      $region38: #{whisper_forward.1} parent=11 // pred_check_branch
        %637 = sbr.rel (%p635) target = $region40
      $region39: #{whisper_forward.1} parent=11 // pred_region
        _
      $region40: #{whisper_forward.1} parent=11 // pred_fallthru
        _
      // Predicated region
      $region41: #{whisper_forward.1} parent=11 // pred_check
        %p638 = pneg %p303
      $region42: #{whisper_forward.1} parent=11 // pred_check_branch
        %640 = sbr.rel (%p638) target = $region44
      $region43: #{whisper_forward.1} parent=11 // pred_region
        _
      $region44: #{whisper_forward.1} parent=11 // pred_fallthru
        _
      // Predicated region
      $region45: #{whisper_forward.1} parent=11 // pred_check
        %p641 = pneg %p324
      $region46: #{whisper_forward.1} parent=11 // pred_check_branch
        %643 = sbr.rel (%p641) target = $region48
      $region47: #{whisper_forward.1} parent=11 // pred_region
        _
      $region48: #{whisper_forward.1} parent=11 // pred_fallthru
        _
      // Predicated region
      $region49: #{whisper_forward.1} parent=11 // pred_check
        %p644 = pneg %p345
      $region50: #{whisper_forward.1} parent=11 // pred_check_branch
        %646 = sbr.rel (%p644) target = $region52
      $region51: #{whisper_forward.1} parent=11 // pred_region
        _
      $region52: #{whisper_forward.1} parent=11 // pred_fallthru
        _
      // Predicated region
      $region53: #{whisper_forward.1} parent=11 // pred_check
        %p647 = pneg %p366
      $region54: #{whisper_forward.1} parent=11 // pred_check_branch
        %649 = sbr.rel (%p647) target = $region56
      $region55: #{whisper_forward.1} parent=11 // pred_region
        _
      $region56: #{whisper_forward.1} parent=11 // pred_fallthru
        _
      // Predicated region
      $region57: #{whisper_forward.1} parent=11 // pred_check
        %p650 = pneg %p387
      $region58: #{whisper_forward.1} parent=11 // pred_check_branch
        %652 = sbr.rel (%p650) target = $region60
      $region59: #{whisper_forward.1} parent=11 // pred_region
        _
      $region60: #{whisper_forward.1} parent=11 // pred_fallthru
        _
      // Predicated region
      $region61: #{whisper_forward.1} parent=11 // pred_check
        %p653 = pneg %p408
      $region62: #{whisper_forward.1} parent=11 // pred_check_branch
        %655 = sbr.rel (%p653) target = $region64
      $region63: #{whisper_forward.1} parent=11 // pred_region
        _
      $region64: #{whisper_forward.1} parent=11 // pred_fallthru
        _
      // Predicated region
      $region65: #{whisper_forward.1} parent=11 // pred_check
        %p656 = pneg %p429
      $region66: #{whisper_forward.1} parent=11 // pred_check_branch
        %658 = sbr.rel (%p656) target = $region68
      $region67: #{whisper_forward.1} parent=11 // pred_region
        _
      $region68: #{whisper_forward.1} parent=11 // pred_fallthru
        _
      // Predicated region
      $region69: #{whisper_forward.1} parent=11 // pred_check
        %p659 = pneg %p450
      $region70: #{whisper_forward.1} parent=11 // pred_check_branch
        %661 = sbr.rel (%p659) target = $region72
      $region71: #{whisper_forward.1} parent=11 // pred_region
        _
      $region72: #{whisper_forward.1} parent=11 // pred_fallthru
        _
      // Predicated region
      $region73: #{whisper_forward.1} parent=11 // pred_check
        %p662 = pneg %p471
      $region74: #{whisper_forward.1} parent=11 // pred_check_branch
        %664 = sbr.rel (%p662) target = $region76
      $region75: #{whisper_forward.1} parent=11 // pred_region
        _
      $region76: #{whisper_forward.1} parent=11 // pred_fallthru
        _
      // Predicated region
      $region77: #{whisper_forward.1} parent=11 // pred_check
        %p665 = pneg %p492
      $region78: #{whisper_forward.1} parent=11 // pred_check_branch
        %667 = sbr.rel (%p665) target = $region80
      $region79: #{whisper_forward.1} parent=11 // pred_region
        _
      $region80: #{whisper_forward.1} parent=11 // pred_fallthru
        _
      // Predicated region
      $region81: #{whisper_forward.1} parent=11 // pred_check
        %p668 = pneg %p513
      $region82: #{whisper_forward.1} parent=11 // pred_check_branch
        %670 = sbr.rel (%p668) target = $region84
      $region83: #{whisper_forward.1} parent=11 // pred_region
        _
      $region84: #{whisper_forward.1} parent=11 // pred_fallthru
        _
      // Predicated region
      $region85: #{whisper_forward.1} parent=11 // pred_check
        %p671 = pneg %p534
      $region86: #{whisper_forward.1} parent=11 // pred_check_branch
        %673 = sbr.rel (%p671) target = $region88
      $region87: #{whisper_forward.1} parent=11 // pred_region
        _
      $region88: #{whisper_forward.1} parent=11 // pred_fallthru
        _
      // Predicated region
      $region89: #{whisper_forward.1} parent=11 // pred_check
        %p674 = pneg %p555
      $region90: #{whisper_forward.1} parent=11 // pred_check_branch
        %676 = sbr.rel (%p674) target = $region92
      $region91: #{whisper_forward.1} parent=11 // pred_region
        _
      $region92: #{whisper_forward.1} parent=11 // pred_fallthru
        _
      // Predicated region
      $region93: #{whisper_forward.1} parent=11 // pred_check
        %p677 = pneg %p576
      $region94: #{whisper_forward.1} parent=11 // pred_check_branch
        %679 = sbr.rel (%p677) target = $region96
      $region95: #{whisper_forward.1} parent=11 // pred_region
        _
      $region96: #{whisper_forward.1} parent=11 // pred_fallthru
        _
    $region12: #{whisper_forward.1} parent=5 // pred_fallthru
      _
    %p680 = scmp.lt.s32.totalorder %s31, 2
    // Predicated region
    $region97: #{whisper_forward.1} parent=5 // pred_check
      %p681 = pneg %p680
    $region98: #{whisper_forward.1} parent=5 // pred_check_branch
      %683 = sbr.rel (%p681) target = $region100
    $region99: #{whisper_forward.1} parent=5 // pred_region
      // Predicated region
      $region101: #{whisper_forward.1} parent=99 // pred_check
        %p684 = pneg %p51
      $region102: #{whisper_forward.1} parent=99 // pred_check_branch
        %686 = sbr.rel (%p684) target = $region104
      $region103: #{whisper_forward.1} parent=99 // pred_region
        %p687 = scmp.lt.s32.totalorder %s31, 1
        %s688 = scalar_select %p687, %s31, 1
        %s689 = smul.addr %s688, 2
        %s690 = smul.addr %s689, 8
        %s691 = scalar_lea.vmem %s0, %s690
      $region104: #{whisper_forward.1} parent=99 // pred_fallthru
        _
      // Predicated region
      $region105: #{whisper_forward.1} parent=99 // pred_check
        %p692 = pneg %p77
      $region106: #{whisper_forward.1} parent=99 // pred_check_branch
        %694 = sbr.rel (%p692) target = $region108
      $region107: #{whisper_forward.1} parent=99 // pred_region
        %p695 = scmp.lt.s32.totalorder %s31, 1
        %s696 = scalar_select %p695, %s31, 1
        %s697 = smul.addr %s696, 2
        %s698 = smul.addr %s697, 8
        %s699 = scalar_lea.vmem %s1, %s698
      $region108: #{whisper_forward.1} parent=99 // pred_fallthru
        _
      // Predicated region
      $region109: #{whisper_forward.1} parent=99 // pred_check
        %p700 = pneg %p103
      $region110: #{whisper_forward.1} parent=99 // pred_check_branch
        %702 = sbr.rel (%p700) target = $region112
      $region111: #{whisper_forward.1} parent=99 // pred_region
        %p703 = scmp.lt.s32.totalorder %s31, 1
        %s704 = scalar_select %p703, %s31, 1
        %s705 = smul.addr %s704, 2
        %s706 = smul.addr %s705, 8
        %s707 = scalar_lea.vmem %s2, %s706
      $region112: #{whisper_forward.1} parent=99 // pred_fallthru
        _
      // Predicated region
      $region113: #{whisper_forward.1} parent=99 // pred_check
        %p708 = pneg %p129
      $region114: #{whisper_forward.1} parent=99 // pred_check_branch
        %710 = sbr.rel (%p708) target = $region116
      $region115: #{whisper_forward.1} parent=99 // pred_region
        %p711 = scmp.lt.s32.totalorder %s31, 1
        %s712 = scalar_select %p711, %s31, 1
        %s713 = smul.addr %s712, 2
        %s714 = smul.addr %s713, 8
        %s715 = scalar_lea.vmem %s3, %s714
      $region116: #{whisper_forward.1} parent=99 // pred_fallthru
        _
    $region100: #{whisper_forward.1} parent=5 // pred_fallthru
      _
    %p716 = scmp.le.s32.totalorder 1, %s31
    %p717 = scmp.lt.s32.totalorder %s31, 3
    %p718 = pnand %p716, %p717
    %p719 = pneg %p718
    // Predicated region
    $region117: #{whisper_forward.1} parent=5 // pred_check
      _
    $region118: #{whisper_forward.1} parent=5 // pred_check_branch
      %721 = sbr.rel (%p718) target = $region120
    $region119: #{whisper_forward.1} parent=5 // pred_region
      %s722 = ssub.s32 %s31, 1
      %p723 = scmp.lt.s32.totalorder %s36, 1
      %s724 = scalar_select %p723, %s36, 1
      %s725 = smul.addr %s724, 2
      %s726 = smul.addr %s725, 8
      %s727 = scalar_lea.vmem %s0, %s726
      %p728 = pneg %p57
      %p729 = pneg %p54
      %p730 = scmp.lt.s32.totalorder %s36, 1
      %s731 = scalar_select %p730, %s36, 1
      %s732 = smul.addr %s731, 2
      %s733 = smul.addr %s732, 8
      %s734 = scalar_lea.vmem %s1, %s733
      %p735 = pneg %p83
      %p736 = pneg %p80
      %p737 = scmp.lt.s32.totalorder %s36, 1
      %s738 = scalar_select %p737, %s36, 1
      %s739 = smul.addr %s738, 2
      %s740 = smul.addr %s739, 8
      %s741 = scalar_lea.vmem %s2, %s740
      %p742 = pneg %p109
      %p743 = pneg %p106
      %p744 = scmp.lt.s32.totalorder %s36, 1
      %s745 = scalar_select %p744, %s36, 1
      %s746 = smul.addr %s745, 2
      %s747 = smul.addr %s746, 8
      %s748 = scalar_lea.vmem %s3, %s747
      %p749 = pneg %p135
      %p750 = pneg %p132
      %p751 = pneg %p156
      %p752 = pneg %p153
      %p753 = pneg %p177
      %p754 = pneg %p174
      %p755 = pneg %p198
      %p756 = pneg %p195
      %p757 = pneg %p219
      %p758 = pneg %p216
      %p759 = pneg %p240
      %p760 = pneg %p237
      %p761 = pneg %p261
      %p762 = pneg %p258
      %p763 = pneg %p282
      %p764 = pneg %p279
      %p765 = pneg %p303
      %p766 = pneg %p300
      %p767 = pneg %p324
      %p768 = pneg %p321
      %p769 = pneg %p345
      %p770 = pneg %p342
      %p771 = pneg %p366
      %p772 = pneg %p363
      %p773 = pneg %p387
      %p774 = pneg %p384
      %p775 = pneg %p408
      %p776 = pneg %p405
      %p777 = pneg %p429
      %p778 = pneg %p426
      %p779 = pneg %p450
      %p780 = pneg %p447
      %p781 = pneg %p471
      %p782 = pneg %p468
      %p783 = pneg %p492
      %p784 = pneg %p489
      %p785 = pneg %p513
      %p786 = pneg %p510
      %p787 = pneg %p534
      %p788 = pneg %p531
      %p789 = pneg %p555
      %p790 = pneg %p552
      %p791 = pneg %p576
      %p792 = pneg %p573
      %p793 = pneg %p602
      %p794 = pneg %p599
      %p795 = scmp.lt.s32.totalorder %s36, 1
      %s796 = scalar_select %p795, %s36, 1
      %s797 = smul.addr %s796, 2
      %s798 = smul.addr %s797, 8
      %s799 = scalar_lea.vmem %s25, %s798
      %p800 = scmp.lt.s32.totalorder %s36, 1
      %s801 = scalar_select %p800, %s36, 1
      %s802 = smul.addr %s801, 2
      %s803 = smul.addr %s802, 8
      %s804 = scalar_lea.vmem %s0, %s803
      %p805 = scmp.lt.s32.totalorder %s36, 1
      %s806 = scalar_select %p805, %s36, 1
      %s807 = smul.addr %s806, 2
      %s808 = smul.addr %s807, 8
      %s809 = scalar_lea.vmem %s1, %s808
      %p810 = scmp.lt.s32.totalorder %s36, 1
      %s811 = scalar_select %p810, %s36, 1
      %s812 = smul.addr %s811, 2
      %s813 = smul.addr %s812, 8
      %s814 = scalar_lea.vmem %s2, %s813
      %p815 = scmp.lt.s32.totalorder %s36, 1
      %s816 = scalar_select %p815, %s36, 1
      %s817 = smul.addr %s816, 2
      %s818 = smul.addr %s817, 8
      %s819 = scalar_lea.vmem %s3, %s818
      %p820 = scmp.lt.s32.totalorder %s36, 1
      %s821 = scalar_select %p820, %s36, 1
      %s822 = smul.addr %s821, 2
      %s823 = smul.addr %s822, 8
      %s824 = scalar_lea.vmem %s25, %s823
      %v826 = vld [vmem:[%s804] sm:$0xff]
      %v827 = vld [vmem:[%s804 + $0x8] sm:$0xff]
      %v828 = vpack.c.bf16 %v827, %v826
      %v829 = vld [vmem:[%s809] sm:$0xff]
      %v830 = vld [vmem:[%s809 + $0x8] sm:$0xff]
      %v831 = vpack.c.bf16 %v830, %v829
      %v832 = vld [vmem:[%s814] sm:$0xff]
      %v833 = vld [vmem:[%s814 + $0x8] sm:$0xff]
      %v834 = vpack.c.bf16 %v833, %v832
      %v835 = vld [vmem:[%s819] sm:$0xff]
      %v836 = vld [vmem:[%s819 + $0x8] sm:$0xff]
      %v837 = vpack.c.bf16 %v836, %v835
      %v838 = vld [vmem:[%s4] sm:$0xf]
      %v839 = vld [vmem:[%s4 + $0x4] sm:$0xf]
      %s840 = scalar_lea.vmem %s4, 8
      %v841 = vld [vmem:[%s840] sm:$0xf]
      %v842 = vld [vmem:[%s840 + $0x4] sm:$0xf]
      %s843 = scalar_lea.vmem %s4, 16
      %v844 = vld [vmem:[%s843] sm:$0xf]
      %v845 = vld [vmem:[%s843 + $0x4] sm:$0xf]
      %v846 = vld [vmem:[%s5] sm:$0x1]
      %v849 = vunpack.c.l.b16 %v841
      %v850 = vunpack.c.l.b16 %v842
      %v851 = vpack.c.b16 %v850, %v849
      %vm853 = vcmask 130048
      %v855 = vsel %vm853, %v834, 0
      %857 = vmatprep.subr.bf16.mxu0 0
      %858 = vmatpush1.bf16.msra.mxu0 %v851
      %859 = vmatprep.subr.bf16.mxu0 0
      %860 = vmatpush1.bf16.msra.mxu0 0
      %861 = vmatprep.subr.bf16.mxu0 0
      %862 = vmatpush1.bf16.msra.mxu0 0
      %863 = vmatprep.subr.bf16.mxu0 0
      %864 = vmatpush1.bf16.msra.mxu0 0
      %865 = vmatprep.subr.bf16.mxu0 0
      %866 = vmatpush1.bf16.msra.mxu0 0
      %867 = vmatprep.subr.bf16.mxu0 0
      %868 = vmatpush1.bf16.msra.mxu0 0
      %869 = vmatprep.subr.bf16.mxu0 0
      %870 = vmatpush1.bf16.msra.mxu0 0
      %871 = vmatprep.subr.bf16.mxu0 0
      %872 = vmatpush1.bf16.msra.mxu0 0
      %873 = vmatprep.subr.bf16.mxu0 0
      %874 = vmatpush1.bf16.msra.mxu0 0
      %875 = vmatprep.subr.bf16.mxu0 0
      %876 = vmatpush1.bf16.msra.mxu0 0
      %877 = vmatprep.subr.bf16.mxu0 0
      %878 = vmatpush1.bf16.msra.mxu0 0
      %879 = vmatprep.subr.bf16.mxu0 0
      %880 = vmatpush1.bf16.msra.mxu0 0
      %881 = vmatprep.subr.bf16.mxu0 0
      %882 = vmatpush1.bf16.msra.mxu0 0
      %883 = vmatprep.subr.bf16.mxu0 0
      %884 = vmatpush1.bf16.msra.mxu0 0
      %885 = vmatprep.subr.bf16.mxu0 0
      %886 = vmatpush1.bf16.msra.mxu0 0
      %887 = vmatprep.subr.bf16.mxu0 0
      %888 = vmatpush1.bf16.msra.mxu0 0
      %889 = vmatprep.mubr.bf16.mxu0 0
      %890 = vmatmul.mubr.bf16.gmra.mrb[0].mxu0 %v855
      %v891 = vpop.f32.mrb[0].mxu0
      %v892 = vadd.f32 0.0, %v891
      %v893 = vpop.f32.mrb[0].mxu0
      %v894 = vpop.f32.mrb[0].mxu0
      %v895 = vadd.f32 0.0, %v894
      %v896 = vpop.f32.mrb[0].mxu0
      %897 = vdwg.mxu0
      %v900 = vunpack.c.l.b16 %v838
      %v901 = vunpack.c.l.b16 %v839
      %v902 = vpack.c.b16 %v901, %v900
      %v905 = vsel %vm853, %v828, 0
      %907 = vmatprep.subr.bf16.mxu0 0
      %908 = vmatpush1.bf16.msra.mxu0 %v902
      %909 = vmatprep.subr.bf16.mxu0 0
      %910 = vmatpush1.bf16.msra.mxu0 0
      %911 = vmatprep.subr.bf16.mxu0 0
      %912 = vmatpush1.bf16.msra.mxu0 0
      %913 = vmatprep.subr.bf16.mxu0 0
      %914 = vmatpush1.bf16.msra.mxu0 0
      %915 = vmatprep.subr.bf16.mxu0 0
      %916 = vmatpush1.bf16.msra.mxu0 0
      %917 = vmatprep.subr.bf16.mxu0 0
      %918 = vmatpush1.bf16.msra.mxu0 0
      %919 = vmatprep.subr.bf16.mxu0 0
      %920 = vmatpush1.bf16.msra.mxu0 0
      %921 = vmatprep.subr.bf16.mxu0 0
      %922 = vmatpush1.bf16.msra.mxu0 0
      %923 = vmatprep.subr.bf16.mxu0 0
      %924 = vmatpush1.bf16.msra.mxu0 0
      %925 = vmatprep.subr.bf16.mxu0 0
      %926 = vmatpush1.bf16.msra.mxu0 0
      %927 = vmatprep.subr.bf16.mxu0 0
      %928 = vmatpush1.bf16.msra.mxu0 0
      %929 = vmatprep.subr.bf16.mxu0 0
      %930 = vmatpush1.bf16.msra.mxu0 0
      %931 = vmatprep.subr.bf16.mxu0 0
      %932 = vmatpush1.bf16.msra.mxu0 0
      %933 = vmatprep.subr.bf16.mxu0 0
      %934 = vmatpush1.bf16.msra.mxu0 0
      %935 = vmatprep.subr.bf16.mxu0 0
      %936 = vmatpush1.bf16.msra.mxu0 0
      %937 = vmatprep.subr.bf16.mxu0 0
      %938 = vmatpush1.bf16.msra.mxu0 0
      %939 = vmatprep.mubr.bf16.mxu0 0
      %940 = vmatmul.mubr.bf16.gmra.mrb[0].mxu0 %v905
      %v941 = vpop.f32.mrb[0].mxu0
      %v942 = vadd.f32 %v892, %v941
      %v943 = vpop.f32.mrb[0].mxu0
      %v944 = vpop.f32.mrb[0].mxu0
      %v945 = vadd.f32 %v895, %v944
      %v946 = vpop.f32.mrb[0].mxu0
      %947 = vdwg.mxu0
      %v950 = vunpack.c.l.b16 %v844
      %v951 = vunpack.c.l.b16 %v845
      %v952 = vpack.c.b16 %v951, %v950
      %v955 = vsel %vm853, %v831, 0
      %957 = vmatprep.subr.bf16.mxu0 0
      %958 = vmatpush1.bf16.msra.mxu0 %v952
      %959 = vmatprep.subr.bf16.mxu0 0
      %960 = vmatpush1.bf16.msra.mxu0 0
      %961 = vmatprep.subr.bf16.mxu0 0
      %962 = vmatpush1.bf16.msra.mxu0 0
      %963 = vmatprep.subr.bf16.mxu0 0
      %964 = vmatpush1.bf16.msra.mxu0 0
      %965 = vmatprep.subr.bf16.mxu0 0
      %966 = vmatpush1.bf16.msra.mxu0 0
      %967 = vmatprep.subr.bf16.mxu0 0
      %968 = vmatpush1.bf16.msra.mxu0 0
      %969 = vmatprep.subr.bf16.mxu0 0
      %970 = vmatpush1.bf16.msra.mxu0 0
      %971 = vmatprep.subr.bf16.mxu0 0
      %972 = vmatpush1.bf16.msra.mxu0 0
      %973 = vmatprep.subr.bf16.mxu0 0
      %974 = vmatpush1.bf16.msra.mxu0 0
      %975 = vmatprep.subr.bf16.mxu0 0
      %976 = vmatpush1.bf16.msra.mxu0 0
      %977 = vmatprep.subr.bf16.mxu0 0
      %978 = vmatpush1.bf16.msra.mxu0 0
      %979 = vmatprep.subr.bf16.mxu0 0
      %980 = vmatpush1.bf16.msra.mxu0 0
      %981 = vmatprep.subr.bf16.mxu0 0
      %982 = vmatpush1.bf16.msra.mxu0 0
      %983 = vmatprep.subr.bf16.mxu0 0
      %984 = vmatpush1.bf16.msra.mxu0 0
      %985 = vmatprep.subr.bf16.mxu0 0
      %986 = vmatpush1.bf16.msra.mxu0 0
      %987 = vmatprep.subr.bf16.mxu0 0
      %988 = vmatpush1.bf16.msra.mxu0 0
      %989 = vmatprep.mubr.bf16.mxu0 0
      %990 = vmatmul.mubr.bf16.gmra.mrb[0].mxu0 %v955
      %v991 = vpop.f32.mrb[0].mxu0
      %v992 = vadd.f32 0.0, %v991
      %v993 = vpop.f32.mrb[0].mxu0
      %v994 = vpop.f32.mrb[0].mxu0
      %v995 = vadd.f32 0.0, %v994
      %v996 = vpop.f32.mrb[0].mxu0
      %997 = vdwg.mxu0
      %v998 = vadd.f32 %v942, %v992
      %v999 = vadd.f32 %v945, %v995
      %v1001 = vlaneseq
      %v1002 = vshrl.u32 %v1001, 7
      %v1003 = vsub.s32 0, %v1002
      %v1004 = vrot.slane %v846, %v1003
      %v1006 = vadd.f32 %v998, %v1004
      %v1007 = vadd.f32 %v999, %v1004
      %1008 = vmatprep.subr.bf16.mxu0 0
      %1009 = vmatpush1.bf16.msra.mxu0 %v851
      %1010 = vmatprep.subr.bf16.mxu0 0
      %1011 = vmatpush1.bf16.msra.mxu0 0
      %1012 = vmatprep.subr.bf16.mxu0 0
      %1013 = vmatpush1.bf16.msra.mxu0 0
      %1014 = vmatprep.subr.bf16.mxu0 0
      %1015 = vmatpush1.bf16.msra.mxu0 0
      %1016 = vmatprep.subr.bf16.mxu0 0
      %1017 = vmatpush1.bf16.msra.mxu0 0
      %1018 = vmatprep.subr.bf16.mxu0 0
      %1019 = vmatpush1.bf16.msra.mxu0 0
      %1020 = vmatprep.subr.bf16.mxu0 0
      %1021 = vmatpush1.bf16.msra.mxu0 0
      %1022 = vmatprep.subr.bf16.mxu0 0
      %1023 = vmatpush1.bf16.msra.mxu0 0
      %1024 = vmatprep.subr.bf16.mxu0 0
      %1025 = vmatpush1.bf16.msra.mxu0 0
      %1026 = vmatprep.subr.bf16.mxu0 0
      %1027 = vmatpush1.bf16.msra.mxu0 0
      %1028 = vmatprep.subr.bf16.mxu0 0
      %1029 = vmatpush1.bf16.msra.mxu0 0
      %1030 = vmatprep.subr.bf16.mxu0 0
      %1031 = vmatpush1.bf16.msra.mxu0 0
      %1032 = vmatprep.subr.bf16.mxu0 0
      %1033 = vmatpush1.bf16.msra.mxu0 0
      %1034 = vmatprep.subr.bf16.mxu0 0
      %1035 = vmatpush1.bf16.msra.mxu0 0
      %1036 = vmatprep.subr.bf16.mxu0 0
      %1037 = vmatpush1.bf16.msra.mxu0 0
      %1038 = vmatprep.subr.bf16.mxu0 0
      %1039 = vmatpush1.bf16.msra.mxu0 0
      %1040 = vmatprep.mubr.bf16.mxu0 0
      %1041 = vmatmul.mubr.bf16.gmra.mrb[0].mxu0 %v955
      %v1042 = vpop.f32.mrb[0].mxu0
      %v1043 = vadd.f32 0.0, %v1042
      %v1044 = vpop.f32.mrb[0].mxu0
      %v1045 = vpop.f32.mrb[0].mxu0
      %v1046 = vadd.f32 0.0, %v1045
      %v1047 = vpop.f32.mrb[0].mxu0
      %1048 = vdwg.mxu0
      %1049 = vmatprep.subr.bf16.mxu0 0
      %1050 = vmatpush1.bf16.msra.mxu0 %v902
      %1051 = vmatprep.subr.bf16.mxu0 0
      %1052 = vmatpush1.bf16.msra.mxu0 0
      %1053 = vmatprep.subr.bf16.mxu0 0
      %1054 = vmatpush1.bf16.msra.mxu0 0
      %1055 = vmatprep.subr.bf16.mxu0 0
      %1056 = vmatpush1.bf16.msra.mxu0 0
      %1057 = vmatprep.subr.bf16.mxu0 0
      %1058 = vmatpush1.bf16.msra.mxu0 0
      %1059 = vmatprep.subr.bf16.mxu0 0
      %1060 = vmatpush1.bf16.msra.mxu0 0
      %1061 = vmatprep.subr.bf16.mxu0 0
      %1062 = vmatpush1.bf16.msra.mxu0 0
      %1063 = vmatprep.subr.bf16.mxu0 0
      %1064 = vmatpush1.bf16.msra.mxu0 0
      %1065 = vmatprep.subr.bf16.mxu0 0
      %1066 = vmatpush1.bf16.msra.mxu0 0
      %1067 = vmatprep.subr.bf16.mxu0 0
      %1068 = vmatpush1.bf16.msra.mxu0 0
      %1069 = vmatprep.subr.bf16.mxu0 0
      %1070 = vmatpush1.bf16.msra.mxu0 0
      %1071 = vmatprep.subr.bf16.mxu0 0
      %1072 = vmatpush1.bf16.msra.mxu0 0
      %1073 = vmatprep.subr.bf16.mxu0 0
      %1074 = vmatpush1.bf16.msra.mxu0 0
      %1075 = vmatprep.subr.bf16.mxu0 0
      %1076 = vmatpush1.bf16.msra.mxu0 0
      %1077 = vmatprep.subr.bf16.mxu0 0
      %1078 = vmatpush1.bf16.msra.mxu0 0
      %1079 = vmatprep.subr.bf16.mxu0 0
      %1080 = vmatpush1.bf16.msra.mxu0 0
      %1081 = vmatprep.mubr.bf16.mxu0 0
      %1082 = vmatmul.mubr.bf16.gmra.mrb[0].mxu0 %v855
      %v1083 = vpop.f32.mrb[0].mxu0
      %v1084 = vadd.f32 %v1043, %v1083
      %v1085 = vpop.f32.mrb[0].mxu0
      %v1086 = vpop.f32.mrb[0].mxu0
      %v1087 = vadd.f32 %v1046, %v1086
      %v1088 = vpop.f32.mrb[0].mxu0
      %1089 = vdwg.mxu0
      %v1091 = vsel %vm853, %v837, 0
      %1093 = vmatprep.subr.bf16.mxu0 0
      %1094 = vmatpush1.bf16.msra.mxu0 %v952
      %1095 = vmatprep.subr.bf16.mxu0 0
      %1096 = vmatpush1.bf16.msra.mxu0 0
      %1097 = vmatprep.subr.bf16.mxu0 0
      %1098 = vmatpush1.bf16.msra.mxu0 0
      %1099 = vmatprep.subr.bf16.mxu0 0
      %1100 = vmatpush1.bf16.msra.mxu0 0
      %1101 = vmatprep.subr.bf16.mxu0 0
      %1102 = vmatpush1.bf16.msra.mxu0 0
      %1103 = vmatprep.subr.bf16.mxu0 0
      %1104 = vmatpush1.bf16.msra.mxu0 0
      %1105 = vmatprep.subr.bf16.mxu0 0
      %1106 = vmatpush1.bf16.msra.mxu0 0
      %1107 = vmatprep.subr.bf16.mxu0 0
      %1108 = vmatpush1.bf16.msra.mxu0 0
      %1109 = vmatprep.subr.bf16.mxu0 0
      %1110 = vmatpush1.bf16.msra.mxu0 0
      %1111 = vmatprep.subr.bf16.mxu0 0
      %1112 = vmatpush1.bf16.msra.mxu0 0
      %1113 = vmatprep.subr.bf16.mxu0 0
      %1114 = vmatpush1.bf16.msra.mxu0 0
      %1115 = vmatprep.subr.bf16.mxu0 0
      %1116 = vmatpush1.bf16.msra.mxu0 0
      %1117 = vmatprep.subr.bf16.mxu0 0
      %1118 = vmatpush1.bf16.msra.mxu0 0
      %1119 = vmatprep.subr.bf16.mxu0 0
      %1120 = vmatpush1.bf16.msra.mxu0 0
      %1121 = vmatprep.subr.bf16.mxu0 0
      %1122 = vmatpush1.bf16.msra.mxu0 0
      %1123 = vmatprep.subr.bf16.mxu0 0
      %1124 = vmatpush1.bf16.msra.mxu0 0
      %1125 = vmatprep.mubr.bf16.mxu0 0
      %1126 = vmatmul.mubr.bf16.gmra.mrb[0].mxu0 %v1091
      %v1127 = vpop.f32.mrb[0].mxu0
      %v1128 = vadd.f32 0.0, %v1127
      %v1129 = vpop.f32.mrb[0].mxu0
      %v1130 = vpop.f32.mrb[0].mxu0
      %v1131 = vadd.f32 0.0, %v1130
      %v1132 = vpop.f32.mrb[0].mxu0
      %1133 = vdwg.mxu0
      %v1134 = vadd.f32 %v1084, %v1128
      %v1135 = vadd.f32 %v1087, %v1131
      %v1136 = vadd.f32 %v1134, %v1004
      %v1137 = vadd.f32 %v1135, %v1004
      %v1138 = vmul.f32 %v1006, 0.5
      %v1139 = vmul.f32 %v1007, 0.5
      %v1140 = vmul.f32 %v1006, 0.044715
      %v1141 = vmul.f32 %v1007, 0.044715
      %v1142 = vmul.f32 %v1140, %v1006
      %v1143 = vmul.f32 %v1141, %v1007
      %v1144 = vmul.f32 %v1142, %v1006
      %v1145 = vmul.f32 %v1143, %v1007
      %v1146 = vadd.f32 %v1006, %v1144
      %v1147 = vadd.f32 %v1007, %v1145
      %v1148 = vmul.f32 %v1146, 0.7978846
      %v1149 = vmul.f32 %v1147, 0.7978846
      %v1150 = vtanh.pop %v1148
      %v1151 = vtanh.pop %v1149
      %v1152 = vadd.f32 %v1150, 1.0
      %v1153 = vadd.f32 %v1151, 1.0
      %v1154 = vmul.f32 %v1138, %v1152
      %v1155 = vmul.f32 %v1139, %v1153
      %v1156 = vmul.f32 %v1136, 0.5
      %v1157 = vmul.f32 %v1137, 0.5
      %v1158 = vmul.f32 %v1136, 0.044715
      %v1159 = vmul.f32 %v1137, 0.044715
      %v1160 = vmul.f32 %v1158, %v1136
      %v1161 = vmul.f32 %v1159, %v1137
      %v1162 = vmul.f32 %v1160, %v1136
      %v1163 = vmul.f32 %v1161, %v1137
      %v1164 = vadd.f32 %v1136, %v1162
      %v1165 = vadd.f32 %v1137, %v1163
      %v1166 = vmul.f32 %v1164, 0.7978846
      %v1167 = vmul.f32 %v1165, 0.7978846
      %v1168 = vtanh.pop %v1166
      %v1169 = vtanh.pop %v1167
      %v1170 = vadd.f32 %v1168, 1.0
      %v1171 = vadd.f32 %v1169, 1.0
      %v1172 = vmul.f32 %v1156, %v1170
      %v1173 = vmul.f32 %v1157, %v1171
      %v1174 = vlaneseq
      %v1175 = vshrl.u32 %v1174, 7
      %v1176 = vadd.s32 %v1175, 8
      %vm1177 = vcmp.eq.s32.totalorder %v1175, 0
      %vm1178 = vcmp.eq.s32.totalorder %v1176, 0
      %v1179 = vrot.slane %v1172, 7
      %v1180 = vrot.slane %v1173, 7
      %vm1181 = vcmp.lt.s32.totalorder %v1175, 1
      %v1182 = vsel %vm1181, %v1179, %v1180
      %v1183 = vsel %vm1181, %v1180, %v1179
      %v1184 = vsel %vm1177, 0.0, %v1183
      %v1185 = vsel %vm1178, 0.0, %v1182
      %v1186 = vld [vmem:[%s6] sm:$0xf]
      %v1187 = vld [vmem:[%s6 + $0x4] sm:$0xf]
      %v1188 = vld [vmem:[%s6 + $0x8] sm:$0xf]
      %v1189 = vld [vmem:[%s6 + $0xc] sm:$0xf]
      %s1190 = scalar_lea.vmem %s6, 16
      %v1191 = vld [vmem:[%s1190] sm:$0xf]
      %v1192 = vld [vmem:[%s1190 + $0x4] sm:$0xf]
      %v1193 = vld [vmem:[%s1190 + $0x8] sm:$0xf]
      %v1194 = vld [vmem:[%s1190 + $0xc] sm:$0xf]
      %s1195 = scalar_lea.vmem %s6, 32
      %v1196 = vld [vmem:[%s1195] sm:$0xf]
      %v1197 = vld [vmem:[%s1195 + $0x4] sm:$0xf]
      %v1198 = vld [vmem:[%s1195 + $0x8] sm:$0xf]
      %v1199 = vld [vmem:[%s1195 + $0xc] sm:$0xf]
      %v1200 = vld [vmem:[%s7] sm:$0x1]
      %v1201 = vpack.c.bf16 %v1185, %v1184
      %v1202 = vpack.c.bf16 %v1155, %v1154
      %v1207 = vunpack.c.l.b16 %v1191
      %v1208 = vunpack.c.l.b16 %v1192
      %v1209 = vunpack.c.l.b16 %v1193
      %v1210 = vunpack.c.l.b16 %v1194
      %v1211 = vpack.c.b16 %v1208, %v1207
      %v1212 = vpack.c.b16 %v1210, %v1209
      %vm1215 = vcmask 261120
      %v1217 = vsel %vm1215, %v1202, 0
      %1219 = vmatprep.subr.bf16.mxu0 0
      %1220 = vmatpush1.bf16.msra.mxu0 %v1211
      %1221 = vmatprep.subr.bf16.mxu0 0
      %1222 = vmatpush1.bf16.msra.mxu0 %v1212
      %1223 = vmatprep.subr.bf16.mxu0 0
      %1224 = vmatpush1.bf16.msra.mxu0 0
      %1225 = vmatprep.subr.bf16.mxu0 0
      %1226 = vmatpush1.bf16.msra.mxu0 0
      %1227 = vmatprep.subr.bf16.mxu0 0
      %1228 = vmatpush1.bf16.msra.mxu0 0
      %1229 = vmatprep.subr.bf16.mxu0 0
      %1230 = vmatpush1.bf16.msra.mxu0 0
      %1231 = vmatprep.subr.bf16.mxu0 0
      %1232 = vmatpush1.bf16.msra.mxu0 0
      %1233 = vmatprep.subr.bf16.mxu0 0
      %1234 = vmatpush1.bf16.msra.mxu0 0
      %1235 = vmatprep.subr.bf16.mxu0 0
      %1236 = vmatpush1.bf16.msra.mxu0 0
      %1237 = vmatprep.subr.bf16.mxu0 0
      %1238 = vmatpush1.bf16.msra.mxu0 0
      %1239 = vmatprep.subr.bf16.mxu0 0
      %1240 = vmatpush1.bf16.msra.mxu0 0
      %1241 = vmatprep.subr.bf16.mxu0 0
      %1242 = vmatpush1.bf16.msra.mxu0 0
      %1243 = vmatprep.subr.bf16.mxu0 0
      %1244 = vmatpush1.bf16.msra.mxu0 0
      %1245 = vmatprep.subr.bf16.mxu0 0
      %1246 = vmatpush1.bf16.msra.mxu0 0
      %1247 = vmatprep.subr.bf16.mxu0 0
      %1248 = vmatpush1.bf16.msra.mxu0 0
      %1249 = vmatprep.subr.bf16.mxu0 0
      %1250 = vmatpush1.bf16.msra.mxu0 0
      %1251 = vmatprep.mubr.bf16.mxu0 0
      %1252 = vmatmul.mubr.bf16.gmra.mrb[0].mxu0 %v1217
      %v1253 = vpop.f32.mrb[0].mxu0
      %v1254 = vadd.f32 0.0, %v1253
      %v1255 = vpop.f32.mrb[0].mxu0
      %v1256 = vpop.f32.mrb[0].mxu0
      %v1257 = vadd.f32 0.0, %v1256
      %v1258 = vpop.f32.mrb[0].mxu0
      %1259 = vdwg.mxu0
      %v1264 = vunpack.c.l.b16 %v1186
      %v1265 = vunpack.c.l.b16 %v1187
      %v1266 = vunpack.c.l.b16 %v1188
      %v1267 = vunpack.c.l.b16 %v1189
      %v1268 = vpack.c.b16 %v1265, %v1264
      %v1269 = vpack.c.b16 %v1267, %v1266
      %v1273 = vsel %vm1215, %v1201, 0
      %1275 = vmatprep.subr.bf16.mxu0 0
      %1276 = vmatpush1.bf16.msra.mxu0 %v1268
      %1277 = vmatprep.subr.bf16.mxu0 0
      %1278 = vmatpush1.bf16.msra.mxu0 %v1269
      %1279 = vmatprep.subr.bf16.mxu0 0
      %1280 = vmatpush1.bf16.msra.mxu0 0
      %1281 = vmatprep.subr.bf16.mxu0 0
      %1282 = vmatpush1.bf16.msra.mxu0 0
      %1283 = vmatprep.subr.bf16.mxu0 0
      %1284 = vmatpush1.bf16.msra.mxu0 0
      %1285 = vmatprep.subr.bf16.mxu0 0
      %1286 = vmatpush1.bf16.msra.mxu0 0
      %1287 = vmatprep.subr.bf16.mxu0 0
      %1288 = vmatpush1.bf16.msra.mxu0 0
      %1289 = vmatprep.subr.bf16.mxu0 0
      %1290 = vmatpush1.bf16.msra.mxu0 0
      %1291 = vmatprep.subr.bf16.mxu0 0
      %1292 = vmatpush1.bf16.msra.mxu0 0
      %1293 = vmatprep.subr.bf16.mxu0 0
      %1294 = vmatpush1.bf16.msra.mxu0 0
      %1295 = vmatprep.subr.bf16.mxu0 0
      %1296 = vmatpush1.bf16.msra.mxu0 0
      %1297 = vmatprep.subr.bf16.mxu0 0
      %1298 = vmatpush1.bf16.msra.mxu0 0
      %1299 = vmatprep.subr.bf16.mxu0 0
      %1300 = vmatpush1.bf16.msra.mxu0 0
      %1301 = vmatprep.subr.bf16.mxu0 0
      %1302 = vmatpush1.bf16.msra.mxu0 0
      %1303 = vmatprep.subr.bf16.mxu0 0
      %1304 = vmatpush1.bf16.msra.mxu0 0
      %1305 = vmatprep.subr.bf16.mxu0 0
      %1306 = vmatpush1.bf16.msra.mxu0 0
      %1307 = vmatprep.mubr.bf16.mxu0 0
      %1308 = vmatmul.mubr.bf16.gmra.mrb[0].mxu0 %v1273
      %v1309 = vpop.f32.mrb[0].mxu0
      %v1310 = vadd.f32 %v1254, %v1309
      %v1311 = vpop.f32.mrb[0].mxu0
      %v1312 = vpop.f32.mrb[0].mxu0
      %v1313 = vadd.f32 %v1257, %v1312
      %v1314 = vpop.f32.mrb[0].mxu0
      %1315 = vdwg.mxu0
      %v1316 = vpack.c.bf16 %v1173, %v1172
      %v1321 = vunpack.c.l.b16 %v1196
      %v1322 = vunpack.c.l.b16 %v1197
      %v1323 = vunpack.c.l.b16 %v1198
      %v1324 = vunpack.c.l.b16 %v1199
      %v1325 = vpack.c.b16 %v1322, %v1321
      %v1326 = vpack.c.b16 %v1324, %v1323
      %v1330 = vsel %vm1215, %v1316, 0
      %1332 = vmatprep.subr.bf16.mxu0 0
      %1333 = vmatpush1.bf16.msra.mxu0 %v1325
      %1334 = vmatprep.subr.bf16.mxu0 0
      %1335 = vmatpush1.bf16.msra.mxu0 %v1326
      %1336 = vmatprep.subr.bf16.mxu0 0
      %1337 = vmatpush1.bf16.msra.mxu0 0
      %1338 = vmatprep.subr.bf16.mxu0 0
      %1339 = vmatpush1.bf16.msra.mxu0 0
      %1340 = vmatprep.subr.bf16.mxu0 0
      %1341 = vmatpush1.bf16.msra.mxu0 0
      %1342 = vmatprep.subr.bf16.mxu0 0
      %1343 = vmatpush1.bf16.msra.mxu0 0
      %1344 = vmatprep.subr.bf16.mxu0 0
      %1345 = vmatpush1.bf16.msra.mxu0 0
      %1346 = vmatprep.subr.bf16.mxu0 0
      %1347 = vmatpush1.bf16.msra.mxu0 0
      %1348 = vmatprep.subr.bf16.mxu0 0
      %1349 = vmatpush1.bf16.msra.mxu0 0
      %1350 = vmatprep.subr.bf16.mxu0 0
      %1351 = vmatpush1.bf16.msra.mxu0 0
      %1352 = vmatprep.subr.bf16.mxu0 0
      %1353 = vmatpush1.bf16.msra.mxu0 0
      %1354 = vmatprep.subr.bf16.mxu0 0
      %1355 = vmatpush1.bf16.msra.mxu0 0
      %1356 = vmatprep.subr.bf16.mxu0 0
      %1357 = vmatpush1.bf16.msra.mxu0 0
      %1358 = vmatprep.subr.bf16.mxu0 0
      %1359 = vmatpush1.bf16.msra.mxu0 0
      %1360 = vmatprep.subr.bf16.mxu0 0
      %1361 = vmatpush1.bf16.msra.mxu0 0
      %1362 = vmatprep.subr.bf16.mxu0 0
      %1363 = vmatpush1.bf16.msra.mxu0 0
      %1364 = vmatprep.mubr.bf16.mxu0 0
      %1365 = vmatmul.mubr.bf16.gmra.mrb[0].mxu0 %v1330
      %v1366 = vpop.f32.mrb[0].mxu0
      %v1367 = vadd.f32 0.0, %v1366
      %v1368 = vpop.f32.mrb[0].mxu0
      %v1369 = vpop.f32.mrb[0].mxu0
      %v1370 = vadd.f32 0.0, %v1369
      %v1371 = vpop.f32.mrb[0].mxu0
      %1372 = vdwg.mxu0
      %v1373 = vadd.f32 %v1310, %v1367
      %v1374 = vadd.f32 %v1313, %v1370
      %v1376 = vlaneseq
      %v1377 = vshrl.u32 %v1376, 7
      %v1378 = vsub.s32 0, %v1377
      %v1379 = vrot.slane %v1200, %v1378
      %v1381 = vadd.f32 %v1373, %v1379
      %v1382 = vadd.f32 %v1374, %v1379
      %v1383 = vmul.f32 %v1381, 0.5
      %v1384 = vmul.f32 %v1382, 0.5
      %v1385 = vmul.f32 %v1381, 0.044715
      %v1386 = vmul.f32 %v1382, 0.044715
      %v1387 = vmul.f32 %v1385, %v1381
      %v1388 = vmul.f32 %v1386, %v1382
      %v1389 = vmul.f32 %v1387, %v1381
      %v1390 = vmul.f32 %v1388, %v1382
      %v1391 = vadd.f32 %v1381, %v1389
      %v1392 = vadd.f32 %v1382, %v1390
      %v1393 = vmul.f32 %v1391, 0.7978846
      %v1394 = vmul.f32 %v1392, 0.7978846
      %v1395 = vtanh.pop %v1393
      %v1396 = vtanh.pop %v1394
      %v1397 = vadd.f32 %v1395, 1.0
      %v1398 = vadd.f32 %v1396, 1.0
      %v1399 = vmul.f32 %v1383, %v1397
      %v1400 = vmul.f32 %v1384, %v1398
      %v1401 = vld [vmem:[%s8] sm:$0xff]
      %v1402 = vld [vmem:[%s8 + $0x8] sm:$0xff]
      %v1403 = vadd.f32 %v1399, %v1401
      %v1404 = vadd.f32 %v1400, %v1402
      %v1405 = vld [vmem:[%s9] sm:$0x1]
      %v1406 = vld [vmem:[%s10] sm:$0x1]
      %v1407 = vsel %vm1215, %v1403, 0.0
      %1408 = vadd.xlane.f32.xlu0 %v1407
      %v1409 = vpop.xlane.xlu0 %1408
      %v1410 = vsel %vm1215, %v1404, 0.0
      %1411 = vadd.xlane.f32.xlu0 %v1410
      %v1412 = vpop.xlane.xlu0 %1411
      %v1413 = vrcp.pop 32.0
      %v1414 = vmul.f32 %v1409, %v1413
      %v1415 = vmul.f32 %v1412, %v1413
      %v1416 = vsub.f32 %v1403, %v1414
      %v1417 = vsub.f32 %v1404, %v1415
      %v1418 = vmul.f32 %v1416, %v1416
      %v1419 = vmul.f32 %v1417, %v1417
      %v1420 = vsel %vm1215, %v1418, 0.0
      %1421 = vadd.xlane.f32.xlu0 %v1420
      %v1422 = vpop.xlane.xlu0 %1421
      %v1423 = vsel %vm1215, %v1419, 0.0
      %1424 = vadd.xlane.f32.xlu0 %v1423
      %v1425 = vpop.xlane.xlu0 %1424
      %v1426 = vmul.f32 %v1422, %v1413
      %v1427 = vmul.f32 %v1425, %v1413
      %v1428 = vadd.f32 %v1426, 1e-05
      %v1429 = vadd.f32 %v1427, 1e-05
      %v1430 = vrsqrt.pop %v1428
      %v1431 = vrsqrt.pop %v1429
      %v1432 = vmul.f32 %v1416, %v1430
      %v1433 = vmul.f32 %v1417, %v1431
      %v1435 = vlaneseq
      %v1436 = vshrl.u32 %v1435, 7
      %v1437 = vsub.s32 0, %v1436
      %v1438 = vrot.slane %v1405, %v1437
      %v1440 = vmul.f32 %v1432, %v1438
      %v1441 = vmul.f32 %v1433, %v1438
      %v1443 = vlaneseq
      %v1444 = vshrl.u32 %v1443, 7
      %v1445 = vsub.s32 0, %v1444
      %v1446 = vrot.slane %v1406, %v1445
      %v1448 = vadd.f32 %v1440, %v1446
      %v1449 = vadd.f32 %v1441, %v1446
      %v1450 = vpack.c.bf16 %v1449, %v1448
      %v1451 = vld [vmem:[%s11] sm:$0xf]
      %v1452 = vld [vmem:[%s11 + $0x4] sm:$0xf]
      %v1453 = vld [vmem:[%s11 + $0x8] sm:$0xf]
      %v1454 = vld [vmem:[%s11 + $0xc] sm:$0xf]
      %v1455 = vld [vmem:[%s12] sm:$0x1]
      %v1457 = vlaneseq
      %v1458 = vshrl.u32 %v1457, 7
      %v1459 = vsub.s32 0, %v1458
      %v1460 = vrot.slane %v1455, %v1459
      %v1466 = vunpack.c.l.b16 %v1451
      %v1467 = vunpack.c.l.b16 %v1452
      %v1468 = vunpack.c.l.b16 %v1453
      %v1469 = vunpack.c.l.b16 %v1454
      %v1470 = vpack.c.b16 %v1467, %v1466
      %v1471 = vpack.c.b16 %v1469, %v1468
      %v1475 = vsel %vm1215, %v1450, 0
      %1477 = vmatprep.subr.bf16.mxu0 0
      %1478 = vmatpush1.bf16.msra.mxu0 %v1470
      %1479 = vmatprep.subr.bf16.mxu0 0
      %1480 = vmatpush1.bf16.msra.mxu0 %v1471
      %1481 = vmatprep.subr.bf16.mxu0 0
      %1482 = vmatpush1.bf16.msra.mxu0 0
      %1483 = vmatprep.subr.bf16.mxu0 0
      %1484 = vmatpush1.bf16.msra.mxu0 0
      %1485 = vmatprep.subr.bf16.mxu0 0
      %1486 = vmatpush1.bf16.msra.mxu0 0
      %1487 = vmatprep.subr.bf16.mxu0 0
      %1488 = vmatpush1.bf16.msra.mxu0 0
      %1489 = vmatprep.subr.bf16.mxu0 0
      %1490 = vmatpush1.bf16.msra.mxu0 0
      %1491 = vmatprep.subr.bf16.mxu0 0
      %1492 = vmatpush1.bf16.msra.mxu0 0
      %1493 = vmatprep.subr.bf16.mxu0 0
      %1494 = vmatpush1.bf16.msra.mxu0 0
      %1495 = vmatprep.subr.bf16.mxu0 0
      %1496 = vmatpush1.bf16.msra.mxu0 0
      %1497 = vmatprep.subr.bf16.mxu0 0
      %1498 = vmatpush1.bf16.msra.mxu0 0
      %1499 = vmatprep.subr.bf16.mxu0 0
      %1500 = vmatpush1.bf16.msra.mxu0 0
      %1501 = vmatprep.subr.bf16.mxu0 0
      %1502 = vmatpush1.bf16.msra.mxu0 0
      %1503 = vmatprep.subr.bf16.mxu0 0
      %1504 = vmatpush1.bf16.msra.mxu0 0
      %1505 = vmatprep.subr.bf16.mxu0 0
      %1506 = vmatpush1.bf16.msra.mxu0 0
      %1507 = vmatprep.subr.bf16.mxu0 0
      %1508 = vmatpush1.bf16.msra.mxu0 0
      %1509 = vmatprep.mubr.bf16.mxu0 0
      %1510 = vmatmul.mubr.bf16.gmra.mrb[0].mxu0 %v1475
      %v1511 = vpop.f32.mrb[0].mxu0
      %v1512 = vadd.f32 %v1460, %v1511
      %v1513 = vpop.f32.mrb[0].mxu0
      %v1514 = vpop.f32.mrb[0].mxu0
      %v1515 = vadd.f32 %v1460, %v1514
      %v1516 = vpop.f32.mrb[0].mxu0
      %1517 = vdwg.mxu0
      %v1518 = vpack.c.bf16 %v1515, %v1512
      %1520 = vrot.lane.b32.xlu0 %v1518, 96
      %v1521 = vpop.permute.xlu0 %1520
      %vm1522 = vcmask 64512
      %v1524 = vsel %vm1522, %v1518, 0
      %v1527 = vsel %vm1522, %v1521, 0
      %1529 = vmatprep.subr.bf16.mxu0 0
      %1530 = vmatpush1.bf16.xpose.msra.mxu0 %v1527
      %1531 = vmatprep.subr.bf16.mxu0 0
      %1532 = vmatpush1.bf16.xpose.msra.mxu0 0
      %1533 = vmatprep.subr.bf16.mxu0 0
      %1534 = vmatpush1.bf16.xpose.msra.mxu0 0
      %1535 = vmatprep.subr.bf16.mxu0 0
      %1536 = vmatpush1.bf16.xpose.msra.mxu0 0
      %1537 = vmatprep.subr.bf16.mxu0 0
      %1538 = vmatpush1.bf16.xpose.msra.mxu0 0
      %1539 = vmatprep.subr.bf16.mxu0 0
      %1540 = vmatpush1.bf16.xpose.msra.mxu0 0
      %1541 = vmatprep.subr.bf16.mxu0 0
      %1542 = vmatpush1.bf16.xpose.msra.mxu0 0
      %1543 = vmatprep.subr.bf16.mxu0 0
      %1544 = vmatpush1.bf16.xpose.msra.mxu0 0
      %1545 = vmatprep.subr.bf16.mxu0 0
      %1546 = vmatpush1.bf16.xpose.msra.mxu0 0
      %1547 = vmatprep.subr.bf16.mxu0 0
      %1548 = vmatpush1.bf16.xpose.msra.mxu0 0
      %1549 = vmatprep.subr.bf16.mxu0 0
      %1550 = vmatpush1.bf16.xpose.msra.mxu0 0
      %1551 = vmatprep.subr.bf16.mxu0 0
      %1552 = vmatpush1.bf16.xpose.msra.mxu0 0
      %1553 = vmatprep.subr.bf16.mxu0 0
      %1554 = vmatpush1.bf16.xpose.msra.mxu0 0
      %1555 = vmatprep.subr.bf16.mxu0 0
      %1556 = vmatpush1.bf16.xpose.msra.mxu0 0
      %1557 = vmatprep.subr.bf16.mxu0 0
      %1558 = vmatpush1.bf16.xpose.msra.mxu0 0
      %1559 = vmatprep.subr.bf16.mxu0 0
      %1560 = vmatpush1.bf16.xpose.msra.mxu0 0
      %1561 = vmatprep.mubr.bf16.mxu0 0
      %1562 = vmatmul.mubr.bf16.gmra.mrb[0].mxu0 %v1524
      %v1563 = vpop.f32.mrb[0].mxu0
      %v1564 = vadd.f32 0.0, %v1563
      %v1565 = vpop.f32.mrb[0].mxu0
      %v1566 = vpop.f32.mrb[0].mxu0
      %v1567 = vadd.f32 0.0, %v1566
      %v1568 = vpop.f32.mrb[0].mxu0
      %1569 = vdwg.mxu0
      %v1570 = vsel %vm853, %v1564, -inf
      %1571 = vmax.xlane.f32.xlu0 %v1570
      %v1572 = vpop.xlane.xlu0 %1571
      %v1573 = vsel %vm853, %v1567, -inf
      %1574 = vmax.xlane.f32.xlu0 %v1573
      %v1575 = vpop.xlane.xlu0 %1574
      %v1576 = vsub.f32 %v1564, %v1572
      %v1577 = vsub.f32 %v1567, %v1575
      %v1578 = vmul.f32 %v1576, 1.442695
      %v1579 = vpow.pop %v1578
      %v1580 = vmul.f32 %v1577, 1.442695
      %v1581 = vpow.pop %v1580
      %v1582 = vsel %vm853, %v1579, 0.0
      %1583 = vadd.xlane.f32.xlu0 %v1582
      %v1584 = vpop.xlane.xlu0 %1583
      %v1585 = vsel %vm853, %v1581, 0.0
      %1586 = vadd.xlane.f32.xlu0 %v1585
      %v1587 = vpop.xlane.xlu0 %1586
      %v1588 = vrcp.pop %v1584
      %v1589 = vrcp.pop %v1587
      %v1590 = vmul.f32 %v1579, %v1588
      %v1591 = vmul.f32 %v1581, %v1589
      %v1592 = vpack.c.bf16 %v1591, %v1590
      %1593 = vrot.lane.b32.xlu0 %v1518, 64
      %v1594 = vpop.permute.xlu0 %1593
      %v1597 = vsel %vm853, %v1592, 0
      %1599 = vmatprep.subr.bf16.mxu0 0
      %1600 = vmatpush1.bf16.msra.mxu0 %v1594
      %1601 = vmatprep.subr.bf16.mxu0 0
      %1602 = vmatpush1.bf16.msra.mxu0 0
      %1603 = vmatprep.subr.bf16.mxu0 0
      %1604 = vmatpush1.bf16.msra.mxu0 0
      %1605 = vmatprep.subr.bf16.mxu0 0
      %1606 = vmatpush1.bf16.msra.mxu0 0
      %1607 = vmatprep.subr.bf16.mxu0 0
      %1608 = vmatpush1.bf16.msra.mxu0 0
      %1609 = vmatprep.subr.bf16.mxu0 0
      %1610 = vmatpush1.bf16.msra.mxu0 0
      %1611 = vmatprep.subr.bf16.mxu0 0
      %1612 = vmatpush1.bf16.msra.mxu0 0
      %1613 = vmatprep.subr.bf16.mxu0 0
      %1614 = vmatpush1.bf16.msra.mxu0 0
      %1615 = vmatprep.subr.bf16.mxu0 0
      %1616 = vmatpush1.bf16.msra.mxu0 0
      %1617 = vmatprep.subr.bf16.mxu0 0
      %1618 = vmatpush1.bf16.msra.mxu0 0
      %1619 = vmatprep.subr.bf16.mxu0 0
      %1620 = vmatpush1.bf16.msra.mxu0 0
      %1621 = vmatprep.subr.bf16.mxu0 0
      %1622 = vmatpush1.bf16.msra.mxu0 0
      %1623 = vmatprep.subr.bf16.mxu0 0
      %1624 = vmatpush1.bf16.msra.mxu0 0
      %1625 = vmatprep.subr.bf16.mxu0 0
      %1626 = vmatpush1.bf16.msra.mxu0 0
      %1627 = vmatprep.subr.bf16.mxu0 0
      %1628 = vmatpush1.bf16.msra.mxu0 0
      %1629 = vmatprep.subr.bf16.mxu0 0
      %1630 = vmatpush1.bf16.msra.mxu0 0
      %1631 = vmatprep.mubr.bf16.mxu0 0
      %1632 = vmatmul.mubr.bf16.gmra.mrb[0].mxu0 %v1597
      %v1633 = vpop.f32.mrb[0].mxu0
      %v1634 = vadd.f32 0.0, %v1633
      %v1635 = vpop.f32.mrb[0].mxu0
      %v1636 = vpop.f32.mrb[0].mxu0
      %v1637 = vadd.f32 0.0, %v1636
      %v1638 = vpop.f32.mrb[0].mxu0
      %1639 = vdwg.mxu0
      %v1640 = vpack.c.bf16 %v1637, %v1634
      %v1641 = vld [vmem:[%s13] sm:$0xf]
      %1642 = vrot.lane.b32.xlu0 %v1518, 120
      %v1643 = vpop.permute.xlu0 %1642
      %1644 = vrot.lane.b32.xlu0 %v1518, 88
      %v1645 = vpop.permute.xlu0 %1644
      %v1647 = vsel %vm1522, %v1643, 0
      %v1650 = vsel %vm1522, %v1645, 0
      %1652 = vmatprep.subr.bf16.mxu0 0
      %1653 = vmatpush1.bf16.xpose.msra.mxu0 %v1650
      %1654 = vmatprep.subr.bf16.mxu0 0
      %1655 = vmatpush1.bf16.xpose.msra.mxu0 0
      %1656 = vmatprep.subr.bf16.mxu0 0
      %1657 = vmatpush1.bf16.xpose.msra.mxu0 0
      %1658 = vmatprep.subr.bf16.mxu0 0
      %1659 = vmatpush1.bf16.xpose.msra.mxu0 0
      %1660 = vmatprep.subr.bf16.mxu0 0
      %1661 = vmatpush1.bf16.xpose.msra.mxu0 0
      %1662 = vmatprep.subr.bf16.mxu0 0
      %1663 = vmatpush1.bf16.xpose.msra.mxu0 0
      %1664 = vmatprep.subr.bf16.mxu0 0
      %1665 = vmatpush1.bf16.xpose.msra.mxu0 0
      %1666 = vmatprep.subr.bf16.mxu0 0
      %1667 = vmatpush1.bf16.xpose.msra.mxu0 0
      %1668 = vmatprep.subr.bf16.mxu0 0
      %1669 = vmatpush1.bf16.xpose.msra.mxu0 0
      %1670 = vmatprep.subr.bf16.mxu0 0
      %1671 = vmatpush1.bf16.xpose.msra.mxu0 0
      %1672 = vmatprep.subr.bf16.mxu0 0
      %1673 = vmatpush1.bf16.xpose.msra.mxu0 0
      %1674 = vmatprep.subr.bf16.mxu0 0
      %1675 = vmatpush1.bf16.xpose.msra.mxu0 0
      %1676 = vmatprep.subr.bf16.mxu0 0
      %1677 = vmatpush1.bf16.xpose.msra.mxu0 0
      %1678 = vmatprep.subr.bf16.mxu0 0
      %1679 = vmatpush1.bf16.xpose.msra.mxu0 0
      %1680 = vmatprep.subr.bf16.mxu0 0
      %1681 = vmatpush1.bf16.xpose.msra.mxu0 0
      %1682 = vmatprep.subr.bf16.mxu0 0
      %1683 = vmatpush1.bf16.xpose.msra.mxu0 0
      %1684 = vmatprep.mubr.bf16.mxu0 0
      %1685 = vmatmul.mubr.bf16.gmra.mrb[0].mxu0 %v1647
      %v1686 = vpop.f32.mrb[0].mxu0
      %v1687 = vadd.f32 0.0, %v1686
      %v1688 = vpop.f32.mrb[0].mxu0
      %v1689 = vpop.f32.mrb[0].mxu0
      %v1690 = vadd.f32 0.0, %v1689
      %v1691 = vpop.f32.mrb[0].mxu0
      %1692 = vdwg.mxu0
      %v1693 = vsel %vm853, %v1687, -inf
      %1694 = vmax.xlane.f32.xlu0 %v1693
      %v1695 = vpop.xlane.xlu0 %1694
      %v1696 = vsel %vm853, %v1690, -inf
      %1697 = vmax.xlane.f32.xlu0 %v1696
      %v1698 = vpop.xlane.xlu0 %1697
      %v1699 = vsub.f32 %v1687, %v1695
      %v1700 = vsub.f32 %v1690, %v1698
      %v1701 = vmul.f32 %v1699, 1.442695
      %v1702 = vpow.pop %v1701
      %v1703 = vmul.f32 %v1700, 1.442695
      %v1704 = vpow.pop %v1703
      %v1705 = vsel %vm853, %v1702, 0.0
      %1706 = vadd.xlane.f32.xlu0 %v1705
      %v1707 = vpop.xlane.xlu0 %1706
      %v1708 = vsel %vm853, %v1704, 0.0
      %1709 = vadd.xlane.f32.xlu0 %v1708
      %v1710 = vpop.xlane.xlu0 %1709
      %v1711 = vrcp.pop %v1707
      %v1712 = vrcp.pop %v1710
      %v1713 = vmul.f32 %v1702, %v1711
      %v1714 = vmul.f32 %v1704, %v1712
      %v1715 = vpack.c.bf16 %v1714, %v1713
      %1716 = vrot.lane.b32.xlu0 %v1518, 56
      %v1717 = vpop.permute.xlu0 %1716
      %v1720 = vsel %vm853, %v1715, 0
      %1722 = vmatprep.subr.bf16.mxu0 0
      %1723 = vmatpush1.bf16.msra.mxu0 %v1717
      %1724 = vmatprep.subr.bf16.mxu0 0
      %1725 = vmatpush1.bf16.msra.mxu0 0
      %1726 = vmatprep.subr.bf16.mxu0 0
      %1727 = vmatpush1.bf16.msra.mxu0 0
      %1728 = vmatprep.subr.bf16.mxu0 0
      %1729 = vmatpush1.bf16.msra.mxu0 0
      %1730 = vmatprep.subr.bf16.mxu0 0
      %1731 = vmatpush1.bf16.msra.mxu0 0
      %1732 = vmatprep.subr.bf16.mxu0 0
      %1733 = vmatpush1.bf16.msra.mxu0 0
      %1734 = vmatprep.subr.bf16.mxu0 0
      %1735 = vmatpush1.bf16.msra.mxu0 0
      %1736 = vmatprep.subr.bf16.mxu0 0
      %1737 = vmatpush1.bf16.msra.mxu0 0
      %1738 = vmatprep.subr.bf16.mxu0 0
      %1739 = vmatpush1.bf16.msra.mxu0 0
      %1740 = vmatprep.subr.bf16.mxu0 0
      %1741 = vmatpush1.bf16.msra.mxu0 0
      %1742 = vmatprep.subr.bf16.mxu0 0
      %1743 = vmatpush1.bf16.msra.mxu0 0
      %1744 = vmatprep.subr.bf16.mxu0 0
      %1745 = vmatpush1.bf16.msra.mxu0 0
      %1746 = vmatprep.subr.bf16.mxu0 0
      %1747 = vmatpush1.bf16.msra.mxu0 0
      %1748 = vmatprep.subr.bf16.mxu0 0
      %1749 = vmatpush1.bf16.msra.mxu0 0
      %1750 = vmatprep.subr.bf16.mxu0 0
      %1751 = vmatpush1.bf16.msra.mxu0 0
      %1752 = vmatprep.subr.bf16.mxu0 0
      %1753 = vmatpush1.bf16.msra.mxu0 0
      %1754 = vmatprep.mubr.bf16.mxu0 0
      %1755 = vmatmul.mubr.bf16.gmra.mrb[0].mxu0 %v1720
      %v1756 = vpop.f32.mrb[0].mxu0
      %v1757 = vadd.f32 0.0, %v1756
      %v1758 = vpop.f32.mrb[0].mxu0
      %v1759 = vpop.f32.mrb[0].mxu0
      %v1760 = vadd.f32 0.0, %v1759
      %v1761 = vpop.f32.mrb[0].mxu0
      %1762 = vdwg.mxu0
      %v1763 = vpack.c.bf16 %v1760, %v1757
      %s1764 = scalar_lea.vmem %s13, 4
      %v1765 = vld [vmem:[%s1764] sm:$0xf]
      %v1767 = vsel %vm1522, %v1763, 0
      %vm1769 = vcmask 1043456
      %v1771 = vsel %vm1769, %v1765, 0
      %1773 = vmatprep.subr.bf16.mxu0 0
      %1774 = vmatpush1.bf16.msra.mxu0 %v1771
      %1775 = vmatprep.subr.bf16.mxu0 0
      %1776 = vmatpush1.bf16.msra.mxu0 0
      %1777 = vmatprep.subr.bf16.mxu0 0
      %1778 = vmatpush1.bf16.msra.mxu0 0
      %1779 = vmatprep.subr.bf16.mxu0 0
      %1780 = vmatpush1.bf16.msra.mxu0 0
      %1781 = vmatprep.subr.bf16.mxu0 0
      %1782 = vmatpush1.bf16.msra.mxu0 0
      %1783 = vmatprep.subr.bf16.mxu0 0
      %1784 = vmatpush1.bf16.msra.mxu0 0
      %1785 = vmatprep.subr.bf16.mxu0 0
      %1786 = vmatpush1.bf16.msra.mxu0 0
      %1787 = vmatprep.subr.bf16.mxu0 0
      %1788 = vmatpush1.bf16.msra.mxu0 0
      %1789 = vmatprep.subr.bf16.mxu0 0
      %1790 = vmatpush1.bf16.msra.mxu0 0
      %1791 = vmatprep.subr.bf16.mxu0 0
      %1792 = vmatpush1.bf16.msra.mxu0 0
      %1793 = vmatprep.subr.bf16.mxu0 0
      %1794 = vmatpush1.bf16.msra.mxu0 0
      %1795 = vmatprep.subr.bf16.mxu0 0
      %1796 = vmatpush1.bf16.msra.mxu0 0
      %1797 = vmatprep.subr.bf16.mxu0 0
      %1798 = vmatpush1.bf16.msra.mxu0 0
      %1799 = vmatprep.subr.bf16.mxu0 0
      %1800 = vmatpush1.bf16.msra.mxu0 0
      %1801 = vmatprep.subr.bf16.mxu0 0
      %1802 = vmatpush1.bf16.msra.mxu0 0
      %1803 = vmatprep.subr.bf16.mxu0 0
      %1804 = vmatpush1.bf16.msra.mxu0 0
      %1805 = vmatprep.mubr.bf16.mxu0 0
      %1806 = vmatmul.mubr.bf16.gmra.mrb[0].mxu0 %v1767
      %v1807 = vpop.f32.mrb[0].mxu0
      %v1808 = vadd.f32 0.0, %v1807
      %v1809 = vpop.f32.mrb[0].mxu0
      %v1810 = vpop.f32.mrb[0].mxu0
      %v1811 = vadd.f32 0.0, %v1810
      %v1812 = vpop.f32.mrb[0].mxu0
      %1813 = vdwg.mxu0
      %v1815 = vsel %vm1522, %v1640, 0
      %v1818 = vsel %vm1769, %v1641, 0
      %1820 = vmatprep.subr.bf16.mxu0 0
      %1821 = vmatpush1.bf16.msra.mxu0 %v1818
      %1822 = vmatprep.subr.bf16.mxu0 0
      %1823 = vmatpush1.bf16.msra.mxu0 0
      %1824 = vmatprep.subr.bf16.mxu0 0
      %1825 = vmatpush1.bf16.msra.mxu0 0
      %1826 = vmatprep.subr.bf16.mxu0 0
      %1827 = vmatpush1.bf16.msra.mxu0 0
      %1828 = vmatprep.subr.bf16.mxu0 0
      %1829 = vmatpush1.bf16.msra.mxu0 0
      %1830 = vmatprep.subr.bf16.mxu0 0
      %1831 = vmatpush1.bf16.msra.mxu0 0
      %1832 = vmatprep.subr.bf16.mxu0 0
      %1833 = vmatpush1.bf16.msra.mxu0 0
      %1834 = vmatprep.subr.bf16.mxu0 0
      %1835 = vmatpush1.bf16.msra.mxu0 0
      %1836 = vmatprep.subr.bf16.mxu0 0
      %1837 = vmatpush1.bf16.msra.mxu0 0
      %1838 = vmatprep.subr.bf16.mxu0 0
      %1839 = vmatpush1.bf16.msra.mxu0 0
      %1840 = vmatprep.subr.bf16.mxu0 0
      %1841 = vmatpush1.bf16.msra.mxu0 0
      %1842 = vmatprep.subr.bf16.mxu0 0
      %1843 = vmatpush1.bf16.msra.mxu0 0
      %1844 = vmatprep.subr.bf16.mxu0 0
      %1845 = vmatpush1.bf16.msra.mxu0 0
      %1846 = vmatprep.subr.bf16.mxu0 0
      %1847 = vmatpush1.bf16.msra.mxu0 0
      %1848 = vmatprep.subr.bf16.mxu0 0
      %1849 = vmatpush1.bf16.msra.mxu0 0
      %1850 = vmatprep.subr.bf16.mxu0 0
      %1851 = vmatpush1.bf16.msra.mxu0 0
      %1852 = vmatprep.mubr.bf16.mxu0 0
      %1853 = vmatmul.mubr.bf16.gmra.mrb[0].mxu0 %v1815
      %v1854 = vpop.f32.mrb[0].mxu0
      %v1855 = vadd.f32 %v1808, %v1854
      %v1856 = vpop.f32.mrb[0].mxu0
      %v1857 = vpop.f32.mrb[0].mxu0
      %v1858 = vadd.f32 %v1811, %v1857
      %v1859 = vpop.f32.mrb[0].mxu0
      %1860 = vdwg.mxu0
      %1861 = vrot.lane.b32.xlu0 %v1518, 112
      %v1862 = vpop.permute.xlu0 %1861
      %1863 = vrot.lane.b32.xlu0 %v1518, 80
      %v1864 = vpop.permute.xlu0 %1863
      %v1866 = vsel %vm1522, %v1862, 0
      %v1869 = vsel %vm1522, %v1864, 0
      %1871 = vmatprep.subr.bf16.mxu0 0
      %1872 = vmatpush1.bf16.xpose.msra.mxu0 %v1869
      %1873 = vmatprep.subr.bf16.mxu0 0
      %1874 = vmatpush1.bf16.xpose.msra.mxu0 0
      %1875 = vmatprep.subr.bf16.mxu0 0
      %1876 = vmatpush1.bf16.xpose.msra.mxu0 0
      %1877 = vmatprep.subr.bf16.mxu0 0
      %1878 = vmatpush1.bf16.xpose.msra.mxu0 0
      %1879 = vmatprep.subr.bf16.mxu0 0
      %1880 = vmatpush1.bf16.xpose.msra.mxu0 0
      %1881 = vmatprep.subr.bf16.mxu0 0
      %1882 = vmatpush1.bf16.xpose.msra.mxu0 0
      %1883 = vmatprep.subr.bf16.mxu0 0
      %1884 = vmatpush1.bf16.xpose.msra.mxu0 0
      %1885 = vmatprep.subr.bf16.mxu0 0
      %1886 = vmatpush1.bf16.xpose.msra.mxu0 0
      %1887 = vmatprep.subr.bf16.mxu0 0
      %1888 = vmatpush1.bf16.xpose.msra.mxu0 0
      %1889 = vmatprep.subr.bf16.mxu0 0
      %1890 = vmatpush1.bf16.xpose.msra.mxu0 0
      %1891 = vmatprep.subr.bf16.mxu0 0
      %1892 = vmatpush1.bf16.xpose.msra.mxu0 0
      %1893 = vmatprep.subr.bf16.mxu0 0
      %1894 = vmatpush1.bf16.xpose.msra.mxu0 0
      %1895 = vmatprep.subr.bf16.mxu0 0
      %1896 = vmatpush1.bf16.xpose.msra.mxu0 0
      %1897 = vmatprep.subr.bf16.mxu0 0
      %1898 = vmatpush1.bf16.xpose.msra.mxu0 0
      %1899 = vmatprep.subr.bf16.mxu0 0
      %1900 = vmatpush1.bf16.xpose.msra.mxu0 0
      %1901 = vmatprep.subr.bf16.mxu0 0
      %1902 = vmatpush1.bf16.xpose.msra.mxu0 0
      %1903 = vmatprep.mubr.bf16.mxu0 0
      %1904 = vmatmul.mubr.bf16.gmra.mrb[0].mxu0 %v1866
      %v1905 = vpop.f32.mrb[0].mxu0
      %v1906 = vadd.f32 0.0, %v1905
      %v1907 = vpop.f32.mrb[0].mxu0
      %v1908 = vpop.f32.mrb[0].mxu0
      %v1909 = vadd.f32 0.0, %v1908
      %v1910 = vpop.f32.mrb[0].mxu0
      %1911 = vdwg.mxu0
      %v1912 = vsel %vm853, %v1906, -inf
      %1913 = vmax.xlane.f32.xlu0 %v1912
      %v1914 = vpop.xlane.xlu0 %1913
      %v1915 = vsel %vm853, %v1909, -inf
      %1916 = vmax.xlane.f32.xlu0 %v1915
      %v1917 = vpop.xlane.xlu0 %1916
      %v1918 = vsub.f32 %v1906, %v1914
      %v1919 = vsub.f32 %v1909, %v1917
      %v1920 = vmul.f32 %v1918, 1.442695
      %v1921 = vpow.pop %v1920
      %v1922 = vmul.f32 %v1919, 1.442695
      %v1923 = vpow.pop %v1922
      %v1924 = vsel %vm853, %v1921, 0.0
      %1925 = vadd.xlane.f32.xlu0 %v1924
      %v1926 = vpop.xlane.xlu0 %1925
      %v1927 = vsel %vm853, %v1923, 0.0
      %1928 = vadd.xlane.f32.xlu0 %v1927
      %v1929 = vpop.xlane.xlu0 %1928
      %v1930 = vrcp.pop %v1926
      %v1931 = vrcp.pop %v1929
      %v1932 = vmul.f32 %v1921, %v1930
      %v1933 = vmul.f32 %v1923, %v1931
      %v1934 = vpack.c.bf16 %v1933, %v1932
      %1935 = vrot.lane.b32.xlu0 %v1518, 48
      %v1936 = vpop.permute.xlu0 %1935
      %v1939 = vsel %vm853, %v1934, 0
      %1941 = vmatprep.subr.bf16.mxu0 0
      %1942 = vmatpush1.bf16.msra.mxu0 %v1936
      %1943 = vmatprep.subr.bf16.mxu0 0
      %1944 = vmatpush1.bf16.msra.mxu0 0
      %1945 = vmatprep.subr.bf16.mxu0 0
      %1946 = vmatpush1.bf16.msra.mxu0 0
      %1947 = vmatprep.subr.bf16.mxu0 0
      %1948 = vmatpush1.bf16.msra.mxu0 0
      %1949 = vmatprep.subr.bf16.mxu0 0
      %1950 = vmatpush1.bf16.msra.mxu0 0
      %1951 = vmatprep.subr.bf16.mxu0 0
      %1952 = vmatpush1.bf16.msra.mxu0 0
      %1953 = vmatprep.subr.bf16.mxu0 0
      %1954 = vmatpush1.bf16.msra.mxu0 0
      %1955 = vmatprep.subr.bf16.mxu0 0
      %1956 = vmatpush1.bf16.msra.mxu0 0
      %1957 = vmatprep.subr.bf16.mxu0 0
      %1958 = vmatpush1.bf16.msra.mxu0 0
      %1959 = vmatprep.subr.bf16.mxu0 0
      %1960 = vmatpush1.bf16.msra.mxu0 0
      %1961 = vmatprep.subr.bf16.mxu0 0
      %1962 = vmatpush1.bf16.msra.mxu0 0
      %1963 = vmatprep.subr.bf16.mxu0 0
      %1964 = vmatpush1.bf16.msra.mxu0 0
      %1965 = vmatprep.subr.bf16.mxu0 0
      %1966 = vmatpush1.bf16.msra.mxu0 0
      %1967 = vmatprep.subr.bf16.mxu0 0
      %1968 = vmatpush1.bf16.msra.mxu0 0
      %1969 = vmatprep.subr.bf16.mxu0 0
      %1970 = vmatpush1.bf16.msra.mxu0 0
      %1971 = vmatprep.subr.bf16.mxu0 0
      %1972 = vmatpush1.bf16.msra.mxu0 0
      %1973 = vmatprep.mubr.bf16.mxu0 0
      %1974 = vmatmul.mubr.bf16.gmra.mrb[0].mxu0 %v1939
      %v1975 = vpop.f32.mrb[0].mxu0
      %v1976 = vadd.f32 0.0, %v1975
      %v1977 = vpop.f32.mrb[0].mxu0
      %v1978 = vpop.f32.mrb[0].mxu0
      %v1979 = vadd.f32 0.0, %v1978
      %v1980 = vpop.f32.mrb[0].mxu0
      %1981 = vdwg.mxu0
      %v1982 = vpack.c.bf16 %v1979, %v1976
      %s1983 = scalar_lea.vmem %s13, 8
      %v1984 = vld [vmem:[%s1983] sm:$0xf]
      %v1986 = vsel %vm1522, %v1982, 0
      %v1989 = vsel %vm1769, %v1984, 0
      %1991 = vmatprep.subr.bf16.mxu0 0
      %1992 = vmatpush1.bf16.msra.mxu0 %v1989
      %1993 = vmatprep.subr.bf16.mxu0 0
      %1994 = vmatpush1.bf16.msra.mxu0 0
      %1995 = vmatprep.subr.bf16.mxu0 0
      %1996 = vmatpush1.bf16.msra.mxu0 0
      %1997 = vmatprep.subr.bf16.mxu0 0
      %1998 = vmatpush1.bf16.msra.mxu0 0
      %1999 = vmatprep.subr.bf16.mxu0 0
      %2000 = vmatpush1.bf16.msra.mxu0 0
      %2001 = vmatprep.subr.bf16.mxu0 0
      %2002 = vmatpush1.bf16.msra.mxu0 0
      %2003 = vmatprep.subr.bf16.mxu0 0
      %2004 = vmatpush1.bf16.msra.mxu0 0
      %2005 = vmatprep.subr.bf16.mxu0 0
      %2006 = vmatpush1.bf16.msra.mxu0 0
      %2007 = vmatprep.subr.bf16.mxu0 0
      %2008 = vmatpush1.bf16.msra.mxu0 0
      %2009 = vmatprep.subr.bf16.mxu0 0
      %2010 = vmatpush1.bf16.msra.mxu0 0
      %2011 = vmatprep.subr.bf16.mxu0 0
      %2012 = vmatpush1.bf16.msra.mxu0 0
      %2013 = vmatprep.subr.bf16.mxu0 0
      %2014 = vmatpush1.bf16.msra.mxu0 0
      %2015 = vmatprep.subr.bf16.mxu0 0
      %2016 = vmatpush1.bf16.msra.mxu0 0
      %2017 = vmatprep.subr.bf16.mxu0 0
      %2018 = vmatpush1.bf16.msra.mxu0 0
      %2019 = vmatprep.subr.bf16.mxu0 0
      %2020 = vmatpush1.bf16.msra.mxu0 0
      %2021 = vmatprep.subr.bf16.mxu0 0
      %2022 = vmatpush1.bf16.msra.mxu0 0
      %2023 = vmatprep.mubr.bf16.mxu0 0
      %2024 = vmatmul.mubr.bf16.gmra.mrb[0].mxu0 %v1986
      %v2025 = vpop.f32.mrb[0].mxu0
      %v2026 = vadd.f32 0.0, %v2025
      %v2027 = vpop.f32.mrb[0].mxu0
      %v2028 = vpop.f32.mrb[0].mxu0
      %v2029 = vadd.f32 0.0, %v2028
      %v2030 = vpop.f32.mrb[0].mxu0
      %2031 = vdwg.mxu0
      %v2032 = vadd.f32 %v1855, %v2026
      %v2033 = vadd.f32 %v1858, %v2029
      %2034 = vrot.lane.b32.xlu0 %v1518, 104
      %v2035 = vpop.permute.xlu0 %2034
      %2036 = vrot.lane.b32.xlu0 %v1518, 72
      %v2037 = vpop.permute.xlu0 %2036
      %v2039 = vsel %vm1522, %v2035, 0
      %v2042 = vsel %vm1522, %v2037, 0
      %2044 = vmatprep.subr.bf16.mxu0 0
      %2045 = vmatpush1.bf16.xpose.msra.mxu0 %v2042
      %2046 = vmatprep.subr.bf16.mxu0 0
      %2047 = vmatpush1.bf16.xpose.msra.mxu0 0
      %2048 = vmatprep.subr.bf16.mxu0 0
      %2049 = vmatpush1.bf16.xpose.msra.mxu0 0
      %2050 = vmatprep.subr.bf16.mxu0 0
      %2051 = vmatpush1.bf16.xpose.msra.mxu0 0
      %2052 = vmatprep.subr.bf16.mxu0 0
      %2053 = vmatpush1.bf16.xpose.msra.mxu0 0
      %2054 = vmatprep.subr.bf16.mxu0 0
      %2055 = vmatpush1.bf16.xpose.msra.mxu0 0
      %2056 = vmatprep.subr.bf16.mxu0 0
      %2057 = vmatpush1.bf16.xpose.msra.mxu0 0
      %2058 = vmatprep.subr.bf16.mxu0 0
      %2059 = vmatpush1.bf16.xpose.msra.mxu0 0
      %2060 = vmatprep.subr.bf16.mxu0 0
      %2061 = vmatpush1.bf16.xpose.msra.mxu0 0
      %2062 = vmatprep.subr.bf16.mxu0 0
      %2063 = vmatpush1.bf16.xpose.msra.mxu0 0
      %2064 = vmatprep.subr.bf16.mxu0 0
      %2065 = vmatpush1.bf16.xpose.msra.mxu0 0
      %2066 = vmatprep.subr.bf16.mxu0 0
      %2067 = vmatpush1.bf16.xpose.msra.mxu0 0
      %2068 = vmatprep.subr.bf16.mxu0 0
      %2069 = vmatpush1.bf16.xpose.msra.mxu0 0
      %2070 = vmatprep.subr.bf16.mxu0 0
      %2071 = vmatpush1.bf16.xpose.msra.mxu0 0
      %2072 = vmatprep.subr.bf16.mxu0 0
      %2073 = vmatpush1.bf16.xpose.msra.mxu0 0
      %2074 = vmatprep.subr.bf16.mxu0 0
      %2075 = vmatpush1.bf16.xpose.msra.mxu0 0
      %2076 = vmatprep.mubr.bf16.mxu0 0
      %2077 = vmatmul.mubr.bf16.gmra.mrb[0].mxu0 %v2039
      %v2078 = vpop.f32.mrb[0].mxu0
      %v2079 = vadd.f32 0.0, %v2078
      %v2080 = vpop.f32.mrb[0].mxu0
      %v2081 = vpop.f32.mrb[0].mxu0
      %v2082 = vadd.f32 0.0, %v2081
      %v2083 = vpop.f32.mrb[0].mxu0
      %2084 = vdwg.mxu0
      %v2085 = vsel %vm853, %v2079, -inf
      %2086 = vmax.xlane.f32.xlu0 %v2085
      %v2087 = vpop.xlane.xlu0 %2086
      %v2088 = vsel %vm853, %v2082, -inf
      %2089 = vmax.xlane.f32.xlu0 %v2088
      %v2090 = vpop.xlane.xlu0 %2089
      %v2091 = vsub.f32 %v2079, %v2087
      %v2092 = vsub.f32 %v2082, %v2090
      %v2093 = vmul.f32 %v2091, 1.442695
      %v2094 = vpow.pop %v2093
      %v2095 = vmul.f32 %v2092, 1.442695
      %v2096 = vpow.pop %v2095
      %v2097 = vsel %vm853, %v2094, 0.0
      %2098 = vadd.xlane.f32.xlu0 %v2097
      %v2099 = vpop.xlane.xlu0 %2098
      %v2100 = vsel %vm853, %v2096, 0.0
      %2101 = vadd.xlane.f32.xlu0 %v2100
      %v2102 = vpop.xlane.xlu0 %2101
      %v2103 = vrcp.pop %v2099
      %v2104 = vrcp.pop %v2102
      %v2105 = vmul.f32 %v2094, %v2103
      %v2106 = vmul.f32 %v2096, %v2104
      %v2107 = vpack.c.bf16 %v2106, %v2105
      %2108 = vrot.lane.b32.xlu0 %v1518, 40
      %v2109 = vpop.permute.xlu0 %2108
      %v2112 = vsel %vm853, %v2107, 0
      %2114 = vmatprep.subr.bf16.mxu0 0
      %2115 = vmatpush1.bf16.msra.mxu0 %v2109
      %2116 = vmatprep.subr.bf16.mxu0 0
      %2117 = vmatpush1.bf16.msra.mxu0 0
      %2118 = vmatprep.subr.bf16.mxu0 0
      %2119 = vmatpush1.bf16.msra.mxu0 0
      %2120 = vmatprep.subr.bf16.mxu0 0
      %2121 = vmatpush1.bf16.msra.mxu0 0
      %2122 = vmatprep.subr.bf16.mxu0 0
      %2123 = vmatpush1.bf16.msra.mxu0 0
      %2124 = vmatprep.subr.bf16.mxu0 0
      %2125 = vmatpush1.bf16.msra.mxu0 0
      %2126 = vmatprep.subr.bf16.mxu0 0
      %2127 = vmatpush1.bf16.msra.mxu0 0
      %2128 = vmatprep.subr.bf16.mxu0 0
      %2129 = vmatpush1.bf16.msra.mxu0 0
      %2130 = vmatprep.subr.bf16.mxu0 0
      %2131 = vmatpush1.bf16.msra.mxu0 0
      %2132 = vmatprep.subr.bf16.mxu0 0
      %2133 = vmatpush1.bf16.msra.mxu0 0
      %2134 = vmatprep.subr.bf16.mxu0 0
      %2135 = vmatpush1.bf16.msra.mxu0 0
      %2136 = vmatprep.subr.bf16.mxu0 0
      %2137 = vmatpush1.bf16.msra.mxu0 0
      %2138 = vmatprep.subr.bf16.mxu0 0
      %2139 = vmatpush1.bf16.msra.mxu0 0
      %2140 = vmatprep.subr.bf16.mxu0 0
      %2141 = vmatpush1.bf16.msra.mxu0 0
      %2142 = vmatprep.subr.bf16.mxu0 0
      %2143 = vmatpush1.bf16.msra.mxu0 0
      %2144 = vmatprep.subr.bf16.mxu0 0
      %2145 = vmatpush1.bf16.msra.mxu0 0
      %2146 = vmatprep.mubr.bf16.mxu0 0
      %2147 = vmatmul.mubr.bf16.gmra.mrb[0].mxu0 %v2112
      %v2148 = vpop.f32.mrb[0].mxu0
      %v2149 = vadd.f32 0.0, %v2148
      %v2150 = vpop.f32.mrb[0].mxu0
      %v2151 = vpop.f32.mrb[0].mxu0
      %v2152 = vadd.f32 0.0, %v2151
      %v2153 = vpop.f32.mrb[0].mxu0
      %2154 = vdwg.mxu0
      %v2155 = vpack.c.bf16 %v2152, %v2149
      %s2156 = scalar_lea.vmem %s13, 12
      %v2157 = vld [vmem:[%s2156] sm:$0xf]
      %v2159 = vsel %vm1522, %v2155, 0
      %v2162 = vsel %vm1769, %v2157, 0
      %2164 = vmatprep.subr.bf16.mxu0 0
      %2165 = vmatpush1.bf16.msra.mxu0 %v2162
      %2166 = vmatprep.subr.bf16.mxu0 0
      %2167 = vmatpush1.bf16.msra.mxu0 0
      %2168 = vmatprep.subr.bf16.mxu0 0
      %2169 = vmatpush1.bf16.msra.mxu0 0
      %2170 = vmatprep.subr.bf16.mxu0 0
      %2171 = vmatpush1.bf16.msra.mxu0 0
      %2172 = vmatprep.subr.bf16.mxu0 0
      %2173 = vmatpush1.bf16.msra.mxu0 0
      %2174 = vmatprep.subr.bf16.mxu0 0
      %2175 = vmatpush1.bf16.msra.mxu0 0
      %2176 = vmatprep.subr.bf16.mxu0 0
      %2177 = vmatpush1.bf16.msra.mxu0 0
      %2178 = vmatprep.subr.bf16.mxu0 0
      %2179 = vmatpush1.bf16.msra.mxu0 0
      %2180 = vmatprep.subr.bf16.mxu0 0
      %2181 = vmatpush1.bf16.msra.mxu0 0
      %2182 = vmatprep.subr.bf16.mxu0 0
      %2183 = vmatpush1.bf16.msra.mxu0 0
      %2184 = vmatprep.subr.bf16.mxu0 0
      %2185 = vmatpush1.bf16.msra.mxu0 0
      %2186 = vmatprep.subr.bf16.mxu0 0
      %2187 = vmatpush1.bf16.msra.mxu0 0
      %2188 = vmatprep.subr.bf16.mxu0 0
      %2189 = vmatpush1.bf16.msra.mxu0 0
      %2190 = vmatprep.subr.bf16.mxu0 0
      %2191 = vmatpush1.bf16.msra.mxu0 0
      %2192 = vmatprep.subr.bf16.mxu0 0
      %2193 = vmatpush1.bf16.msra.mxu0 0
      %2194 = vmatprep.subr.bf16.mxu0 0
      %2195 = vmatpush1.bf16.msra.mxu0 0
      %2196 = vmatprep.mubr.bf16.mxu0 0
      %2197 = vmatmul.mubr.bf16.gmra.mrb[0].mxu0 %v2159
      %v2198 = vpop.f32.mrb[0].mxu0
      %v2199 = vadd.f32 0.0, %v2198
      %v2200 = vpop.f32.mrb[0].mxu0
      %v2201 = vpop.f32.mrb[0].mxu0
      %v2202 = vadd.f32 0.0, %v2201
      %v2203 = vpop.f32.mrb[0].mxu0
      %2204 = vdwg.mxu0
      %v2205 = vadd.f32 %v2032, %v2199
      %v2206 = vadd.f32 %v2033, %v2202
      %v2207 = vadd.f32 %v1403, %v2205
      %v2208 = vadd.f32 %v1404, %v2206
      %v2209 = vld [vmem:[%s14] sm:$0x1]
      %v2211 = vlaneseq
      %v2212 = vshrl.u32 %v2211, 7
      %v2213 = vsub.s32 0, %v2212
      %v2214 = vrot.slane %v2209, %v2213
      %v2216 = vadd.f32 %v2207, %v2214
      %v2217 = vadd.f32 %v2208, %v2214
      %v2218 = vld [vmem:[%s15] sm:$0x1]
      %v2219 = vld [vmem:[%s16] sm:$0x1]
      %v2220 = vsel %vm1215, %v2216, 0.0
      %2221 = vadd.xlane.f32.xlu0 %v2220
      %v2222 = vpop.xlane.xlu0 %2221
      %v2223 = vsel %vm1215, %v2217, 0.0
      %2224 = vadd.xlane.f32.xlu0 %v2223
      %v2225 = vpop.xlane.xlu0 %2224
      %v2226 = vmul.f32 %v2222, %v1413
      %v2227 = vmul.f32 %v2225, %v1413
      %v2228 = vsub.f32 %v2216, %v2226
      %v2229 = vsub.f32 %v2217, %v2227
      %v2230 = vmul.f32 %v2228, %v2228
      %v2231 = vmul.f32 %v2229, %v2229
      %v2232 = vsel %vm1215, %v2230, 0.0
      %2233 = vadd.xlane.f32.xlu0 %v2232
      %v2234 = vpop.xlane.xlu0 %2233
      %v2235 = vsel %vm1215, %v2231, 0.0
      %2236 = vadd.xlane.f32.xlu0 %v2235
      %v2237 = vpop.xlane.xlu0 %2236
      %v2238 = vmul.f32 %v2234, %v1413
      %v2239 = vmul.f32 %v2237, %v1413
      %v2240 = vadd.f32 %v2238, 1e-05
      %v2241 = vadd.f32 %v2239, 1e-05
      %v2242 = vrsqrt.pop %v2240
      %v2243 = vrsqrt.pop %v2241
      %v2244 = vmul.f32 %v2228, %v2242
      %v2245 = vmul.f32 %v2229, %v2243
      %v2247 = vlaneseq
      %v2248 = vshrl.u32 %v2247, 7
      %v2249 = vsub.s32 0, %v2248
      %v2250 = vrot.slane %v2218, %v2249
      %v2252 = vmul.f32 %v2244, %v2250
      %v2253 = vmul.f32 %v2245, %v2250
      %v2255 = vlaneseq
      %v2256 = vshrl.u32 %v2255, 7
      %v2257 = vsub.s32 0, %v2256
      %v2258 = vrot.slane %v2219, %v2257
      %v2260 = vadd.f32 %v2252, %v2258
      %v2261 = vadd.f32 %v2253, %v2258
      %v2262 = vpack.c.bf16 %v2261, %v2260
      %v2263 = vld [vmem:[%s17] sm:$0xf]
      %v2264 = vld [vmem:[%s17 + $0x4] sm:$0xf]
      %v2265 = vld [vmem:[%s17 + $0x8] sm:$0xf]
      %v2266 = vld [vmem:[%s17 + $0xc] sm:$0xf]
      %v2267 = vld [vmem:[%s18] sm:$0x1]
      %v2269 = vlaneseq
      %v2270 = vshrl.u32 %v2269, 7
      %v2271 = vsub.s32 0, %v2270
      %v2272 = vrot.slane %v2267, %v2271
      %v2278 = vunpack.c.l.b16 %v2263
      %v2279 = vunpack.c.l.b16 %v2264
      %v2280 = vunpack.c.l.b16 %v2265
      %v2281 = vunpack.c.l.b16 %v2266
      %v2282 = vpack.c.b16 %v2279, %v2278
      %v2283 = vpack.c.b16 %v2281, %v2280
      %v2287 = vsel %vm1215, %v2262, 0
      %2289 = vmatprep.subr.bf16.mxu0 0
      %2290 = vmatpush1.bf16.msra.mxu0 %v2282
      %2291 = vmatprep.subr.bf16.mxu0 0
      %2292 = vmatpush1.bf16.msra.mxu0 %v2283
      %2293 = vmatprep.subr.bf16.mxu0 0
      %2294 = vmatpush1.bf16.msra.mxu0 0
      %2295 = vmatprep.subr.bf16.mxu0 0
      %2296 = vmatpush1.bf16.msra.mxu0 0
      %2297 = vmatprep.subr.bf16.mxu0 0
      %2298 = vmatpush1.bf16.msra.mxu0 0
      %2299 = vmatprep.subr.bf16.mxu0 0
      %2300 = vmatpush1.bf16.msra.mxu0 0
      %2301 = vmatprep.subr.bf16.mxu0 0
      %2302 = vmatpush1.bf16.msra.mxu0 0
      %2303 = vmatprep.subr.bf16.mxu0 0
      %2304 = vmatpush1.bf16.msra.mxu0 0
      %2305 = vmatprep.subr.bf16.mxu0 0
      %2306 = vmatpush1.bf16.msra.mxu0 0
      %2307 = vmatprep.subr.bf16.mxu0 0
      %2308 = vmatpush1.bf16.msra.mxu0 0
      %2309 = vmatprep.subr.bf16.mxu0 0
      %2310 = vmatpush1.bf16.msra.mxu0 0
      %2311 = vmatprep.subr.bf16.mxu0 0
      %2312 = vmatpush1.bf16.msra.mxu0 0
      %2313 = vmatprep.subr.bf16.mxu0 0
      %2314 = vmatpush1.bf16.msra.mxu0 0
      %2315 = vmatprep.subr.bf16.mxu0 0
      %2316 = vmatpush1.bf16.msra.mxu0 0
      %2317 = vmatprep.subr.bf16.mxu0 0
      %2318 = vmatpush1.bf16.msra.mxu0 0
      %2319 = vmatprep.subr.bf16.mxu0 0
      %2320 = vmatpush1.bf16.msra.mxu0 0
      %2321 = vmatprep.mubr.bf16.mxu0 0
      %2322 = vmatmul.mubr.bf16.gmra.mrb[0].mxu0 %v2287
      %v2323 = vpop.f32.mrb[0].mxu0
      %v2324 = vadd.f32 %v2272, %v2323
      %v2325 = vpop.f32.mrb[0].mxu0
      %v2326 = vpop.f32.mrb[0].mxu0
      %v2327 = vadd.f32 %v2272, %v2326
      %v2328 = vpop.f32.mrb[0].mxu0
      %2329 = vdwg.mxu0
      %v2330 = vmul.f32 %v2324, 0.5
      %v2331 = vmul.f32 %v2327, 0.5
      %v2332 = vmul.f32 %v2324, 0.044715
      %v2333 = vmul.f32 %v2327, 0.044715
      %v2334 = vmul.f32 %v2332, %v2324
      %v2335 = vmul.f32 %v2333, %v2327
      %v2336 = vmul.f32 %v2334, %v2324
      %v2337 = vmul.f32 %v2335, %v2327
      %v2338 = vadd.f32 %v2324, %v2336
      %v2339 = vadd.f32 %v2327, %v2337
      %v2340 = vmul.f32 %v2338, 0.7978846
      %v2341 = vmul.f32 %v2339, 0.7978846
      %v2342 = vtanh.pop %v2340
      %v2343 = vtanh.pop %v2341
      %v2344 = vadd.f32 %v2342, 1.0
      %v2345 = vadd.f32 %v2343, 1.0
      %v2346 = vmul.f32 %v2330, %v2344
      %v2347 = vmul.f32 %v2331, %v2345
      %v2348 = vpack.c.bf16 %v2347, %v2346
      %v2349 = vld [vmem:[%s19] sm:$0xf]
      %v2350 = vld [vmem:[%s19 + $0x4] sm:$0xf]
      %v2351 = vld [vmem:[%s19 + $0x8] sm:$0xf]
      %v2352 = vld [vmem:[%s19 + $0xc] sm:$0xf]
      %v2353 = vld [vmem:[%s19 + $0x10] sm:$0xf]
      %v2354 = vld [vmem:[%s19 + $0x14] sm:$0xf]
      %v2355 = vld [vmem:[%s19 + $0x18] sm:$0xf]
      %v2356 = vld [vmem:[%s19 + $0x1c] sm:$0xf]
      %v2365 = vunpack.c.l.b16 %v2349
      %v2366 = vunpack.c.l.b16 %v2350
      %v2367 = vunpack.c.l.b16 %v2351
      %v2368 = vunpack.c.l.b16 %v2352
      %v2369 = vunpack.c.l.b16 %v2353
      %v2370 = vunpack.c.l.b16 %v2354
      %v2371 = vunpack.c.l.b16 %v2355
      %v2372 = vunpack.c.l.b16 %v2356
      %v2373 = vpack.c.b16 %v2366, %v2365
      %v2374 = vpack.c.b16 %v2368, %v2367
      %v2375 = vpack.c.b16 %v2370, %v2369
      %v2376 = vpack.c.b16 %v2372, %v2371
      %vm2381 = vcmask 523264
      %v2383 = vsel %vm2381, %v2348, 0
      %2385 = vmatprep.subr.bf16.mxu0 0
      %2386 = vmatpush1.bf16.msra.mxu0 %v2373
      %2387 = vmatprep.subr.bf16.mxu0 0
      %2388 = vmatpush1.bf16.msra.mxu0 %v2374
      %2389 = vmatprep.subr.bf16.mxu0 0
      %2390 = vmatpush1.bf16.msra.mxu0 %v2375
      %2391 = vmatprep.subr.bf16.mxu0 0
      %2392 = vmatpush1.bf16.msra.mxu0 %v2376
      %2393 = vmatprep.subr.bf16.mxu0 0
      %2394 = vmatpush1.bf16.msra.mxu0 0
      %2395 = vmatprep.subr.bf16.mxu0 0
      %2396 = vmatpush1.bf16.msra.mxu0 0
      %2397 = vmatprep.subr.bf16.mxu0 0
      %2398 = vmatpush1.bf16.msra.mxu0 0
      %2399 = vmatprep.subr.bf16.mxu0 0
      %2400 = vmatpush1.bf16.msra.mxu0 0
      %2401 = vmatprep.subr.bf16.mxu0 0
      %2402 = vmatpush1.bf16.msra.mxu0 0
      %2403 = vmatprep.subr.bf16.mxu0 0
      %2404 = vmatpush1.bf16.msra.mxu0 0
      %2405 = vmatprep.subr.bf16.mxu0 0
      %2406 = vmatpush1.bf16.msra.mxu0 0
      %2407 = vmatprep.subr.bf16.mxu0 0
      %2408 = vmatpush1.bf16.msra.mxu0 0
      %2409 = vmatprep.subr.bf16.mxu0 0
      %2410 = vmatpush1.bf16.msra.mxu0 0
      %2411 = vmatprep.subr.bf16.mxu0 0
      %2412 = vmatpush1.bf16.msra.mxu0 0
      %2413 = vmatprep.subr.bf16.mxu0 0
      %2414 = vmatpush1.bf16.msra.mxu0 0
      %2415 = vmatprep.subr.bf16.mxu0 0
      %2416 = vmatpush1.bf16.msra.mxu0 0
      %2417 = vmatprep.mubr.bf16.mxu0 0
      %2418 = vmatmul.mubr.bf16.gmra.mrb[0].mxu0 %v2383
      %v2419 = vpop.f32.mrb[0].mxu0
      %v2420 = vadd.f32 0.0, %v2419
      %v2421 = vpop.f32.mrb[0].mxu0
      %v2422 = vpop.f32.mrb[0].mxu0
      %v2423 = vadd.f32 0.0, %v2422
      %v2424 = vpop.f32.mrb[0].mxu0
      %2425 = vdwg.mxu0
      %v2426 = vadd.f32 %v2216, %v2420
      %v2427 = vadd.f32 %v2217, %v2423
      %v2428 = vld [vmem:[%s20] sm:$0x1]
      %v2430 = vlaneseq
      %v2431 = vshrl.u32 %v2430, 7
      %v2432 = vsub.s32 0, %v2431
      %v2433 = vrot.slane %v2428, %v2432
      %v2435 = vadd.f32 %v2426, %v2433
      %v2436 = vadd.f32 %v2427, %v2433
      %s2437 = scalar_lea.vmem %s9, 1
      %v2438 = vld [vmem:[%s2437] sm:$0x1]
      %s2439 = scalar_lea.vmem %s10, 1
      %v2440 = vld [vmem:[%s2439] sm:$0x1]
      %v2441 = vsel %vm1215, %v2435, 0.0
      %2442 = vadd.xlane.f32.xlu0 %v2441
      %v2443 = vpop.xlane.xlu0 %2442
      %v2444 = vsel %vm1215, %v2436, 0.0
      %2445 = vadd.xlane.f32.xlu0 %v2444
      %v2446 = vpop.xlane.xlu0 %2445
      %v2447 = vmul.f32 %v2443, %v1413
      %v2448 = vmul.f32 %v2446, %v1413
      %v2449 = vsub.f32 %v2435, %v2447
      %v2450 = vsub.f32 %v2436, %v2448
      %v2451 = vmul.f32 %v2449, %v2449
      %v2452 = vmul.f32 %v2450, %v2450
      %v2453 = vsel %vm1215, %v2451, 0.0
      %2454 = vadd.xlane.f32.xlu0 %v2453
      %v2455 = vpop.xlane.xlu0 %2454
      %v2456 = vsel %vm1215, %v2452, 0.0
      %2457 = vadd.xlane.f32.xlu0 %v2456
      %v2458 = vpop.xlane.xlu0 %2457
      %v2459 = vmul.f32 %v2455, %v1413
      %v2460 = vmul.f32 %v2458, %v1413
      %v2461 = vadd.f32 %v2459, 1e-05
      %v2462 = vadd.f32 %v2460, 1e-05
      %v2463 = vrsqrt.pop %v2461
      %v2464 = vrsqrt.pop %v2462
      %v2465 = vmul.f32 %v2449, %v2463
      %v2466 = vmul.f32 %v2450, %v2464
      %v2468 = vlaneseq
      %v2469 = vshrl.u32 %v2468, 7
      %v2470 = vsub.s32 0, %v2469
      %v2471 = vrot.slane %v2438, %v2470
      %v2473 = vmul.f32 %v2465, %v2471
      %v2474 = vmul.f32 %v2466, %v2471
      %v2476 = vlaneseq
      %v2477 = vshrl.u32 %v2476, 7
      %v2478 = vsub.s32 0, %v2477
      %v2479 = vrot.slane %v2440, %v2478
      %v2481 = vadd.f32 %v2473, %v2479
      %v2482 = vadd.f32 %v2474, %v2479
      %v2483 = vpack.c.bf16 %v2482, %v2481
      %s2484 = scalar_lea.vmem %s11, 16
      %v2485 = vld [vmem:[%s2484] sm:$0xf]
      %v2486 = vld [vmem:[%s2484 + $0x4] sm:$0xf]
      %v2487 = vld [vmem:[%s2484 + $0x8] sm:$0xf]
      %v2488 = vld [vmem:[%s2484 + $0xc] sm:$0xf]
      %s2489 = scalar_lea.vmem %s12, 1
      %v2490 = vld [vmem:[%s2489] sm:$0x1]
      %v2492 = vlaneseq
      %v2493 = vshrl.u32 %v2492, 7
      %v2494 = vsub.s32 0, %v2493
      %v2495 = vrot.slane %v2490, %v2494
      %v2501 = vunpack.c.l.b16 %v2485
      %v2502 = vunpack.c.l.b16 %v2486
      %v2503 = vunpack.c.l.b16 %v2487
      %v2504 = vunpack.c.l.b16 %v2488
      %v2505 = vpack.c.b16 %v2502, %v2501
      %v2506 = vpack.c.b16 %v2504, %v2503
      %v2510 = vsel %vm1215, %v2483, 0
      %2512 = vmatprep.subr.bf16.mxu0 0
      %2513 = vmatpush1.bf16.msra.mxu0 %v2505
      %2514 = vmatprep.subr.bf16.mxu0 0
      %2515 = vmatpush1.bf16.msra.mxu0 %v2506
      %2516 = vmatprep.subr.bf16.mxu0 0
      %2517 = vmatpush1.bf16.msra.mxu0 0
      %2518 = vmatprep.subr.bf16.mxu0 0
      %2519 = vmatpush1.bf16.msra.mxu0 0
      %2520 = vmatprep.subr.bf16.mxu0 0
      %2521 = vmatpush1.bf16.msra.mxu0 0
      %2522 = vmatprep.subr.bf16.mxu0 0
      %2523 = vmatpush1.bf16.msra.mxu0 0
      %2524 = vmatprep.subr.bf16.mxu0 0
      %2525 = vmatpush1.bf16.msra.mxu0 0
      %2526 = vmatprep.subr.bf16.mxu0 0
      %2527 = vmatpush1.bf16.msra.mxu0 0
      %2528 = vmatprep.subr.bf16.mxu0 0
      %2529 = vmatpush1.bf16.msra.mxu0 0
      %2530 = vmatprep.subr.bf16.mxu0 0
      %2531 = vmatpush1.bf16.msra.mxu0 0
      %2532 = vmatprep.subr.bf16.mxu0 0
      %2533 = vmatpush1.bf16.msra.mxu0 0
      %2534 = vmatprep.subr.bf16.mxu0 0
      %2535 = vmatpush1.bf16.msra.mxu0 0
      %2536 = vmatprep.subr.bf16.mxu0 0
      %2537 = vmatpush1.bf16.msra.mxu0 0
      %2538 = vmatprep.subr.bf16.mxu0 0
      %2539 = vmatpush1.bf16.msra.mxu0 0
      %2540 = vmatprep.subr.bf16.mxu0 0
      %2541 = vmatpush1.bf16.msra.mxu0 0
      %2542 = vmatprep.subr.bf16.mxu0 0
      %2543 = vmatpush1.bf16.msra.mxu0 0
      %2544 = vmatprep.mubr.bf16.mxu0 0
      %2545 = vmatmul.mubr.bf16.gmra.mrb[0].mxu0 %v2510
      %v2546 = vpop.f32.mrb[0].mxu0
      %v2547 = vadd.f32 %v2495, %v2546
      %v2548 = vpop.f32.mrb[0].mxu0
      %v2549 = vpop.f32.mrb[0].mxu0
      %v2550 = vadd.f32 %v2495, %v2549
      %v2551 = vpop.f32.mrb[0].mxu0
      %2552 = vdwg.mxu0
      %v2553 = vpack.c.bf16 %v2550, %v2547
      %2555 = vrot.lane.b32.xlu0 %v2553, 96
      %v2556 = vpop.permute.xlu0 %2555
      %v2558 = vsel %vm1522, %v2553, 0
      %v2561 = vsel %vm1522, %v2556, 0
      %2563 = vmatprep.subr.bf16.mxu0 0
      %2564 = vmatpush1.bf16.xpose.msra.mxu0 %v2561
      %2565 = vmatprep.subr.bf16.mxu0 0
      %2566 = vmatpush1.bf16.xpose.msra.mxu0 0
      %2567 = vmatprep.subr.bf16.mxu0 0
      %2568 = vmatpush1.bf16.xpose.msra.mxu0 0
      %2569 = vmatprep.subr.bf16.mxu0 0
      %2570 = vmatpush1.bf16.xpose.msra.mxu0 0
      %2571 = vmatprep.subr.bf16.mxu0 0
      %2572 = vmatpush1.bf16.xpose.msra.mxu0 0
      %2573 = vmatprep.subr.bf16.mxu0 0
      %2574 = vmatpush1.bf16.xpose.msra.mxu0 0
      %2575 = vmatprep.subr.bf16.mxu0 0
      %2576 = vmatpush1.bf16.xpose.msra.mxu0 0
      %2577 = vmatprep.subr.bf16.mxu0 0
      %2578 = vmatpush1.bf16.xpose.msra.mxu0 0
      %2579 = vmatprep.subr.bf16.mxu0 0
      %2580 = vmatpush1.bf16.xpose.msra.mxu0 0
      %2581 = vmatprep.subr.bf16.mxu0 0
      %2582 = vmatpush1.bf16.xpose.msra.mxu0 0
      %2583 = vmatprep.subr.bf16.mxu0 0
      %2584 = vmatpush1.bf16.xpose.msra.mxu0 0
      %2585 = vmatprep.subr.bf16.mxu0 0
      %2586 = vmatpush1.bf16.xpose.msra.mxu0 0
      %2587 = vmatprep.subr.bf16.mxu0 0
      %2588 = vmatpush1.bf16.xpose.msra.mxu0 0
      %2589 = vmatprep.subr.bf16.mxu0 0
      %2590 = vmatpush1.bf16.xpose.msra.mxu0 0
      %2591 = vmatprep.subr.bf16.mxu0 0
      %2592 = vmatpush1.bf16.xpose.msra.mxu0 0
      %2593 = vmatprep.subr.bf16.mxu0 0
      %2594 = vmatpush1.bf16.xpose.msra.mxu0 0
      %2595 = vmatprep.mubr.bf16.mxu0 0
      %2596 = vmatmul.mubr.bf16.gmra.mrb[0].mxu0 %v2558
      %v2597 = vpop.f32.mrb[0].mxu0
      %v2598 = vadd.f32 0.0, %v2597
      %v2599 = vpop.f32.mrb[0].mxu0
      %v2600 = vpop.f32.mrb[0].mxu0
      %v2601 = vadd.f32 0.0, %v2600
      %v2602 = vpop.f32.mrb[0].mxu0
      %2603 = vdwg.mxu0
      %v2604 = vsel %vm853, %v2598, -inf
      %2605 = vmax.xlane.f32.xlu0 %v2604
      %v2606 = vpop.xlane.xlu0 %2605
      %v2607 = vsel %vm853, %v2601, -inf
      %2608 = vmax.xlane.f32.xlu0 %v2607
      %v2609 = vpop.xlane.xlu0 %2608
      %v2610 = vsub.f32 %v2598, %v2606
      %v2611 = vsub.f32 %v2601, %v2609
      %v2612 = vmul.f32 %v2610, 1.442695
      %v2613 = vpow.pop %v2612
      %v2614 = vmul.f32 %v2611, 1.442695
      %v2615 = vpow.pop %v2614
      %v2616 = vsel %vm853, %v2613, 0.0
      %2617 = vadd.xlane.f32.xlu0 %v2616
      %v2618 = vpop.xlane.xlu0 %2617
      %v2619 = vsel %vm853, %v2615, 0.0
      %2620 = vadd.xlane.f32.xlu0 %v2619
      %v2621 = vpop.xlane.xlu0 %2620
      %v2622 = vrcp.pop %v2618
      %v2623 = vrcp.pop %v2621
      %v2624 = vmul.f32 %v2613, %v2622
      %v2625 = vmul.f32 %v2615, %v2623
      %v2626 = vpack.c.bf16 %v2625, %v2624
      %2627 = vrot.lane.b32.xlu0 %v2553, 64
      %v2628 = vpop.permute.xlu0 %2627
      %v2631 = vsel %vm853, %v2626, 0
      %2633 = vmatprep.subr.bf16.mxu0 0
      %2634 = vmatpush1.bf16.msra.mxu0 %v2628
      %2635 = vmatprep.subr.bf16.mxu0 0
      %2636 = vmatpush1.bf16.msra.mxu0 0
      %2637 = vmatprep.subr.bf16.mxu0 0
      %2638 = vmatpush1.bf16.msra.mxu0 0
      %2639 = vmatprep.subr.bf16.mxu0 0
      %2640 = vmatpush1.bf16.msra.mxu0 0
      %2641 = vmatprep.subr.bf16.mxu0 0
      %2642 = vmatpush1.bf16.msra.mxu0 0
      %2643 = vmatprep.subr.bf16.mxu0 0
      %2644 = vmatpush1.bf16.msra.mxu0 0
      %2645 = vmatprep.subr.bf16.mxu0 0
      %2646 = vmatpush1.bf16.msra.mxu0 0
      %2647 = vmatprep.subr.bf16.mxu0 0
      %2648 = vmatpush1.bf16.msra.mxu0 0
      %2649 = vmatprep.subr.bf16.mxu0 0
      %2650 = vmatpush1.bf16.msra.mxu0 0
      %2651 = vmatprep.subr.bf16.mxu0 0
      %2652 = vmatpush1.bf16.msra.mxu0 0
      %2653 = vmatprep.subr.bf16.mxu0 0
      %2654 = vmatpush1.bf16.msra.mxu0 0
      %2655 = vmatprep.subr.bf16.mxu0 0
      %2656 = vmatpush1.bf16.msra.mxu0 0
      %2657 = vmatprep.subr.bf16.mxu0 0
      %2658 = vmatpush1.bf16.msra.mxu0 0
      %2659 = vmatprep.subr.bf16.mxu0 0
      %2660 = vmatpush1.bf16.msra.mxu0 0
      %2661 = vmatprep.subr.bf16.mxu0 0
      %2662 = vmatpush1.bf16.msra.mxu0 0
      %2663 = vmatprep.subr.bf16.mxu0 0
      %2664 = vmatpush1.bf16.msra.mxu0 0
      %2665 = vmatprep.mubr.bf16.mxu0 0
      %2666 = vmatmul.mubr.bf16.gmra.mrb[0].mxu0 %v2631
      %v2667 = vpop.f32.mrb[0].mxu0
      %v2668 = vadd.f32 0.0, %v2667
      %v2669 = vpop.f32.mrb[0].mxu0
      %v2670 = vpop.f32.mrb[0].mxu0
      %v2671 = vadd.f32 0.0, %v2670
      %v2672 = vpop.f32.mrb[0].mxu0
      %2673 = vdwg.mxu0
      %v2674 = vpack.c.bf16 %v2671, %v2668
      %s2675 = scalar_lea.vmem %s13, 16
      %v2676 = vld [vmem:[%s2675] sm:$0xf]
      %2677 = vrot.lane.b32.xlu0 %v2553, 120
      %v2678 = vpop.permute.xlu0 %2677
      %2679 = vrot.lane.b32.xlu0 %v2553, 88
      %v2680 = vpop.permute.xlu0 %2679
      %v2682 = vsel %vm1522, %v2678, 0
      %v2685 = vsel %vm1522, %v2680, 0
      %2687 = vmatprep.subr.bf16.mxu0 0
      %2688 = vmatpush1.bf16.xpose.msra.mxu0 %v2685
      %2689 = vmatprep.subr.bf16.mxu0 0
      %2690 = vmatpush1.bf16.xpose.msra.mxu0 0
      %2691 = vmatprep.subr.bf16.mxu0 0
      %2692 = vmatpush1.bf16.xpose.msra.mxu0 0
      %2693 = vmatprep.subr.bf16.mxu0 0
      %2694 = vmatpush1.bf16.xpose.msra.mxu0 0
      %2695 = vmatprep.subr.bf16.mxu0 0
      %2696 = vmatpush1.bf16.xpose.msra.mxu0 0
      %2697 = vmatprep.subr.bf16.mxu0 0
      %2698 = vmatpush1.bf16.xpose.msra.mxu0 0
      %2699 = vmatprep.subr.bf16.mxu0 0
      %2700 = vmatpush1.bf16.xpose.msra.mxu0 0
      %2701 = vmatprep.subr.bf16.mxu0 0
      %2702 = vmatpush1.bf16.xpose.msra.mxu0 0
      %2703 = vmatprep.subr.bf16.mxu0 0
      %2704 = vmatpush1.bf16.xpose.msra.mxu0 0
      %2705 = vmatprep.subr.bf16.mxu0 0
      %2706 = vmatpush1.bf16.xpose.msra.mxu0 0
      %2707 = vmatprep.subr.bf16.mxu0 0
      %2708 = vmatpush1.bf16.xpose.msra.mxu0 0
      %2709 = vmatprep.subr.bf16.mxu0 0
      %2710 = vmatpush1.bf16.xpose.msra.mxu0 0
      %2711 = vmatprep.subr.bf16.mxu0 0
      %2712 = vmatpush1.bf16.xpose.msra.mxu0 0
      %2713 = vmatprep.subr.bf16.mxu0 0
      %2714 = vmatpush1.bf16.xpose.msra.mxu0 0
      %2715 = vmatprep.subr.bf16.mxu0 0
      %2716 = vmatpush1.bf16.xpose.msra.mxu0 0
      %2717 = vmatprep.subr.bf16.mxu0 0
      %2718 = vmatpush1.bf16.xpose.msra.mxu0 0
      %2719 = vmatprep.mubr.bf16.mxu0 0
      %2720 = vmatmul.mubr.bf16.gmra.mrb[0].mxu0 %v2682
      %v2721 = vpop.f32.mrb[0].mxu0
      %v2722 = vadd.f32 0.0, %v2721
      %v2723 = vpop.f32.mrb[0].mxu0
      %v2724 = vpop.f32.mrb[0].mxu0
      %v2725 = vadd.f32 0.0, %v2724
      %v2726 = vpop.f32.mrb[0].mxu0
      %2727 = vdwg.mxu0
      %v2728 = vsel %vm853, %v2722, -inf
      %2729 = vmax.xlane.f32.xlu0 %v2728
      %v2730 = vpop.xlane.xlu0 %2729
      %v2731 = vsel %vm853, %v2725, -inf
      %2732 = vmax.xlane.f32.xlu0 %v2731
      %v2733 = vpop.xlane.xlu0 %2732
      %v2734 = vsub.f32 %v2722, %v2730
      %v2735 = vsub.f32 %v2725, %v2733
      %v2736 = vmul.f32 %v2734, 1.442695
      %v2737 = vpow.pop %v2736
      %v2738 = vmul.f32 %v2735, 1.442695
      %v2739 = vpow.pop %v2738
      %v2740 = vsel %vm853, %v2737, 0.0
      %2741 = vadd.xlane.f32.xlu0 %v2740
      %v2742 = vpop.xlane.xlu0 %2741
      %v2743 = vsel %vm853, %v2739, 0.0
      %2744 = vadd.xlane.f32.xlu0 %v2743
      %v2745 = vpop.xlane.xlu0 %2744
      %v2746 = vrcp.pop %v2742
      %v2747 = vrcp.pop %v2745
      %v2748 = vmul.f32 %v2737, %v2746
      %v2749 = vmul.f32 %v2739, %v2747
      %v2750 = vpack.c.bf16 %v2749, %v2748
      %2751 = vrot.lane.b32.xlu0 %v2553, 56
      %v2752 = vpop.permute.xlu0 %2751
      %v2755 = vsel %vm853, %v2750, 0
      %2757 = vmatprep.subr.bf16.mxu0 0
      %2758 = vmatpush1.bf16.msra.mxu0 %v2752
      %2759 = vmatprep.subr.bf16.mxu0 0
      %2760 = vmatpush1.bf16.msra.mxu0 0
      %2761 = vmatprep.subr.bf16.mxu0 0
      %2762 = vmatpush1.bf16.msra.mxu0 0
      %2763 = vmatprep.subr.bf16.mxu0 0
      %2764 = vmatpush1.bf16.msra.mxu0 0
      %2765 = vmatprep.subr.bf16.mxu0 0
      %2766 = vmatpush1.bf16.msra.mxu0 0
      %2767 = vmatprep.subr.bf16.mxu0 0
      %2768 = vmatpush1.bf16.msra.mxu0 0
      %2769 = vmatprep.subr.bf16.mxu0 0
      %2770 = vmatpush1.bf16.msra.mxu0 0
      %2771 = vmatprep.subr.bf16.mxu0 0
      %2772 = vmatpush1.bf16.msra.mxu0 0
      %2773 = vmatprep.subr.bf16.mxu0 0
      %2774 = vmatpush1.bf16.msra.mxu0 0
      %2775 = vmatprep.subr.bf16.mxu0 0
      %2776 = vmatpush1.bf16.msra.mxu0 0
      %2777 = vmatprep.subr.bf16.mxu0 0
      %2778 = vmatpush1.bf16.msra.mxu0 0
      %2779 = vmatprep.subr.bf16.mxu0 0
      %2780 = vmatpush1.bf16.msra.mxu0 0
      %2781 = vmatprep.subr.bf16.mxu0 0
      %2782 = vmatpush1.bf16.msra.mxu0 0
      %2783 = vmatprep.subr.bf16.mxu0 0
      %2784 = vmatpush1.bf16.msra.mxu0 0
      %2785 = vmatprep.subr.bf16.mxu0 0
      %2786 = vmatpush1.bf16.msra.mxu0 0
      %2787 = vmatprep.subr.bf16.mxu0 0
      %2788 = vmatpush1.bf16.msra.mxu0 0
      %2789 = vmatprep.mubr.bf16.mxu0 0
      %2790 = vmatmul.mubr.bf16.gmra.mrb[0].mxu0 %v2755
      %v2791 = vpop.f32.mrb[0].mxu0
      %v2792 = vadd.f32 0.0, %v2791
      %v2793 = vpop.f32.mrb[0].mxu0
      %v2794 = vpop.f32.mrb[0].mxu0
      %v2795 = vadd.f32 0.0, %v2794
      %v2796 = vpop.f32.mrb[0].mxu0
      %2797 = vdwg.mxu0
      %v2798 = vpack.c.bf16 %v2795, %v2792
      %s2799 = scalar_lea.vmem %s13, 20
      %v2800 = vld [vmem:[%s2799] sm:$0xf]
      %v2802 = vsel %vm1522, %v2798, 0
      %v2805 = vsel %vm1769, %v2800, 0
      %2807 = vmatprep.subr.bf16.mxu0 0
      %2808 = vmatpush1.bf16.msra.mxu0 %v2805
      %2809 = vmatprep.subr.bf16.mxu0 0
      %2810 = vmatpush1.bf16.msra.mxu0 0
      %2811 = vmatprep.subr.bf16.mxu0 0
      %2812 = vmatpush1.bf16.msra.mxu0 0
      %2813 = vmatprep.subr.bf16.mxu0 0
      %2814 = vmatpush1.bf16.msra.mxu0 0
      %2815 = vmatprep.subr.bf16.mxu0 0
      %2816 = vmatpush1.bf16.msra.mxu0 0
      %2817 = vmatprep.subr.bf16.mxu0 0
      %2818 = vmatpush1.bf16.msra.mxu0 0
      %2819 = vmatprep.subr.bf16.mxu0 0
      %2820 = vmatpush1.bf16.msra.mxu0 0
      %2821 = vmatprep.subr.bf16.mxu0 0
      %2822 = vmatpush1.bf16.msra.mxu0 0
      %2823 = vmatprep.subr.bf16.mxu0 0
      %2824 = vmatpush1.bf16.msra.mxu0 0
      %2825 = vmatprep.subr.bf16.mxu0 0
      %2826 = vmatpush1.bf16.msra.mxu0 0
      %2827 = vmatprep.subr.bf16.mxu0 0
      %2828 = vmatpush1.bf16.msra.mxu0 0
      %2829 = vmatprep.subr.bf16.mxu0 0
      %2830 = vmatpush1.bf16.msra.mxu0 0
      %2831 = vmatprep.subr.bf16.mxu0 0
      %2832 = vmatpush1.bf16.msra.mxu0 0
      %2833 = vmatprep.subr.bf16.mxu0 0
      %2834 = vmatpush1.bf16.msra.mxu0 0
      %2835 = vmatprep.subr.bf16.mxu0 0
      %2836 = vmatpush1.bf16.msra.mxu0 0
      %2837 = vmatprep.subr.bf16.mxu0 0
      %2838 = vmatpush1.bf16.msra.mxu0 0
      %2839 = vmatprep.mubr.bf16.mxu0 0
      %2840 = vmatmul.mubr.bf16.gmra.mrb[0].mxu0 %v2802
      %v2841 = vpop.f32.mrb[0].mxu0
      %v2842 = vadd.f32 0.0, %v2841
      %v2843 = vpop.f32.mrb[0].mxu0
      %v2844 = vpop.f32.mrb[0].mxu0
      %v2845 = vadd.f32 0.0, %v2844
      %v2846 = vpop.f32.mrb[0].mxu0
      %2847 = vdwg.mxu0
      %v2849 = vsel %vm1522, %v2674, 0
      %v2852 = vsel %vm1769, %v2676, 0
      %2854 = vmatprep.subr.bf16.mxu0 0
      %2855 = vmatpush1.bf16.msra.mxu0 %v2852
      %2856 = vmatprep.subr.bf16.mxu0 0
      %2857 = vmatpush1.bf16.msra.mxu0 0
      %2858 = vmatprep.subr.bf16.mxu0 0
      %2859 = vmatpush1.bf16.msra.mxu0 0
      %2860 = vmatprep.subr.bf16.mxu0 0
      %2861 = vmatpush1.bf16.msra.mxu0 0
      %2862 = vmatprep.subr.bf16.mxu0 0
      %2863 = vmatpush1.bf16.msra.mxu0 0
      %2864 = vmatprep.subr.bf16.mxu0 0
      %2865 = vmatpush1.bf16.msra.mxu0 0
      %2866 = vmatprep.subr.bf16.mxu0 0
      %2867 = vmatpush1.bf16.msra.mxu0 0
      %2868 = vmatprep.subr.bf16.mxu0 0
      %2869 = vmatpush1.bf16.msra.mxu0 0
      %2870 = vmatprep.subr.bf16.mxu0 0
      %2871 = vmatpush1.bf16.msra.mxu0 0
      %2872 = vmatprep.subr.bf16.mxu0 0
      %2873 = vmatpush1.bf16.msra.mxu0 0
      %2874 = vmatprep.subr.bf16.mxu0 0
      %2875 = vmatpush1.bf16.msra.mxu0 0
      %2876 = vmatprep.subr.bf16.mxu0 0
      %2877 = vmatpush1.bf16.msra.mxu0 0
      %2878 = vmatprep.subr.bf16.mxu0 0
      %2879 = vmatpush1.bf16.msra.mxu0 0
      %2880 = vmatprep.subr.bf16.mxu0 0
      %2881 = vmatpush1.bf16.msra.mxu0 0
      %2882 = vmatprep.subr.bf16.mxu0 0
      %2883 = vmatpush1.bf16.msra.mxu0 0
      %2884 = vmatprep.subr.bf16.mxu0 0
      %2885 = vmatpush1.bf16.msra.mxu0 0
      %2886 = vmatprep.mubr.bf16.mxu0 0
      %2887 = vmatmul.mubr.bf16.gmra.mrb[0].mxu0 %v2849
      %v2888 = vpop.f32.mrb[0].mxu0
      %v2889 = vadd.f32 %v2842, %v2888
      %v2890 = vpop.f32.mrb[0].mxu0
      %v2891 = vpop.f32.mrb[0].mxu0
      %v2892 = vadd.f32 %v2845, %v2891
      %v2893 = vpop.f32.mrb[0].mxu0
      %2894 = vdwg.mxu0
      %2895 = vrot.lane.b32.xlu0 %v2553, 112
      %v2896 = vpop.permute.xlu0 %2895
      %2897 = vrot.lane.b32.xlu0 %v2553, 80
      %v2898 = vpop.permute.xlu0 %2897
      %v2900 = vsel %vm1522, %v2896, 0
      %v2903 = vsel %vm1522, %v2898, 0
      %2905 = vmatprep.subr.bf16.mxu0 0
      %2906 = vmatpush1.bf16.xpose.msra.mxu0 %v2903
      %2907 = vmatprep.subr.bf16.mxu0 0
      %2908 = vmatpush1.bf16.xpose.msra.mxu0 0
      %2909 = vmatprep.subr.bf16.mxu0 0
      %2910 = vmatpush1.bf16.xpose.msra.mxu0 0
      %2911 = vmatprep.subr.bf16.mxu0 0
      %2912 = vmatpush1.bf16.xpose.msra.mxu0 0
      %2913 = vmatprep.subr.bf16.mxu0 0
      %2914 = vmatpush1.bf16.xpose.msra.mxu0 0
      %2915 = vmatprep.subr.bf16.mxu0 0
      %2916 = vmatpush1.bf16.xpose.msra.mxu0 0
      %2917 = vmatprep.subr.bf16.mxu0 0
      %2918 = vmatpush1.bf16.xpose.msra.mxu0 0
      %2919 = vmatprep.subr.bf16.mxu0 0
      %2920 = vmatpush1.bf16.xpose.msra.mxu0 0
      %2921 = vmatprep.subr.bf16.mxu0 0
      %2922 = vmatpush1.bf16.xpose.msra.mxu0 0
      %2923 = vmatprep.subr.bf16.mxu0 0
      %2924 = vmatpush1.bf16.xpose.msra.mxu0 0
      %2925 = vmatprep.subr.bf16.mxu0 0
      %2926 = vmatpush1.bf16.xpose.msra.mxu0 0
      %2927 = vmatprep.subr.bf16.mxu0 0
      %2928 = vmatpush1.bf16.xpose.msra.mxu0 0
      %2929 = vmatprep.subr.bf16.mxu0 0
      %2930 = vmatpush1.bf16.xpose.msra.mxu0 0
      %2931 = vmatprep.subr.bf16.mxu0 0
      %2932 = vmatpush1.bf16.xpose.msra.mxu0 0
      %2933 = vmatprep.subr.bf16.mxu0 0
      %2934 = vmatpush1.bf16.xpose.msra.mxu0 0
      %2935 = vmatprep.subr.bf16.mxu0 0
      %2936 = vmatpush1.bf16.xpose.msra.mxu0 0
      %2937 = vmatprep.mubr.bf16.mxu0 0
      %2938 = vmatmul.mubr.bf16.gmra.mrb[0].mxu0 %v2900
      %v2939 = vpop.f32.mrb[0].mxu0
      %v2940 = vadd.f32 0.0, %v2939
      %v2941 = vpop.f32.mrb[0].mxu0
      %v2942 = vpop.f32.mrb[0].mxu0
      %v2943 = vadd.f32 0.0, %v2942
      %v2944 = vpop.f32.mrb[0].mxu0
      %2945 = vdwg.mxu0
      %v2946 = vsel %vm853, %v2940, -inf
      %2947 = vmax.xlane.f32.xlu0 %v2946
      %v2948 = vpop.xlane.xlu0 %2947
      %v2949 = vsel %vm853, %v2943, -inf
      %2950 = vmax.xlane.f32.xlu0 %v2949
      %v2951 = vpop.xlane.xlu0 %2950
      %v2952 = vsub.f32 %v2940, %v2948
      %v2953 = vsub.f32 %v2943, %v2951
      %v2954 = vmul.f32 %v2952, 1.442695
      %v2955 = vpow.pop %v2954
      %v2956 = vmul.f32 %v2953, 1.442695
      %v2957 = vpow.pop %v2956
      %v2958 = vsel %vm853, %v2955, 0.0
      %2959 = vadd.xlane.f32.xlu0 %v2958
      %v2960 = vpop.xlane.xlu0 %2959
      %v2961 = vsel %vm853, %v2957, 0.0
      %2962 = vadd.xlane.f32.xlu0 %v2961
      %v2963 = vpop.xlane.xlu0 %2962
      %v2964 = vrcp.pop %v2960
      %v2965 = vrcp.pop %v2963
      %v2966 = vmul.f32 %v2955, %v2964
      %v2967 = vmul.f32 %v2957, %v2965
      %v2968 = vpack.c.bf16 %v2967, %v2966
      %2969 = vrot.lane.b32.xlu0 %v2553, 48
      %v2970 = vpop.permute.xlu0 %2969
      %v2973 = vsel %vm853, %v2968, 0
      %2975 = vmatprep.subr.bf16.mxu0 0
      %2976 = vmatpush1.bf16.msra.mxu0 %v2970
      %2977 = vmatprep.subr.bf16.mxu0 0
      %2978 = vmatpush1.bf16.msra.mxu0 0
      %2979 = vmatprep.subr.bf16.mxu0 0
      %2980 = vmatpush1.bf16.msra.mxu0 0
      %2981 = vmatprep.subr.bf16.mxu0 0
      %2982 = vmatpush1.bf16.msra.mxu0 0
      %2983 = vmatprep.subr.bf16.mxu0 0
      %2984 = vmatpush1.bf16.msra.mxu0 0
      %2985 = vmatprep.subr.bf16.mxu0 0
      %2986 = vmatpush1.bf16.msra.mxu0 0
      %2987 = vmatprep.subr.bf16.mxu0 0
      %2988 = vmatpush1.bf16.msra.mxu0 0
      %2989 = vmatprep.subr.bf16.mxu0 0
      %2990 = vmatpush1.bf16.msra.mxu0 0
      %2991 = vmatprep.subr.bf16.mxu0 0
      %2992 = vmatpush1.bf16.msra.mxu0 0
      %2993 = vmatprep.subr.bf16.mxu0 0
      %2994 = vmatpush1.bf16.msra.mxu0 0
      %2995 = vmatprep.subr.bf16.mxu0 0
      %2996 = vmatpush1.bf16.msra.mxu0 0
      %2997 = vmatprep.subr.bf16.mxu0 0
      %2998 = vmatpush1.bf16.msra.mxu0 0
      %2999 = vmatprep.subr.bf16.mxu0 0
      %3000 = vmatpush1.bf16.msra.mxu0 0
      %3001 = vmatprep.subr.bf16.mxu0 0
      %3002 = vmatpush1.bf16.msra.mxu0 0
      %3003 = vmatprep.subr.bf16.mxu0 0
      %3004 = vmatpush1.bf16.msra.mxu0 0
      %3005 = vmatprep.subr.bf16.mxu0 0
      %3006 = vmatpush1.bf16.msra.mxu0 0
      %3007 = vmatprep.mubr.bf16.mxu0 0
      %3008 = vmatmul.mubr.bf16.gmra.mrb[0].mxu0 %v2973
      %v3009 = vpop.f32.mrb[0].mxu0
      %v3010 = vadd.f32 0.0, %v3009
      %v3011 = vpop.f32.mrb[0].mxu0
      %v3012 = vpop.f32.mrb[0].mxu0
      %v3013 = vadd.f32 0.0, %v3012
      %v3014 = vpop.f32.mrb[0].mxu0
      %3015 = vdwg.mxu0
      %v3016 = vpack.c.bf16 %v3013, %v3010
      %s3017 = scalar_lea.vmem %s13, 24
      %v3018 = vld [vmem:[%s3017] sm:$0xf]
      %v3020 = vsel %vm1522, %v3016, 0
      %v3023 = vsel %vm1769, %v3018, 0
      %3025 = vmatprep.subr.bf16.mxu0 0
      %3026 = vmatpush1.bf16.msra.mxu0 %v3023
      %3027 = vmatprep.subr.bf16.mxu0 0
      %3028 = vmatpush1.bf16.msra.mxu0 0
      %3029 = vmatprep.subr.bf16.mxu0 0
      %3030 = vmatpush1.bf16.msra.mxu0 0
      %3031 = vmatprep.subr.bf16.mxu0 0
      %3032 = vmatpush1.bf16.msra.mxu0 0
      %3033 = vmatprep.subr.bf16.mxu0 0
      %3034 = vmatpush1.bf16.msra.mxu0 0
      %3035 = vmatprep.subr.bf16.mxu0 0
      %3036 = vmatpush1.bf16.msra.mxu0 0
      %3037 = vmatprep.subr.bf16.mxu0 0
      %3038 = vmatpush1.bf16.msra.mxu0 0
      %3039 = vmatprep.subr.bf16.mxu0 0
      %3040 = vmatpush1.bf16.msra.mxu0 0
      %3041 = vmatprep.subr.bf16.mxu0 0
      %3042 = vmatpush1.bf16.msra.mxu0 0
      %3043 = vmatprep.subr.bf16.mxu0 0
      %3044 = vmatpush1.bf16.msra.mxu0 0
      %3045 = vmatprep.subr.bf16.mxu0 0
      %3046 = vmatpush1.bf16.msra.mxu0 0
      %3047 = vmatprep.subr.bf16.mxu0 0
      %3048 = vmatpush1.bf16.msra.mxu0 0
      %3049 = vmatprep.subr.bf16.mxu0 0
      %3050 = vmatpush1.bf16.msra.mxu0 0
      %3051 = vmatprep.subr.bf16.mxu0 0
      %3052 = vmatpush1.bf16.msra.mxu0 0
      %3053 = vmatprep.subr.bf16.mxu0 0
      %3054 = vmatpush1.bf16.msra.mxu0 0
      %3055 = vmatprep.subr.bf16.mxu0 0
      %3056 = vmatpush1.bf16.msra.mxu0 0
      %3057 = vmatprep.mubr.bf16.mxu0 0
      %3058 = vmatmul.mubr.bf16.gmra.mrb[0].mxu0 %v3020
      %v3059 = vpop.f32.mrb[0].mxu0
      %v3060 = vadd.f32 0.0, %v3059
      %v3061 = vpop.f32.mrb[0].mxu0
      %v3062 = vpop.f32.mrb[0].mxu0
      %v3063 = vadd.f32 0.0, %v3062
      %v3064 = vpop.f32.mrb[0].mxu0
      %3065 = vdwg.mxu0
      %v3066 = vadd.f32 %v2889, %v3060
      %v3067 = vadd.f32 %v2892, %v3063
      %3068 = vrot.lane.b32.xlu0 %v2553, 104
      %v3069 = vpop.permute.xlu0 %3068
      %3070 = vrot.lane.b32.xlu0 %v2553, 72
      %v3071 = vpop.permute.xlu0 %3070
      %v3073 = vsel %vm1522, %v3069, 0
      %v3076 = vsel %vm1522, %v3071, 0
      %3078 = vmatprep.subr.bf16.mxu0 0
      %3079 = vmatpush1.bf16.xpose.msra.mxu0 %v3076
      %3080 = vmatprep.subr.bf16.mxu0 0
      %3081 = vmatpush1.bf16.xpose.msra.mxu0 0
      %3082 = vmatprep.subr.bf16.mxu0 0
      %3083 = vmatpush1.bf16.xpose.msra.mxu0 0
      %3084 = vmatprep.subr.bf16.mxu0 0
      %3085 = vmatpush1.bf16.xpose.msra.mxu0 0
      %3086 = vmatprep.subr.bf16.mxu0 0
      %3087 = vmatpush1.bf16.xpose.msra.mxu0 0
      %3088 = vmatprep.subr.bf16.mxu0 0
      %3089 = vmatpush1.bf16.xpose.msra.mxu0 0
      %3090 = vmatprep.subr.bf16.mxu0 0
      %3091 = vmatpush1.bf16.xpose.msra.mxu0 0
      %3092 = vmatprep.subr.bf16.mxu0 0
      %3093 = vmatpush1.bf16.xpose.msra.mxu0 0
      %3094 = vmatprep.subr.bf16.mxu0 0
      %3095 = vmatpush1.bf16.xpose.msra.mxu0 0
      %3096 = vmatprep.subr.bf16.mxu0 0
      %3097 = vmatpush1.bf16.xpose.msra.mxu0 0
      %3098 = vmatprep.subr.bf16.mxu0 0
      %3099 = vmatpush1.bf16.xpose.msra.mxu0 0
      %3100 = vmatprep.subr.bf16.mxu0 0
      %3101 = vmatpush1.bf16.xpose.msra.mxu0 0
      %3102 = vmatprep.subr.bf16.mxu0 0
      %3103 = vmatpush1.bf16.xpose.msra.mxu0 0
      %3104 = vmatprep.subr.bf16.mxu0 0
      %3105 = vmatpush1.bf16.xpose.msra.mxu0 0
      %3106 = vmatprep.subr.bf16.mxu0 0
      %3107 = vmatpush1.bf16.xpose.msra.mxu0 0
      %3108 = vmatprep.subr.bf16.mxu0 0
      %3109 = vmatpush1.bf16.xpose.msra.mxu0 0
      %3110 = vmatprep.mubr.bf16.mxu0 0
      %3111 = vmatmul.mubr.bf16.gmra.mrb[0].mxu0 %v3073
      %v3112 = vpop.f32.mrb[0].mxu0
      %v3113 = vadd.f32 0.0, %v3112
      %v3114 = vpop.f32.mrb[0].mxu0
      %v3115 = vpop.f32.mrb[0].mxu0
      %v3116 = vadd.f32 0.0, %v3115
      %v3117 = vpop.f32.mrb[0].mxu0
      %3118 = vdwg.mxu0
      %v3119 = vsel %vm853, %v3113, -inf
      %3120 = vmax.xlane.f32.xlu0 %v3119
      %v3121 = vpop.xlane.xlu0 %3120
      %v3122 = vsel %vm853, %v3116, -inf
      %3123 = vmax.xlane.f32.xlu0 %v3122
      %v3124 = vpop.xlane.xlu0 %3123
      %v3125 = vsub.f32 %v3113, %v3121
      %v3126 = vsub.f32 %v3116, %v3124
      %v3127 = vmul.f32 %v3125, 1.442695
      %v3128 = vpow.pop %v3127
      %v3129 = vmul.f32 %v3126, 1.442695
      %v3130 = vpow.pop %v3129
      %v3131 = vsel %vm853, %v3128, 0.0
      %3132 = vadd.xlane.f32.xlu0 %v3131
      %v3133 = vpop.xlane.xlu0 %3132
      %v3134 = vsel %vm853, %v3130, 0.0
      %3135 = vadd.xlane.f32.xlu0 %v3134
      %v3136 = vpop.xlane.xlu0 %3135
      %v3137 = vrcp.pop %v3133
      %v3138 = vrcp.pop %v3136
      %v3139 = vmul.f32 %v3128, %v3137
      %v3140 = vmul.f32 %v3130, %v3138
      %v3141 = vpack.c.bf16 %v3140, %v3139
      %3142 = vrot.lane.b32.xlu0 %v2553, 40
      %v3143 = vpop.permute.xlu0 %3142
      %v3146 = vsel %vm853, %v3141, 0
      %3148 = vmatprep.subr.bf16.mxu0 0
      %3149 = vmatpush1.bf16.msra.mxu0 %v3143
      %3150 = vmatprep.subr.bf16.mxu0 0
      %3151 = vmatpush1.bf16.msra.mxu0 0
      %3152 = vmatprep.subr.bf16.mxu0 0
      %3153 = vmatpush1.bf16.msra.mxu0 0
      %3154 = vmatprep.subr.bf16.mxu0 0
      %3155 = vmatpush1.bf16.msra.mxu0 0
      %3156 = vmatprep.subr.bf16.mxu0 0
      %3157 = vmatpush1.bf16.msra.mxu0 0
      %3158 = vmatprep.subr.bf16.mxu0 0
      %3159 = vmatpush1.bf16.msra.mxu0 0
      %3160 = vmatprep.subr.bf16.mxu0 0
      %3161 = vmatpush1.bf16.msra.mxu0 0
      %3162 = vmatprep.subr.bf16.mxu0 0
      %3163 = vmatpush1.bf16.msra.mxu0 0
      %3164 = vmatprep.subr.bf16.mxu0 0
      %3165 = vmatpush1.bf16.msra.mxu0 0
      %3166 = vmatprep.subr.bf16.mxu0 0
      %3167 = vmatpush1.bf16.msra.mxu0 0
      %3168 = vmatprep.subr.bf16.mxu0 0
      %3169 = vmatpush1.bf16.msra.mxu0 0
      %3170 = vmatprep.subr.bf16.mxu0 0
      %3171 = vmatpush1.bf16.msra.mxu0 0
      %3172 = vmatprep.subr.bf16.mxu0 0
      %3173 = vmatpush1.bf16.msra.mxu0 0
      %3174 = vmatprep.subr.bf16.mxu0 0
      %3175 = vmatpush1.bf16.msra.mxu0 0
      %3176 = vmatprep.subr.bf16.mxu0 0
      %3177 = vmatpush1.bf16.msra.mxu0 0
      %3178 = vmatprep.subr.bf16.mxu0 0
      %3179 = vmatpush1.bf16.msra.mxu0 0
      %3180 = vmatprep.mubr.bf16.mxu0 0
      %3181 = vmatmul.mubr.bf16.gmra.mrb[0].mxu0 %v3146
      %v3182 = vpop.f32.mrb[0].mxu0
      %v3183 = vadd.f32 0.0, %v3182
      %v3184 = vpop.f32.mrb[0].mxu0
      %v3185 = vpop.f32.mrb[0].mxu0
      %v3186 = vadd.f32 0.0, %v3185
      %v3187 = vpop.f32.mrb[0].mxu0
      %3188 = vdwg.mxu0
      %v3189 = vpack.c.bf16 %v3186, %v3183
      %s3190 = scalar_lea.vmem %s13, 28
      %v3191 = vld [vmem:[%s3190] sm:$0xf]
      %v3193 = vsel %vm1522, %v3189, 0
      %v3196 = vsel %vm1769, %v3191, 0
      %3198 = vmatprep.subr.bf16.mxu0 0
      %3199 = vmatpush1.bf16.msra.mxu0 %v3196
      %3200 = vmatprep.subr.bf16.mxu0 0
      %3201 = vmatpush1.bf16.msra.mxu0 0
      %3202 = vmatprep.subr.bf16.mxu0 0
      %3203 = vmatpush1.bf16.msra.mxu0 0
      %3204 = vmatprep.subr.bf16.mxu0 0
      %3205 = vmatpush1.bf16.msra.mxu0 0
      %3206 = vmatprep.subr.bf16.mxu0 0
      %3207 = vmatpush1.bf16.msra.mxu0 0
      %3208 = vmatprep.subr.bf16.mxu0 0
      %3209 = vmatpush1.bf16.msra.mxu0 0
      %3210 = vmatprep.subr.bf16.mxu0 0
      %3211 = vmatpush1.bf16.msra.mxu0 0
      %3212 = vmatprep.subr.bf16.mxu0 0
      %3213 = vmatpush1.bf16.msra.mxu0 0
      %3214 = vmatprep.subr.bf16.mxu0 0
      %3215 = vmatpush1.bf16.msra.mxu0 0
      %3216 = vmatprep.subr.bf16.mxu0 0
      %3217 = vmatpush1.bf16.msra.mxu0 0
      %3218 = vmatprep.subr.bf16.mxu0 0
      %3219 = vmatpush1.bf16.msra.mxu0 0
      %3220 = vmatprep.subr.bf16.mxu0 0
      %3221 = vmatpush1.bf16.msra.mxu0 0
      %3222 = vmatprep.subr.bf16.mxu0 0
      %3223 = vmatpush1.bf16.msra.mxu0 0
      %3224 = vmatprep.subr.bf16.mxu0 0
      %3225 = vmatpush1.bf16.msra.mxu0 0
      %3226 = vmatprep.subr.bf16.mxu0 0
      %3227 = vmatpush1.bf16.msra.mxu0 0
      %3228 = vmatprep.subr.bf16.mxu0 0
      %3229 = vmatpush1.bf16.msra.mxu0 0
      %3230 = vmatprep.mubr.bf16.mxu0 0
      %3231 = vmatmul.mubr.bf16.gmra.mrb[0].mxu0 %v3193
      %v3232 = vpop.f32.mrb[0].mxu0
      %v3233 = vadd.f32 0.0, %v3232
      %v3234 = vpop.f32.mrb[0].mxu0
      %v3235 = vpop.f32.mrb[0].mxu0
      %v3236 = vadd.f32 0.0, %v3235
      %v3237 = vpop.f32.mrb[0].mxu0
      %3238 = vdwg.mxu0
      %v3239 = vadd.f32 %v3066, %v3233
      %v3240 = vadd.f32 %v3067, %v3236
      %v3241 = vadd.f32 %v2435, %v3239
      %v3242 = vadd.f32 %v2436, %v3240
      %s3243 = scalar_lea.vmem %s14, 1
      %v3244 = vld [vmem:[%s3243] sm:$0x1]
      %v3246 = vlaneseq
      %v3247 = vshrl.u32 %v3246, 7
      %v3248 = vsub.s32 0, %v3247
      %v3249 = vrot.slane %v3244, %v3248
      %v3251 = vadd.f32 %v3241, %v3249
      %v3252 = vadd.f32 %v3242, %v3249
      %s3253 = scalar_lea.vmem %s15, 1
      %v3254 = vld [vmem:[%s3253] sm:$0x1]
      %s3255 = scalar_lea.vmem %s16, 1
      %v3256 = vld [vmem:[%s3255] sm:$0x1]
      %v3257 = vsel %vm1215, %v3251, 0.0
      %3258 = vadd.xlane.f32.xlu0 %v3257
      %v3259 = vpop.xlane.xlu0 %3258
      %v3260 = vsel %vm1215, %v3252, 0.0
      %3261 = vadd.xlane.f32.xlu0 %v3260
      %v3262 = vpop.xlane.xlu0 %3261
      %v3263 = vmul.f32 %v3259, %v1413
      %v3264 = vmul.f32 %v3262, %v1413
      %v3265 = vsub.f32 %v3251, %v3263
      %v3266 = vsub.f32 %v3252, %v3264
      %v3267 = vmul.f32 %v3265, %v3265
      %v3268 = vmul.f32 %v3266, %v3266
      %v3269 = vsel %vm1215, %v3267, 0.0
      %3270 = vadd.xlane.f32.xlu0 %v3269
      %v3271 = vpop.xlane.xlu0 %3270
      %v3272 = vsel %vm1215, %v3268, 0.0
      %3273 = vadd.xlane.f32.xlu0 %v3272
      %v3274 = vpop.xlane.xlu0 %3273
      %v3275 = vmul.f32 %v3271, %v1413
      %v3276 = vmul.f32 %v3274, %v1413
      %v3277 = vadd.f32 %v3275, 1e-05
      %v3278 = vadd.f32 %v3276, 1e-05
      %v3279 = vrsqrt.pop %v3277
      %v3280 = vrsqrt.pop %v3278
      %v3281 = vmul.f32 %v3265, %v3279
      %v3282 = vmul.f32 %v3266, %v3280
      %v3284 = vlaneseq
      %v3285 = vshrl.u32 %v3284, 7
      %v3286 = vsub.s32 0, %v3285
      %v3287 = vrot.slane %v3254, %v3286
      %v3289 = vmul.f32 %v3281, %v3287
      %v3290 = vmul.f32 %v3282, %v3287
      %v3292 = vlaneseq
      %v3293 = vshrl.u32 %v3292, 7
      %v3294 = vsub.s32 0, %v3293
      %v3295 = vrot.slane %v3256, %v3294
      %v3297 = vadd.f32 %v3289, %v3295
      %v3298 = vadd.f32 %v3290, %v3295
      %v3299 = vpack.c.bf16 %v3298, %v3297
      %s3300 = scalar_lea.vmem %s17, 16
      %v3301 = vld [vmem:[%s3300] sm:$0xf]
      %v3302 = vld [vmem:[%s3300 + $0x4] sm:$0xf]
      %v3303 = vld [vmem:[%s3300 + $0x8] sm:$0xf]
      %v3304 = vld [vmem:[%s3300 + $0xc] sm:$0xf]
      %s3305 = scalar_lea.vmem %s18, 1
      %v3306 = vld [vmem:[%s3305] sm:$0x1]
      %v3308 = vlaneseq
      %v3309 = vshrl.u32 %v3308, 7
      %v3310 = vsub.s32 0, %v3309
      %v3311 = vrot.slane %v3306, %v3310
      %v3317 = vunpack.c.l.b16 %v3301
      %v3318 = vunpack.c.l.b16 %v3302
      %v3319 = vunpack.c.l.b16 %v3303
      %v3320 = vunpack.c.l.b16 %v3304
      %v3321 = vpack.c.b16 %v3318, %v3317
      %v3322 = vpack.c.b16 %v3320, %v3319
      %v3326 = vsel %vm1215, %v3299, 0
      %3328 = vmatprep.subr.bf16.mxu0 0
      %3329 = vmatpush1.bf16.msra.mxu0 %v3321
      %3330 = vmatprep.subr.bf16.mxu0 0
      %3331 = vmatpush1.bf16.msra.mxu0 %v3322
      %3332 = vmatprep.subr.bf16.mxu0 0
      %3333 = vmatpush1.bf16.msra.mxu0 0
      %3334 = vmatprep.subr.bf16.mxu0 0
      %3335 = vmatpush1.bf16.msra.mxu0 0
      %3336 = vmatprep.subr.bf16.mxu0 0
      %3337 = vmatpush1.bf16.msra.mxu0 0
      %3338 = vmatprep.subr.bf16.mxu0 0
      %3339 = vmatpush1.bf16.msra.mxu0 0
      %3340 = vmatprep.subr.bf16.mxu0 0
      %3341 = vmatpush1.bf16.msra.mxu0 0
      %3342 = vmatprep.subr.bf16.mxu0 0
      %3343 = vmatpush1.bf16.msra.mxu0 0
      %3344 = vmatprep.subr.bf16.mxu0 0
      %3345 = vmatpush1.bf16.msra.mxu0 0
      %3346 = vmatprep.subr.bf16.mxu0 0
      %3347 = vmatpush1.bf16.msra.mxu0 0
      %3348 = vmatprep.subr.bf16.mxu0 0
      %3349 = vmatpush1.bf16.msra.mxu0 0
      %3350 = vmatprep.subr.bf16.mxu0 0
      %3351 = vmatpush1.bf16.msra.mxu0 0
      %3352 = vmatprep.subr.bf16.mxu0 0
      %3353 = vmatpush1.bf16.msra.mxu0 0
      %3354 = vmatprep.subr.bf16.mxu0 0
      %3355 = vmatpush1.bf16.msra.mxu0 0
      %3356 = vmatprep.subr.bf16.mxu0 0
      %3357 = vmatpush1.bf16.msra.mxu0 0
      %3358 = vmatprep.subr.bf16.mxu0 0
      %3359 = vmatpush1.bf16.msra.mxu0 0
      %3360 = vmatprep.mubr.bf16.mxu0 0
      %3361 = vmatmul.mubr.bf16.gmra.mrb[0].mxu0 %v3326
      %v3362 = vpop.f32.mrb[0].mxu0
      %v3363 = vadd.f32 %v3311, %v3362
      %v3364 = vpop.f32.mrb[0].mxu0
      %v3365 = vpop.f32.mrb[0].mxu0
      %v3366 = vadd.f32 %v3311, %v3365
      %v3367 = vpop.f32.mrb[0].mxu0
      %3368 = vdwg.mxu0
      %v3369 = vmul.f32 %v3363, 0.5
      %v3370 = vmul.f32 %v3366, 0.5
      %v3371 = vmul.f32 %v3363, 0.044715
      %v3372 = vmul.f32 %v3366, 0.044715
      %v3373 = vmul.f32 %v3371, %v3363
      %v3374 = vmul.f32 %v3372, %v3366
      %v3375 = vmul.f32 %v3373, %v3363
      %v3376 = vmul.f32 %v3374, %v3366
      %v3377 = vadd.f32 %v3363, %v3375
      %v3378 = vadd.f32 %v3366, %v3376
      %v3379 = vmul.f32 %v3377, 0.7978846
      %v3380 = vmul.f32 %v3378, 0.7978846
      %v3381 = vtanh.pop %v3379
      %v3382 = vtanh.pop %v3380
      %v3383 = vadd.f32 %v3381, 1.0
      %v3384 = vadd.f32 %v3382, 1.0
      %v3385 = vmul.f32 %v3369, %v3383
      %v3386 = vmul.f32 %v3370, %v3384
      %v3387 = vpack.c.bf16 %v3386, %v3385
      %s3388 = scalar_lea.vmem %s19, 32
      %v3389 = vld [vmem:[%s3388] sm:$0xf]
      %v3390 = vld [vmem:[%s3388 + $0x4] sm:$0xf]
      %v3391 = vld [vmem:[%s3388 + $0x8] sm:$0xf]
      %v3392 = vld [vmem:[%s3388 + $0xc] sm:$0xf]
      %v3393 = vld [vmem:[%s3388 + $0x10] sm:$0xf]
      %v3394 = vld [vmem:[%s3388 + $0x14] sm:$0xf]
      %v3395 = vld [vmem:[%s3388 + $0x18] sm:$0xf]
      %v3396 = vld [vmem:[%s3388 + $0x1c] sm:$0xf]
      %v3405 = vunpack.c.l.b16 %v3389
      %v3406 = vunpack.c.l.b16 %v3390
      %v3407 = vunpack.c.l.b16 %v3391
      %v3408 = vunpack.c.l.b16 %v3392
      %v3409 = vunpack.c.l.b16 %v3393
      %v3410 = vunpack.c.l.b16 %v3394
      %v3411 = vunpack.c.l.b16 %v3395
      %v3412 = vunpack.c.l.b16 %v3396
      %v3413 = vpack.c.b16 %v3406, %v3405
      %v3414 = vpack.c.b16 %v3408, %v3407
      %v3415 = vpack.c.b16 %v3410, %v3409
      %v3416 = vpack.c.b16 %v3412, %v3411
      %v3422 = vsel %vm2381, %v3387, 0
      %3424 = vmatprep.subr.bf16.mxu0 0
      %3425 = vmatpush1.bf16.msra.mxu0 %v3413
      %3426 = vmatprep.subr.bf16.mxu0 0
      %3427 = vmatpush1.bf16.msra.mxu0 %v3414
      %3428 = vmatprep.subr.bf16.mxu0 0
      %3429 = vmatpush1.bf16.msra.mxu0 %v3415
      %3430 = vmatprep.subr.bf16.mxu0 0
      %3431 = vmatpush1.bf16.msra.mxu0 %v3416
      %3432 = vmatprep.subr.bf16.mxu0 0
      %3433 = vmatpush1.bf16.msra.mxu0 0
      %3434 = vmatprep.subr.bf16.mxu0 0
      %3435 = vmatpush1.bf16.msra.mxu0 0
      %3436 = vmatprep.subr.bf16.mxu0 0
      %3437 = vmatpush1.bf16.msra.mxu0 0
      %3438 = vmatprep.subr.bf16.mxu0 0
      %3439 = vmatpush1.bf16.msra.mxu0 0
      %3440 = vmatprep.subr.bf16.mxu0 0
      %3441 = vmatpush1.bf16.msra.mxu0 0
      %3442 = vmatprep.subr.bf16.mxu0 0
      %3443 = vmatpush1.bf16.msra.mxu0 0
      %3444 = vmatprep.subr.bf16.mxu0 0
      %3445 = vmatpush1.bf16.msra.mxu0 0
      %3446 = vmatprep.subr.bf16.mxu0 0
      %3447 = vmatpush1.bf16.msra.mxu0 0
      %3448 = vmatprep.subr.bf16.mxu0 0
      %3449 = vmatpush1.bf16.msra.mxu0 0
      %3450 = vmatprep.subr.bf16.mxu0 0
      %3451 = vmatpush1.bf16.msra.mxu0 0
      %3452 = vmatprep.subr.bf16.mxu0 0
      %3453 = vmatpush1.bf16.msra.mxu0 0
      %3454 = vmatprep.subr.bf16.mxu0 0
      %3455 = vmatpush1.bf16.msra.mxu0 0
      %3456 = vmatprep.mubr.bf16.mxu0 0
      %3457 = vmatmul.mubr.bf16.gmra.mrb[0].mxu0 %v3422
      %v3458 = vpop.f32.mrb[0].mxu0
      %v3459 = vadd.f32 0.0, %v3458
      %v3460 = vpop.f32.mrb[0].mxu0
      %v3461 = vpop.f32.mrb[0].mxu0
      %v3462 = vadd.f32 0.0, %v3461
      %v3463 = vpop.f32.mrb[0].mxu0
      %3464 = vdwg.mxu0
      %v3465 = vadd.f32 %v3251, %v3459
      %v3466 = vadd.f32 %v3252, %v3462
      %s3467 = scalar_lea.vmem %s20, 1
      %v3468 = vld [vmem:[%s3467] sm:$0x1]
      %v3470 = vlaneseq
      %v3471 = vshrl.u32 %v3470, 7
      %v3472 = vsub.s32 0, %v3471
      %v3473 = vrot.slane %v3468, %v3472
      %v3475 = vadd.f32 %v3465, %v3473
      %v3476 = vadd.f32 %v3466, %v3473
      %v3477 = vld [vmem:[%s21] sm:$0x1]
      %v3478 = vld [vmem:[%s22] sm:$0x1]
      %v3479 = vsel %vm1215, %v3475, 0.0
      %3480 = vadd.xlane.f32.xlu0 %v3479
      %v3481 = vpop.xlane.xlu0 %3480
      %v3482 = vsel %vm1215, %v3476, 0.0
      %3483 = vadd.xlane.f32.xlu0 %v3482
      %v3484 = vpop.xlane.xlu0 %3483
      %v3485 = vmul.f32 %v3481, %v1413
      %v3486 = vmul.f32 %v3484, %v1413
      %v3487 = vsub.f32 %v3475, %v3485
      %v3488 = vsub.f32 %v3476, %v3486
      %v3489 = vmul.f32 %v3487, %v3487
      %v3490 = vmul.f32 %v3488, %v3488
      %v3491 = vsel %vm1215, %v3489, 0.0
      %3492 = vadd.xlane.f32.xlu0 %v3491
      %v3493 = vpop.xlane.xlu0 %3492
      %v3494 = vsel %vm1215, %v3490, 0.0
      %3495 = vadd.xlane.f32.xlu0 %v3494
      %v3496 = vpop.xlane.xlu0 %3495
      %v3497 = vmul.f32 %v3493, %v1413
      %v3498 = vmul.f32 %v3496, %v1413
      %v3499 = vadd.f32 %v3497, 1e-05
      %v3500 = vadd.f32 %v3498, 1e-05
      %v3501 = vrsqrt.pop %v3499
      %v3502 = vrsqrt.pop %v3500
      %v3503 = vmul.f32 %v3487, %v3501
      %v3504 = vmul.f32 %v3488, %v3502
      %v3506 = vlaneseq
      %v3507 = vshrl.u32 %v3506, 7
      %v3508 = vsub.s32 0, %v3507
      %v3509 = vrot.slane %v3477, %v3508
      %v3511 = vmul.f32 %v3503, %v3509
      %v3512 = vmul.f32 %v3504, %v3509
      %v3514 = vlaneseq
      %v3515 = vshrl.u32 %v3514, 7
      %v3516 = vsub.s32 0, %v3515
      %v3517 = vrot.slane %v3478, %v3516
      %v3519 = vadd.f32 %v3511, %v3517
      %v3520 = vadd.f32 %v3512, %v3517
      %v3521 = vpack.c.bf16 %v3520, %v3519
      %v3522 = vld [vmem:[%s23] sm:$0xf]
      %v3523 = vld [vmem:[%s23 + $0x4] sm:$0xf]
      %v3524 = vld [vmem:[%s23 + $0x8] sm:$0xf]
      %v3525 = vld [vmem:[%s23 + $0xc] sm:$0xf]
      %v3526 = vld [vmem:[%s24] sm:$0x1]
      %v3528 = vlaneseq
      %v3529 = vshrl.u32 %v3528, 7
      %v3530 = vsub.s32 0, %v3529
      %v3531 = vrot.slane %v3526, %v3530
      %v3537 = vunpack.c.l.b16 %v3522
      %v3538 = vunpack.c.l.b16 %v3523
      %v3539 = vunpack.c.l.b16 %v3524
      %v3540 = vunpack.c.l.b16 %v3525
      %v3541 = vpack.c.b16 %v3538, %v3537
      %v3542 = vpack.c.b16 %v3540, %v3539
      %v3546 = vsel %vm1215, %v3521, 0
      %3548 = vmatprep.subr.bf16.mxu0 0
      %3549 = vmatpush1.bf16.msra.mxu0 %v3541
      %3550 = vmatprep.subr.bf16.mxu0 0
      %3551 = vmatpush1.bf16.msra.mxu0 %v3542
      %3552 = vmatprep.subr.bf16.mxu0 0
      %3553 = vmatpush1.bf16.msra.mxu0 0
      %3554 = vmatprep.subr.bf16.mxu0 0
      %3555 = vmatpush1.bf16.msra.mxu0 0
      %3556 = vmatprep.subr.bf16.mxu0 0
      %3557 = vmatpush1.bf16.msra.mxu0 0
      %3558 = vmatprep.subr.bf16.mxu0 0
      %3559 = vmatpush1.bf16.msra.mxu0 0
      %3560 = vmatprep.subr.bf16.mxu0 0
      %3561 = vmatpush1.bf16.msra.mxu0 0
      %3562 = vmatprep.subr.bf16.mxu0 0
      %3563 = vmatpush1.bf16.msra.mxu0 0
      %3564 = vmatprep.subr.bf16.mxu0 0
      %3565 = vmatpush1.bf16.msra.mxu0 0
      %3566 = vmatprep.subr.bf16.mxu0 0
      %3567 = vmatpush1.bf16.msra.mxu0 0
      %3568 = vmatprep.subr.bf16.mxu0 0
      %3569 = vmatpush1.bf16.msra.mxu0 0
      %3570 = vmatprep.subr.bf16.mxu0 0
      %3571 = vmatpush1.bf16.msra.mxu0 0
      %3572 = vmatprep.subr.bf16.mxu0 0
      %3573 = vmatpush1.bf16.msra.mxu0 0
      %3574 = vmatprep.subr.bf16.mxu0 0
      %3575 = vmatpush1.bf16.msra.mxu0 0
      %3576 = vmatprep.subr.bf16.mxu0 0
      %3577 = vmatpush1.bf16.msra.mxu0 0
      %3578 = vmatprep.subr.bf16.mxu0 0
      %3579 = vmatpush1.bf16.msra.mxu0 0
      %3580 = vmatprep.mubr.bf16.mxu0 0
      %3581 = vmatmul.mubr.bf16.gmra.mrb[0].mxu0 %v3546
      %v3582 = vpop.f32.mrb[0].mxu0
      %v3583 = vadd.f32 %v3531, %v3582
      %v3584 = vpop.f32.mrb[0].mxu0
      %v3585 = vpop.f32.mrb[0].mxu0
      %v3586 = vadd.f32 %v3531, %v3585
      %v3587 = vpop.f32.mrb[0].mxu0
      %3588 = vdwg.mxu0
      %v3589 = vsel %vm2381, %v3583, -inf
      %3590 = vmax.xlane.f32.xlu0 %v3589
      %v3591 = vpop.xlane.xlu0 %3590
      %v3592 = vsel %vm2381, %v3586, -inf
      %3593 = vmax.xlane.f32.xlu0 %v3592
      %v3594 = vpop.xlane.xlu0 %3593
      %v3595 = vlaneseq
      %v3596 = vand.u32 %v3595, 127
      %vm3597 = vcmp.eq.f32.partialorder %v3583, %v3591
      %vm3598 = vcmp.eq.f32.partialorder %v3586, %v3594
      %v3599 = vsel %vm3597, %v3596, 64
      %v3600 = vsel %vm3598, %v3596, 64
      %v3601 = vsel %vm2381, %v3599, 2147483647
      %v3602 = vand.u32 %v3601, 65535
      %v3603 = vshra.s32 %v3601, 16
      %v3604 = vcvt.s32.f32 %v3602
      %v3605 = vcvt.s32.f32 %v3603
      %3606 = vmin.xlane.f32.xlu0 %v3605
      %v3607 = vpop.xlane.xlu0 %3606
      %vm3608 = vcmp.eq.f32.partialorder %v3605, %v3607
      %v3609 = vsel %vm3608, %v3604, inf
      %3610 = vmin.xlane.f32.xlu0 %v3609
      %v3611 = vpop.xlane.xlu0 %3610
      %v3612 = vcvt.f32.s32 %v3611
      %v3613 = vcvt.f32.s32 %v3607
      %v3614 = vshll.u32 %v3613, 16
      %v3615 = vadd.s32 %v3614, %v3612
      %v3616 = vsel %vm2381, %v3600, 2147483647
      %v3617 = vand.u32 %v3616, 65535
      %v3618 = vshra.s32 %v3616, 16
      %v3619 = vcvt.s32.f32 %v3617
      %v3620 = vcvt.s32.f32 %v3618
      %3621 = vmin.xlane.f32.xlu0 %v3620
      %v3622 = vpop.xlane.xlu0 %3621
      %vm3623 = vcmp.eq.f32.partialorder %v3620, %v3622
      %v3624 = vsel %vm3623, %v3619, inf
      %3625 = vmin.xlane.f32.xlu0 %v3624
      %v3626 = vpop.xlane.xlu0 %3625
      %v3627 = vcvt.f32.s32 %v3626
      %v3628 = vcvt.f32.s32 %v3622
      %v3629 = vshll.u32 %v3628, 16
      %v3630 = vadd.s32 %v3629, %v3627
      %vm3631 = vcmask 7168
      %3632 = vst.msk [vmem:[%s824] sm:$0xff] %vm3631, %v3615
      %3633 = vst.msk [vmem:[%s824 + $0x8] sm:$0xff] %vm3631, %v3630
      %p3634 = scmp.lt.s32.totalorder %s36, 1
      %s3635 = scalar_select %p3634, %s36, 1
      %s3636 = smul.addr %s3635, 2
      %s3637 = smul.addr %s3636, 8
      %s3638 = scalar_lea.vmem %s25, %s3637
      // Predicated region
      $region121: #{whisper_forward.1} parent=119 // pred_check
        %p3639 = pneg %p599
      $region122: #{whisper_forward.1} parent=119 // pred_check_branch
        %3641 = sbr.rel (%p3639) target = $region124
      $region123: #{whisper_forward.1} parent=119 // pred_region
        _
      $region124: #{whisper_forward.1} parent=119 // pred_fallthru
        _
    $region120: #{whisper_forward.1} parent=5 // pred_fallthru
      _
    %p3642 = scmp.le.s32.totalorder 2, %s31
    // Predicated region
    $region125: #{whisper_forward.1} parent=5 // pred_check
      %p3643 = pneg %p3642
    $region126: #{whisper_forward.1} parent=5 // pred_check_branch
      %3645 = sbr.rel (%p3643) target = $region128
    $region127: #{whisper_forward.1} parent=5 // pred_region
      %s3646 = ssub.s32 %s31, 2
      // Predicated region
      $region129: #{whisper_forward.1} parent=127 // pred_check
        %p3647 = pneg %p605
      $region130: #{whisper_forward.1} parent=127 // pred_check_branch
        %3649 = sbr.rel (%p3647) target = $region132
      $region131: #{whisper_forward.1} parent=127 // pred_region
        %p3650 = scmp.lt.s32.totalorder %s37, 1
        %s3651 = scalar_select %p3650, %s37, 1
        %s3652 = smul.addr %s3651, 2
        %s3653 = smul.addr %s3652, 8
        %s3654 = scalar_lea.vmem %s25, %s3653
      $region132: #{whisper_forward.1} parent=127 // pred_fallthru
        _
    $region128: #{whisper_forward.1} parent=5 // pred_fallthru
      _
  $region6: #{whisper_forward.1} parent=0 // loop_footer
    %s35 = sadd.s32 1, %s31
  $region7: #{whisper_forward.1} parent=0 // loop_footer_branch
    %30 = sbr.rel target = $region3
  $region8: #{whisper_forward.1} parent=0 // loop_exit
    _

</llo_original>
